<compile_context>
chip_gen: v5e
topology: v5e:2x2
jax: 0.10.0
libtpu: 0.0.40
codegen_flags: <defaults>
</compile_context>

<pallas_src>
import functools

import jax
import jax.numpy as jnp
from jax.experimental import pallas as pl
from jax.experimental.pallas import tpu as pltpu


def _upconv_kernel(x_ref, cw_ref, w_ref, b_ref, o_ref, xc_ref, *,
                   Cin, Cout, H, W):
    # x_ref : (1, Cin, H*W)    original input tile (NCHW, spatial flattened)
    # cw_ref: (W, Wp)          0/1 column upsample + col-pad matrix
    # w_ref : (12, Cout, Cin)  collapsed row-phase taps, idx = (a*2+t)*3 + dx
    # b_ref : (Cout, 1)        bias (f32)
    # o_ref : (1, Cout, 2H, 2W) output tile (NCHW)
    # xc_ref: (Cin, Nflat)     VMEM scratch: col-upsampled, row/col-padded
    #                          plane at original row resolution (+ tail slack)
    Wp = 2 * W + 2                 # padded upsampled width
    Wout = 2 * W
    L = H * Wp                     # flat accumulator length (row stride Wp)
    Nflat = xc_ref.shape[1]

    # ---- zero the top pad row and (bottom pad row + tail slack) -----------
    xc_ref[:, pl.ds(0, Wp)] = jnp.zeros((Cin, Wp), xc_ref.dtype)
    tail0 = (H + 1) * Wp
    xc_ref[:, pl.ds(tail0, Nflat - tail0)] = jnp.zeros(
        (Cin, Nflat - tail0), xc_ref.dtype)

    # ---- fused column upsample + column zero-pad (one matmul per row) -----
    # xc row r+1 holds input row r, upsampled along columns and padded.
    cw = cw_ref[...]
    for i in range(H):
        row = x_ref[0, :, i * W:(i + 1) * W]                     # (Cin, W)
        up = jnp.dot(row, cw,
                     preferred_element_type=jnp.float32).astype(xc_ref.dtype)
        xc_ref[:, pl.ds((i + 1) * Wp, Wp)] = up

    # ---- 3x3 conv after 2x row upsample, via row-phase decomposition ------
    # Output row ho = 2*i + a depends on input rows:
    #   a=0: {i-1 <- W0, i <- W1+W2};  a=1: {i <- W0+W1, i+1 <- W2}
    # (collapsed weights precomputed in the wrapper as w_ref).
    bias = b_ref[...]                                            # (Cout, 1)
    for a in range(2):
        acc = jnp.zeros((Cout, L), jnp.float32)
        for t in range(2):
            for dx in range(3):
                shift = (a + t) * Wp + dx
                slab = xc_ref[:, pl.ds(shift, L)]                # (Cin, L)
                acc = acc + jnp.dot(w_ref[a * 6 + t * 3 + dx], slab,
                                    preferred_element_type=jnp.float32)
        acc = acc + bias

        # ---- store the valid Wout columns of each output row (NCHW) -------
        for i in range(H):
            o_ref[0, :, 2 * i + a, :] = acc[:, i * Wp:i * Wp + Wout].astype(
                o_ref.dtype)


def upsampling_forward(x_nchw, weight_oihw, bias, *, use_conv=True, padding=1):
    """Equivalent of UpSampling.forward: nearest 2x upsample, then 3x3 conv."""
    B, Cin, H, W = x_nchw.shape

    if not use_conv:
        # plain nearest-2x upsample (no conv) as a cheap XLA op.
        return jnp.repeat(jnp.repeat(x_nchw, 2, axis=2), 2, axis=3)

    Cout = weight_oihw.shape[0]
    pad = int(padding)

    if pad != 1:
        # TODO(synk): Pallas fast path only covers the standard padding=1 case.
        up = jnp.repeat(jnp.repeat(x_nchw, 2, axis=2), 2, axis=3)
        out = jax.lax.conv_general_dilated(
            up, weight_oihw, window_strides=(1, 1),
            padding=((pad, pad), (pad, pad)),
            dimension_numbers=('NCHW', 'OIHW', 'NCHW'))
        return out + bias[None, :, None, None]

    Wp = 2 * W + 2
    Hout, Wout = 2 * H, 2 * W
    Nflat = (H + 2) * Wp + Wp          # padded plane + tail slack for shifts
    dtype = x_nchw.dtype

    # Free (contiguous) reshape: NCHW -> (B, Cin, H*W).  No transposes anywhere.
    x_flat = x_nchw.reshape(B, Cin, H * W)

    # 0/1 column upsample + pad matrix: cw[j, 1 + 2j + b] = 1 for b in {0,1}.
    j = jnp.arange(W)[:, None]
    s = jnp.arange(Wp)[None, :]
    cw = ((s >= 1 + 2 * j) & (s <= 2 + 2 * j)).astype(dtype)

    # Collapsed row-phase taps: (a, t, dx) -> (Cout, Cin), flattened to 12.
    w = weight_oihw.astype(dtype)                       # (Cout, Cin, 3, 3)
    w0, w1, w2 = w[:, :, 0, :], w[:, :, 1, :], w[:, :, 2, :]   # (Cout,Cin,3)
    rw = jnp.stack([w0,            # a=0, t=0 : input row i-1
                    w1 + w2,       # a=0, t=1 : input row i
                    w0 + w1,       # a=1, t=0 : input row i
                    w2],           # a=1, t=1 : input row i+1
                   axis=0)                              # (4, Cout, Cin, 3)
    w_taps = jnp.transpose(rw, (0, 3, 1, 2)).reshape(12, Cout, Cin)
    b2 = bias.reshape(Cout, 1).astype(jnp.float32)

    kern = functools.partial(_upconv_kernel, Cin=Cin, Cout=Cout, H=H, W=W)

    flops = 2 * B * (12 * Cout * Cin * H * Wp + Cin * H * W * Wp)
    bytes_accessed = int(
        (x_flat.size + cw.size + w_taps.size + b2.size
         + B * Cout * Hout * Wout) * x_nchw.dtype.itemsize)

    out = pl.pallas_call(
        kern,
        out_shape=jax.ShapeDtypeStruct((B, Cout, Hout, Wout), dtype),
        grid_spec=pltpu.PrefetchScalarGridSpec(
            num_scalar_prefetch=0,
            grid=(B,),
            in_specs=[
                pl.BlockSpec((1, Cin, H * W), lambda b: (b, 0, 0)),
                pl.BlockSpec((W, Wp), lambda b: (0, 0)),
                pl.BlockSpec((12, Cout, Cin), lambda b: (0, 0, 0)),
                pl.BlockSpec((Cout, 1), lambda b: (0, 0)),
            ],
            out_specs=pl.BlockSpec((1, Cout, Hout, Wout),
                                   lambda b: (b, 0, 0, 0)),
            scratch_shapes=[pltpu.VMEM((Cin, Nflat), dtype)],
        ),
        compiler_params=pltpu.CompilerParams(
            dimension_semantics=("parallel",)),
        cost_estimate=pl.CostEstimate(flops=flops, transcendentals=0,
                                      bytes_accessed=bytes_accessed),
    )(x_flat, cw, w_taps, b2)

    return out                                                 # NCHW already


if __name__ == "__main__":
    key = jax.random.PRNGKey(0)
    k1, k2, k3 = jax.random.split(key, 3)

    B, Cin, H, W = 2, 4, 16, 16
    Cout = 8
    x = jax.random.normal(k1, (B, Cin, H, W), dtype=jnp.float32)

    # Deterministic Conv2d(in=4, out=8, k=3) params (PyTorch-style fan_in bound).
    fan_in = Cin * 3 * 3
    bound = 1.0 / (fan_in ** 0.5)
    w_oihw = jax.random.uniform(k2, (Cout, Cin, 3, 3),
                                minval=-bound, maxval=bound, dtype=jnp.float32)
    bias = jax.random.uniform(k3, (Cout,),
                              minval=-bound, maxval=bound, dtype=jnp.float32)

    out = upsampling_forward(x, w_oihw, bias, use_conv=True, padding=1)
    out = jax.block_until_ready(out)
    assert out.shape == (B, Cout, 2 * H, 2 * W), out.shape

    # Reference: plain-JAX nearest 2x upsample + NCHW conv.
    up = jnp.repeat(jnp.repeat(x, 2, axis=2), 2, axis=3)
    ref = jax.lax.conv_general_dilated(
        up, w_oihw, window_strides=(1, 1), padding=((1, 1), (1, 1)),
        dimension_numbers=('NCHW', 'OIHW', 'NCHW'))
    ref = ref + bias[None, :, None, None]
    assert jnp.allclose(out, ref, atol=1e-3, rtol=1e-3), float(
        jnp.max(jnp.abs(out - ref)))

    print("KERNEL_OK")
</pallas_src>

<mosaic_0001>
module attributes {stable_mosaic.version = 11 : i64} {
  func.func @_upconv_kernel(%arg0: i32, %arg1: memref<1x4x256xf32, #tpu.memory_space<vmem>>, %arg2: memref<16x34xf32, #tpu.memory_space<vmem>>, %arg3: memref<12x8x4xf32, #tpu.memory_space<vmem>>, %arg4: memref<8x1xf32, #tpu.memory_space<vmem>>, %arg5: memref<1x8x32x32xf32, #tpu.memory_space<vmem>>, %arg6: memref<4x646xf32, #tpu.memory_space<vmem>>) attributes {dimension_semantics = [#tpu.dimension_semantics<parallel>], iteration_bounds = array<i64: 2>, scalar_prefetch = 0 : i64, scratch_operands = 1 : i64, tpu.core_type = #tpu.core_type<tc>, window_params = [{transform_indices = @transform_0, window_bounds = array<i64: 1, 4, 256>}, {pipeline_mode = #tpu.pipeline_mode<synchronous>, transform_indices = @transform_1, window_bounds = array<i64: 16, 34>}, {pipeline_mode = #tpu.pipeline_mode<synchronous>, transform_indices = @transform_2, window_bounds = array<i64: 12, 8, 4>}, {pipeline_mode = #tpu.pipeline_mode<synchronous>, transform_indices = @transform_3, window_bounds = array<i64: 8, 1>}, {transform_indices = @transform_4, window_bounds = array<i64: 1, 8, 32, 32>}]} {
    %cst = arith.constant 0.000000e+00 : f32
    %0 = vector.broadcast %cst : f32 to vector<4x34xf32>
    %c0 = arith.constant 0 : index
    %c0_0 = arith.constant 0 : index
    %1 = vector.load %arg6[%c0, %c0_0] : memref<4x646xf32, #tpu.memory_space<vmem>>, vector<4x34xf32>
    tpu.vector_store %arg6[%c0, %c0_0], %0 {strides = array<i32>} : memref<4x646xf32, #tpu.memory_space<vmem>>, vector<4x34xf32>,
    %cst_1 = arith.constant 0.000000e+00 : f32
    %2 = vector.broadcast %cst_1 : f32 to vector<4x68xf32>
    %c0_2 = arith.constant 0 : index
    %c578 = arith.constant 578 : index
    %3 = vector.load %arg6[%c0_2, %c578] : memref<4x646xf32, #tpu.memory_space<vmem>>, vector<4x68xf32>
    tpu.vector_store %arg6[%c0_2, %c578], %2 {strides = array<i32>} : memref<4x646xf32, #tpu.memory_space<vmem>>, vector<4x68xf32>,
    %c0_3 = arith.constant 0 : index
    %c0_4 = arith.constant 0 : index
    %4 = vector.load %arg2[%c0_3, %c0_4] : memref<16x34xf32, #tpu.memory_space<vmem>>, vector<16x34xf32>
    %c0_5 = arith.constant 0 : index
    %c0_6 = arith.constant 0 : index
    %c0_7 = arith.constant 0 : index
    %5 = vector.load %arg1[%c0_5, %c0_6, %c0_7] : memref<1x4x256xf32, #tpu.memory_space<vmem>>, vector<1x4x16xf32>
    %6 = vector.shape_cast %5 : vector<1x4x16xf32> to vector<4x16xf32>
    %cst_8 = arith.constant dense<0.000000e+00> : vector<4x34xf32>
    %7 = tpu.matmul %6, %4, %cst_8 {dimension_numbers = #tpu.dot_dimension_numbers<[1], [0], [0], [1], [0, 0, 1, 1], [], []>} : vector<4x16xf32>, vector<16x34xf32>, vector<4x34xf32> -> vector<4x34xf32>
    %c0_9 = arith.constant 0 : index
    %c34 = arith.constant 34 : index
    %8 = vector.load %arg6[%c0_9, %c34] : memref<4x646xf32, #tpu.memory_space<vmem>>, vector<4x34xf32>
    tpu.vector_store %arg6[%c0_9, %c34], %7 {strides = array<i32>} : memref<4x646xf32, #tpu.memory_space<vmem>>, vector<4x34xf32>,
    %c0_10 = arith.constant 0 : index
    %c0_11 = arith.constant 0 : index
    %c16 = arith.constant 16 : index
    %9 = vector.load %arg1[%c0_10, %c0_11, %c16] : memref<1x4x256xf32, #tpu.memory_space<vmem>>, vector<1x4x16xf32>
    %10 = vector.shape_cast %9 : vector<1x4x16xf32> to vector<4x16xf32>
    %cst_12 = arith.constant dense<0.000000e+00> : vector<4x34xf32>
    %11 = tpu.matmul %10, %4, %cst_12 {dimension_numbers = #tpu.dot_dimension_numbers<[1], [0], [0], [1], [0, 0, 1, 1], [], []>} : vector<4x16xf32>, vector<16x34xf32>, vector<4x34xf32> -> vector<4x34xf32>
    %c0_13 = arith.constant 0 : index
    %c68 = arith.constant 68 : index
    %12 = vector.load %arg6[%c0_13, %c68] : memref<4x646xf32, #tpu.memory_space<vmem>>, vector<4x34xf32>
    tpu.vector_store %arg6[%c0_13, %c68], %11 {strides = array<i32>} : memref<4x646xf32, #tpu.memory_space<vmem>>, vector<4x34xf32>,
    %c0_14 = arith.constant 0 : index
    %c0_15 = arith.constant 0 : index
    %c32 = arith.constant 32 : index
    %13 = vector.load %arg1[%c0_14, %c0_15, %c32] : memref<1x4x256xf32, #tpu.memory_space<vmem>>, vector<1x4x16xf32>
    %14 = vector.shape_cast %13 : vector<1x4x16xf32> to vector<4x16xf32>
    %cst_16 = arith.constant dense<0.000000e+00> : vector<4x34xf32>
    %15 = tpu.matmul %14, %4, %cst_16 {dimension_numbers = #tpu.dot_dimension_numbers<[1], [0], [0], [1], [0, 0, 1, 1], [], []>} : vector<4x16xf32>, vector<16x34xf32>, vector<4x34xf32> -> vector<4x34xf32>
    %c0_17 = arith.constant 0 : index
    %c102 = arith.constant 102 : index
    %16 = vector.load %arg6[%c0_17, %c102] : memref<4x646xf32, #tpu.memory_space<vmem>>, vector<4x34xf32>
    tpu.vector_store %arg6[%c0_17, %c102], %15 {strides = array<i32>} : memref<4x646xf32, #tpu.memory_space<vmem>>, vector<4x34xf32>,
    %c0_18 = arith.constant 0 : index
    %c0_19 = arith.constant 0 : index
    %c48 = arith.constant 48 : index
    %17 = vector.load %arg1[%c0_18, %c0_19, %c48] : memref<1x4x256xf32, #tpu.memory_space<vmem>>, vector<1x4x16xf32>
    %18 = vector.shape_cast %17 : vector<1x4x16xf32> to vector<4x16xf32>
    %cst_20 = arith.constant dense<0.000000e+00> : vector<4x34xf32>
    %19 = tpu.matmul %18, %4, %cst_20 {dimension_numbers = #tpu.dot_dimension_numbers<[1], [0], [0], [1], [0, 0, 1, 1], [], []>} : vector<4x16xf32>, vector<16x34xf32>, vector<4x34xf32> -> vector<4x34xf32>
    %c0_21 = arith.constant 0 : index
    %c136 = arith.constant 136 : index
    %20 = vector.load %arg6[%c0_21, %c136] : memref<4x646xf32, #tpu.memory_space<vmem>>, vector<4x34xf32>
    tpu.vector_store %arg6[%c0_21, %c136], %19 {strides = array<i32>} : memref<4x646xf32, #tpu.memory_space<vmem>>, vector<4x34xf32>,
    %c0_22 = arith.constant 0 : index
    %c0_23 = arith.constant 0 : index
    %c64 = arith.constant 64 : index
    %21 = vector.load %arg1[%c0_22, %c0_23, %c64] : memref<1x4x256xf32, #tpu.memory_space<vmem>>, vector<1x4x16xf32>
    %22 = vector.shape_cast %21 : vector<1x4x16xf32> to vector<4x16xf32>
    %cst_24 = arith.constant dense<0.000000e+00> : vector<4x34xf32>
    %23 = tpu.matmul %22, %4, %cst_24 {dimension_numbers = #tpu.dot_dimension_numbers<[1], [0], [0], [1], [0, 0, 1, 1], [], []>} : vector<4x16xf32>, vector<16x34xf32>, vector<4x34xf32> -> vector<4x34xf32>
    %c0_25 = arith.constant 0 : index
    %c170 = arith.constant 170 : index
    %24 = vector.load %arg6[%c0_25, %c170] : memref<4x646xf32, #tpu.memory_space<vmem>>, vector<4x34xf32>
    tpu.vector_store %arg6[%c0_25, %c170], %23 {strides = array<i32>} : memref<4x646xf32, #tpu.memory_space<vmem>>, vector<4x34xf32>,
    %c0_26 = arith.constant 0 : index
    %c0_27 = arith.constant 0 : index
    %c80 = arith.constant 80 : index
    %25 = vector.load %arg1[%c0_26, %c0_27, %c80] : memref<1x4x256xf32, #tpu.memory_space<vmem>>, vector<1x4x16xf32>
    %26 = vector.shape_cast %25 : vector<1x4x16xf32> to vector<4x16xf32>
    %cst_28 = arith.constant dense<0.000000e+00> : vector<4x34xf32>
    %27 = tpu.matmul %26, %4, %cst_28 {dimension_numbers = #tpu.dot_dimension_numbers<[1], [0], [0], [1], [0, 0, 1, 1], [], []>} : vector<4x16xf32>, vector<16x34xf32>, vector<4x34xf32> -> vector<4x34xf32>
    %c0_29 = arith.constant 0 : index
    %c204 = arith.constant 204 : index
    %28 = vector.load %arg6[%c0_29, %c204] : memref<4x646xf32, #tpu.memory_space<vmem>>, vector<4x34xf32>
    tpu.vector_store %arg6[%c0_29, %c204], %27 {strides = array<i32>} : memref<4x646xf32, #tpu.memory_space<vmem>>, vector<4x34xf32>,
    %c0_30 = arith.constant 0 : index
    %c0_31 = arith.constant 0 : index
    %c96 = arith.constant 96 : index
    %29 = vector.load %arg1[%c0_30, %c0_31, %c96] : memref<1x4x256xf32, #tpu.memory_space<vmem>>, vector<1x4x16xf32>
    %30 = vector.shape_cast %29 : vector<1x4x16xf32> to vector<4x16xf32>
    %cst_32 = arith.constant dense<0.000000e+00> : vector<4x34xf32>
    %31 = tpu.matmul %30, %4, %cst_32 {dimension_numbers = #tpu.dot_dimension_numbers<[1], [0], [0], [1], [0, 0, 1, 1], [], []>} : vector<4x16xf32>, vector<16x34xf32>, vector<4x34xf32> -> vector<4x34xf32>
    %c0_33 = arith.constant 0 : index
    %c238 = arith.constant 238 : index
    %32 = vector.load %arg6[%c0_33, %c238] : memref<4x646xf32, #tpu.memory_space<vmem>>, vector<4x34xf32>
    tpu.vector_store %arg6[%c0_33, %c238], %31 {strides = array<i32>} : memref<4x646xf32, #tpu.memory_space<vmem>>, vector<4x34xf32>,
    %c0_34 = arith.constant 0 : index
    %c0_35 = arith.constant 0 : index
    %c112 = arith.constant 112 : index
    %33 = vector.load %arg1[%c0_34, %c0_35, %c112] : memref<1x4x256xf32, #tpu.memory_space<vmem>>, vector<1x4x16xf32>
    %34 = vector.shape_cast %33 : vector<1x4x16xf32> to vector<4x16xf32>
    %cst_36 = arith.constant dense<0.000000e+00> : vector<4x34xf32>
    %35 = tpu.matmul %34, %4, %cst_36 {dimension_numbers = #tpu.dot_dimension_numbers<[1], [0], [0], [1], [0, 0, 1, 1], [], []>} : vector<4x16xf32>, vector<16x34xf32>, vector<4x34xf32> -> vector<4x34xf32>
    %c0_37 = arith.constant 0 : index
    %c272 = arith.constant 272 : index
    %36 = vector.load %arg6[%c0_37, %c272] : memref<4x646xf32, #tpu.memory_space<vmem>>, vector<4x34xf32>
    tpu.vector_store %arg6[%c0_37, %c272], %35 {strides = array<i32>} : memref<4x646xf32, #tpu.memory_space<vmem>>, vector<4x34xf32>,
    %c0_38 = arith.constant 0 : index
    %c0_39 = arith.constant 0 : index
    %c128 = arith.constant 128 : index
    %37 = vector.load %arg1[%c0_38, %c0_39, %c128] : memref<1x4x256xf32, #tpu.memory_space<vmem>>, vector<1x4x16xf32>
    %38 = vector.shape_cast %37 : vector<1x4x16xf32> to vector<4x16xf32>
    %cst_40 = arith.constant dense<0.000000e+00> : vector<4x34xf32>
    %39 = tpu.matmul %38, %4, %cst_40 {dimension_numbers = #tpu.dot_dimension_numbers<[1], [0], [0], [1], [0, 0, 1, 1], [], []>} : vector<4x16xf32>, vector<16x34xf32>, vector<4x34xf32> -> vector<4x34xf32>
    %c0_41 = arith.constant 0 : index
    %c306 = arith.constant 306 : index
    %40 = vector.load %arg6[%c0_41, %c306] : memref<4x646xf32, #tpu.memory_space<vmem>>, vector<4x34xf32>
    tpu.vector_store %arg6[%c0_41, %c306], %39 {strides = array<i32>} : memref<4x646xf32, #tpu.memory_space<vmem>>, vector<4x34xf32>,
    %c0_42 = arith.constant 0 : index
    %c0_43 = arith.constant 0 : index
    %c144 = arith.constant 144 : index
    %41 = vector.load %arg1[%c0_42, %c0_43, %c144] : memref<1x4x256xf32, #tpu.memory_space<vmem>>, vector<1x4x16xf32>
    %42 = vector.shape_cast %41 : vector<1x4x16xf32> to vector<4x16xf32>
    %cst_44 = arith.constant dense<0.000000e+00> : vector<4x34xf32>
    %43 = tpu.matmul %42, %4, %cst_44 {dimension_numbers = #tpu.dot_dimension_numbers<[1], [0], [0], [1], [0, 0, 1, 1], [], []>} : vector<4x16xf32>, vector<16x34xf32>, vector<4x34xf32> -> vector<4x34xf32>
    %c0_45 = arith.constant 0 : index
    %c340 = arith.constant 340 : index
    %44 = vector.load %arg6[%c0_45, %c340] : memref<4x646xf32, #tpu.memory_space<vmem>>, vector<4x34xf32>
    tpu.vector_store %arg6[%c0_45, %c340], %43 {strides = array<i32>} : memref<4x646xf32, #tpu.memory_space<vmem>>, vector<4x34xf32>,
    %c0_46 = arith.constant 0 : index
    %c0_47 = arith.constant 0 : index
    %c160 = arith.constant 160 : index
    %45 = vector.load %arg1[%c0_46, %c0_47, %c160] : memref<1x4x256xf32, #tpu.memory_space<vmem>>, vector<1x4x16xf32>
    %46 = vector.shape_cast %45 : vector<1x4x16xf32> to vector<4x16xf32>
    %cst_48 = arith.constant dense<0.000000e+00> : vector<4x34xf32>
    %47 = tpu.matmul %46, %4, %cst_48 {dimension_numbers = #tpu.dot_dimension_numbers<[1], [0], [0], [1], [0, 0, 1, 1], [], []>} : vector<4x16xf32>, vector<16x34xf32>, vector<4x34xf32> -> vector<4x34xf32>
    %c0_49 = arith.constant 0 : index
    %c374 = arith.constant 374 : index
    %48 = vector.load %arg6[%c0_49, %c374] : memref<4x646xf32, #tpu.memory_space<vmem>>, vector<4x34xf32>
    tpu.vector_store %arg6[%c0_49, %c374], %47 {strides = array<i32>} : memref<4x646xf32, #tpu.memory_space<vmem>>, vector<4x34xf32>,
    %c0_50 = arith.constant 0 : index
    %c0_51 = arith.constant 0 : index
    %c176 = arith.constant 176 : index
    %49 = vector.load %arg1[%c0_50, %c0_51, %c176] : memref<1x4x256xf32, #tpu.memory_space<vmem>>, vector<1x4x16xf32>
    %50 = vector.shape_cast %49 : vector<1x4x16xf32> to vector<4x16xf32>
    %cst_52 = arith.constant dense<0.000000e+00> : vector<4x34xf32>
    %51 = tpu.matmul %50, %4, %cst_52 {dimension_numbers = #tpu.dot_dimension_numbers<[1], [0], [0], [1], [0, 0, 1, 1], [], []>} : vector<4x16xf32>, vector<16x34xf32>, vector<4x34xf32> -> vector<4x34xf32>
    %c0_53 = arith.constant 0 : index
    %c408 = arith.constant 408 : index
    %52 = vector.load %arg6[%c0_53, %c408] : memref<4x646xf32, #tpu.memory_space<vmem>>, vector<4x34xf32>
    tpu.vector_store %arg6[%c0_53, %c408], %51 {strides = array<i32>} : memref<4x646xf32, #tpu.memory_space<vmem>>, vector<4x34xf32>,
    %c0_54 = arith.constant 0 : index
    %c0_55 = arith.constant 0 : index
    %c192 = arith.constant 192 : index
    %53 = vector.load %arg1[%c0_54, %c0_55, %c192] : memref<1x4x256xf32, #tpu.memory_space<vmem>>, vector<1x4x16xf32>
    %54 = vector.shape_cast %53 : vector<1x4x16xf32> to vector<4x16xf32>
    %cst_56 = arith.constant dense<0.000000e+00> : vector<4x34xf32>
    %55 = tpu.matmul %54, %4, %cst_56 {dimension_numbers = #tpu.dot_dimension_numbers<[1], [0], [0], [1], [0, 0, 1, 1], [], []>} : vector<4x16xf32>, vector<16x34xf32>, vector<4x34xf32> -> vector<4x34xf32>
    %c0_57 = arith.constant 0 : index
    %c442 = arith.constant 442 : index
    %56 = vector.load %arg6[%c0_57, %c442] : memref<4x646xf32, #tpu.memory_space<vmem>>, vector<4x34xf32>
    tpu.vector_store %arg6[%c0_57, %c442], %55 {strides = array<i32>} : memref<4x646xf32, #tpu.memory_space<vmem>>, vector<4x34xf32>,
    %c0_58 = arith.constant 0 : index
    %c0_59 = arith.constant 0 : index
    %c208 = arith.constant 208 : index
    %57 = vector.load %arg1[%c0_58, %c0_59, %c208] : memref<1x4x256xf32, #tpu.memory_space<vmem>>, vector<1x4x16xf32>
    %58 = vector.shape_cast %57 : vector<1x4x16xf32> to vector<4x16xf32>
    %cst_60 = arith.constant dense<0.000000e+00> : vector<4x34xf32>
    %59 = tpu.matmul %58, %4, %cst_60 {dimension_numbers = #tpu.dot_dimension_numbers<[1], [0], [0], [1], [0, 0, 1, 1], [], []>} : vector<4x16xf32>, vector<16x34xf32>, vector<4x34xf32> -> vector<4x34xf32>
    %c0_61 = arith.constant 0 : index
    %c476 = arith.constant 476 : index
    %60 = vector.load %arg6[%c0_61, %c476] : memref<4x646xf32, #tpu.memory_space<vmem>>, vector<4x34xf32>
    tpu.vector_store %arg6[%c0_61, %c476], %59 {strides = array<i32>} : memref<4x646xf32, #tpu.memory_space<vmem>>, vector<4x34xf32>,
    %c0_62 = arith.constant 0 : index
    %c0_63 = arith.constant 0 : index
    %c224 = arith.constant 224 : index
    %61 = vector.load %arg1[%c0_62, %c0_63, %c224] : memref<1x4x256xf32, #tpu.memory_space<vmem>>, vector<1x4x16xf32>
    %62 = vector.shape_cast %61 : vector<1x4x16xf32> to vector<4x16xf32>
    %cst_64 = arith.constant dense<0.000000e+00> : vector<4x34xf32>
    %63 = tpu.matmul %62, %4, %cst_64 {dimension_numbers = #tpu.dot_dimension_numbers<[1], [0], [0], [1], [0, 0, 1, 1], [], []>} : vector<4x16xf32>, vector<16x34xf32>, vector<4x34xf32> -> vector<4x34xf32>
    %c0_65 = arith.constant 0 : index
    %c510 = arith.constant 510 : index
    %64 = vector.load %arg6[%c0_65, %c510] : memref<4x646xf32, #tpu.memory_space<vmem>>, vector<4x34xf32>
    tpu.vector_store %arg6[%c0_65, %c510], %63 {strides = array<i32>} : memref<4x646xf32, #tpu.memory_space<vmem>>, vector<4x34xf32>,
    %c0_66 = arith.constant 0 : index
    %c0_67 = arith.constant 0 : index
    %c240 = arith.constant 240 : index
    %65 = vector.load %arg1[%c0_66, %c0_67, %c240] : memref<1x4x256xf32, #tpu.memory_space<vmem>>, vector<1x4x16xf32>
    %66 = vector.shape_cast %65 : vector<1x4x16xf32> to vector<4x16xf32>
    %cst_68 = arith.constant dense<0.000000e+00> : vector<4x34xf32>
    %67 = tpu.matmul %66, %4, %cst_68 {dimension_numbers = #tpu.dot_dimension_numbers<[1], [0], [0], [1], [0, 0, 1, 1], [], []>} : vector<4x16xf32>, vector<16x34xf32>, vector<4x34xf32> -> vector<4x34xf32>
    %c0_69 = arith.constant 0 : index
    %c544 = arith.constant 544 : index
    %68 = vector.load %arg6[%c0_69, %c544] : memref<4x646xf32, #tpu.memory_space<vmem>>, vector<4x34xf32>
    tpu.vector_store %arg6[%c0_69, %c544], %67 {strides = array<i32>} : memref<4x646xf32, #tpu.memory_space<vmem>>, vector<4x34xf32>,
    %c0_70 = arith.constant 0 : index
    %c0_71 = arith.constant 0 : index
    %69 = vector.load %arg4[%c0_70, %c0_71] : memref<8x1xf32, #tpu.memory_space<vmem>>, vector<8x1xf32>
    %cst_72 = arith.constant 0.000000e+00 : f32
    %70 = vector.broadcast %cst_72 : f32 to vector<8x544xf32>
    %c0_73 = arith.constant 0 : index
    %c0_74 = arith.constant 0 : index
    %71 = vector.load %arg6[%c0_73, %c0_74] : memref<4x646xf32, #tpu.memory_space<vmem>>, vector<4x544xf32>
    %c0_75 = arith.constant 0 : index
    %c0_76 = arith.constant 0 : index
    %c0_77 = arith.constant 0 : index
    %72 = vector.load %arg3[%c0_75, %c0_76, %c0_77] : memref<12x8x4xf32, #tpu.memory_space<vmem>>, vector<1x8x4xf32>
    %73 = vector.shape_cast %72 : vector<1x8x4xf32> to vector<8x4xf32>
    %cst_78 = arith.constant dense<0.000000e+00> : vector<8x544xf32>
    %74 = tpu.matmul %73, %71, %cst_78 {dimension_numbers = #tpu.dot_dimension_numbers<[1], [0], [0], [1], [0, 0, 1, 1], [], []>} : vector<8x4xf32>, vector<4x544xf32>, vector<8x544xf32> -> vector<8x544xf32>
    %75 = arith.addf %70, %74 : vector<8x544xf32>
    %c0_79 = arith.constant 0 : index
    %c1 = arith.constant 1 : index
    %76 = vector.load %arg6[%c0_79, %c1] : memref<4x646xf32, #tpu.memory_space<vmem>>, vector<4x544xf32>
    %c1_80 = arith.constant 1 : index
    %c0_81 = arith.constant 0 : index
    %c0_82 = arith.constant 0 : index
    %77 = vector.load %arg3[%c1_80, %c0_81, %c0_82] : memref<12x8x4xf32, #tpu.memory_space<vmem>>, vector<1x8x4xf32>
    %78 = vector.shape_cast %77 : vector<1x8x4xf32> to vector<8x4xf32>
    %cst_83 = arith.constant dense<0.000000e+00> : vector<8x544xf32>
    %79 = tpu.matmul %78, %76, %cst_83 {dimension_numbers = #tpu.dot_dimension_numbers<[1], [0], [0], [1], [0, 0, 1, 1], [], []>} : vector<8x4xf32>, vector<4x544xf32>, vector<8x544xf32> -> vector<8x544xf32>
    %80 = arith.addf %75, %79 : vector<8x544xf32>
    %c0_84 = arith.constant 0 : index
    %c2 = arith.constant 2 : index
    %81 = vector.load %arg6[%c0_84, %c2] : memref<4x646xf32, #tpu.memory_space<vmem>>, vector<4x544xf32>
    %c2_85 = arith.constant 2 : index
    %c0_86 = arith.constant 0 : index
    %c0_87 = arith.constant 0 : index
    %82 = vector.load %arg3[%c2_85, %c0_86, %c0_87] : memref<12x8x4xf32, #tpu.memory_space<vmem>>, vector<1x8x4xf32>
    %83 = vector.shape_cast %82 : vector<1x8x4xf32> to vector<8x4xf32>
    %cst_88 = arith.constant dense<0.000000e+00> : vector<8x544xf32>
    %84 = tpu.matmul %83, %81, %cst_88 {dimension_numbers = #tpu.dot_dimension_numbers<[1], [0], [0], [1], [0, 0, 1, 1], [], []>} : vector<8x4xf32>, vector<4x544xf32>, vector<8x544xf32> -> vector<8x544xf32>
    %85 = arith.addf %80, %84 : vector<8x544xf32>
    %c0_89 = arith.constant 0 : index
    %c34_90 = arith.constant 34 : index
    %86 = vector.load %arg6[%c0_89, %c34_90] : memref<4x646xf32, #tpu.memory_space<vmem>>, vector<4x544xf32>
    %c3 = arith.constant 3 : index
    %c0_91 = arith.constant 0 : index
    %c0_92 = arith.constant 0 : index
    %87 = vector.load %arg3[%c3, %c0_91, %c0_92] : memref<12x8x4xf32, #tpu.memory_space<vmem>>, vector<1x8x4xf32>
    %88 = vector.shape_cast %87 : vector<1x8x4xf32> to vector<8x4xf32>
    %cst_93 = arith.constant dense<0.000000e+00> : vector<8x544xf32>
    %89 = tpu.matmul %88, %86, %cst_93 {dimension_numbers = #tpu.dot_dimension_numbers<[1], [0], [0], [1], [0, 0, 1, 1], [], []>} : vector<8x4xf32>, vector<4x544xf32>, vector<8x544xf32> -> vector<8x544xf32>
    %90 = arith.addf %85, %89 : vector<8x544xf32>
    %c0_94 = arith.constant 0 : index
    %c35 = arith.constant 35 : index
    %91 = vector.load %arg6[%c0_94, %c35] : memref<4x646xf32, #tpu.memory_space<vmem>>, vector<4x544xf32>
    %c4 = arith.constant 4 : index
    %c0_95 = arith.constant 0 : index
    %c0_96 = arith.constant 0 : index
    %92 = vector.load %arg3[%c4, %c0_95, %c0_96] : memref<12x8x4xf32, #tpu.memory_space<vmem>>, vector<1x8x4xf32>
    %93 = vector.shape_cast %92 : vector<1x8x4xf32> to vector<8x4xf32>
    %cst_97 = arith.constant dense<0.000000e+00> : vector<8x544xf32>
    %94 = tpu.matmul %93, %91, %cst_97 {dimension_numbers = #tpu.dot_dimension_numbers<[1], [0], [0], [1], [0, 0, 1, 1], [], []>} : vector<8x4xf32>, vector<4x544xf32>, vector<8x544xf32> -> vector<8x544xf32>
    %95 = arith.addf %90, %94 : vector<8x544xf32>
    %c0_98 = arith.constant 0 : index
    %c36 = arith.constant 36 : index
    %96 = vector.load %arg6[%c0_98, %c36] : memref<4x646xf32, #tpu.memory_space<vmem>>, vector<4x544xf32>
    %c5 = arith.constant 5 : index
    %c0_99 = arith.constant 0 : index
    %c0_100 = arith.constant 0 : index
    %97 = vector.load %arg3[%c5, %c0_99, %c0_100] : memref<12x8x4xf32, #tpu.memory_space<vmem>>, vector<1x8x4xf32>
    %98 = vector.shape_cast %97 : vector<1x8x4xf32> to vector<8x4xf32>
    %cst_101 = arith.constant dense<0.000000e+00> : vector<8x544xf32>
    %99 = tpu.matmul %98, %96, %cst_101 {dimension_numbers = #tpu.dot_dimension_numbers<[1], [0], [0], [1], [0, 0, 1, 1], [], []>} : vector<8x4xf32>, vector<4x544xf32>, vector<8x544xf32> -> vector<8x544xf32>
    %100 = arith.addf %95, %99 : vector<8x544xf32>
    %101 = vector.broadcast %69 : vector<8x1xf32> to vector<8x544xf32>
    %102 = arith.addf %100, %101 : vector<8x544xf32>
    %103 = vector.extract_strided_slice %102 {offsets = [0, 0], sizes = [8, 32], strides = [1, 1]} : vector<8x544xf32> to vector<8x32xf32>
    %c0_102 = arith.constant 0 : index
    %c0_103 = arith.constant 0 : index
    %c0_104 = arith.constant 0 : index
    %c0_105 = arith.constant 0 : index
    %104 = vector.load %arg5[%c0_102, %c0_103, %c0_104, %c0_105] : memref<1x8x32x32xf32, #tpu.memory_space<vmem>>, vector<1x8x1x32xf32>
    %105 = vector.shape_cast %104 : vector<1x8x1x32xf32> to vector<8x32xf32>
    %106 = vector.shape_cast %103 : vector<8x32xf32> to vector<1x8x1x32xf32>
    tpu.vector_store %arg5[%c0_102, %c0_103, %c0_104, %c0_105], %106 {strides = array<i32>} : memref<1x8x32x32xf32, #tpu.memory_space<vmem>>, vector<1x8x1x32xf32>,
    %107 = vector.extract_strided_slice %102 {offsets = [0, 34], sizes = [8, 32], strides = [1, 1]} : vector<8x544xf32> to vector<8x32xf32>
    %c0_106 = arith.constant 0 : index
    %c0_107 = arith.constant 0 : index
    %c2_108 = arith.constant 2 : index
    %c0_109 = arith.constant 0 : index
    %108 = vector.load %arg5[%c0_106, %c0_107, %c2_108, %c0_109] : memref<1x8x32x32xf32, #tpu.memory_space<vmem>>, vector<1x8x1x32xf32>
    %109 = vector.shape_cast %108 : vector<1x8x1x32xf32> to vector<8x32xf32>
    %110 = vector.shape_cast %107 : vector<8x32xf32> to vector<1x8x1x32xf32>
    tpu.vector_store %arg5[%c0_106, %c0_107, %c2_108, %c0_109], %110 {strides = array<i32>} : memref<1x8x32x32xf32, #tpu.memory_space<vmem>>, vector<1x8x1x32xf32>,
    %111 = vector.extract_strided_slice %102 {offsets = [0, 68], sizes = [8, 32], strides = [1, 1]} : vector<8x544xf32> to vector<8x32xf32>
    %c0_110 = arith.constant 0 : index
    %c0_111 = arith.constant 0 : index
    %c4_112 = arith.constant 4 : index
    %c0_113 = arith.constant 0 : index
    %112 = vector.load %arg5[%c0_110, %c0_111, %c4_112, %c0_113] : memref<1x8x32x32xf32, #tpu.memory_space<vmem>>, vector<1x8x1x32xf32>
    %113 = vector.shape_cast %112 : vector<1x8x1x32xf32> to vector<8x32xf32>
    %114 = vector.shape_cast %111 : vector<8x32xf32> to vector<1x8x1x32xf32>
    tpu.vector_store %arg5[%c0_110, %c0_111, %c4_112, %c0_113], %114 {strides = array<i32>} : memref<1x8x32x32xf32, #tpu.memory_space<vmem>>, vector<1x8x1x32xf32>,
    %115 = vector.extract_strided_slice %102 {offsets = [0, 102], sizes = [8, 32], strides = [1, 1]} : vector<8x544xf32> to vector<8x32xf32>
    %c0_114 = arith.constant 0 : index
    %c0_115 = arith.constant 0 : index
    %c6 = arith.constant 6 : index
    %c0_116 = arith.constant 0 : index
    %116 = vector.load %arg5[%c0_114, %c0_115, %c6, %c0_116] : memref<1x8x32x32xf32, #tpu.memory_space<vmem>>, vector<1x8x1x32xf32>
    %117 = vector.shape_cast %116 : vector<1x8x1x32xf32> to vector<8x32xf32>
    %118 = vector.shape_cast %115 : vector<8x32xf32> to vector<1x8x1x32xf32>
    tpu.vector_store %arg5[%c0_114, %c0_115, %c6, %c0_116], %118 {strides = array<i32>} : memref<1x8x32x32xf32, #tpu.memory_space<vmem>>, vector<1x8x1x32xf32>,
    %119 = vector.extract_strided_slice %102 {offsets = [0, 136], sizes = [8, 32], strides = [1, 1]} : vector<8x544xf32> to vector<8x32xf32>
    %c0_117 = arith.constant 0 : index
    %c0_118 = arith.constant 0 : index
    %c8 = arith.constant 8 : index
    %c0_119 = arith.constant 0 : index
    %120 = vector.load %arg5[%c0_117, %c0_118, %c8, %c0_119] : memref<1x8x32x32xf32, #tpu.memory_space<vmem>>, vector<1x8x1x32xf32>
    %121 = vector.shape_cast %120 : vector<1x8x1x32xf32> to vector<8x32xf32>
    %122 = vector.shape_cast %119 : vector<8x32xf32> to vector<1x8x1x32xf32>
    tpu.vector_store %arg5[%c0_117, %c0_118, %c8, %c0_119], %122 {strides = array<i32>} : memref<1x8x32x32xf32, #tpu.memory_space<vmem>>, vector<1x8x1x32xf32>,
    %123 = vector.extract_strided_slice %102 {offsets = [0, 170], sizes = [8, 32], strides = [1, 1]} : vector<8x544xf32> to vector<8x32xf32>
    %c0_120 = arith.constant 0 : index
    %c0_121 = arith.constant 0 : index
    %c10 = arith.constant 10 : index
    %c0_122 = arith.constant 0 : index
    %124 = vector.load %arg5[%c0_120, %c0_121, %c10, %c0_122] : memref<1x8x32x32xf32, #tpu.memory_space<vmem>>, vector<1x8x1x32xf32>
    %125 = vector.shape_cast %124 : vector<1x8x1x32xf32> to vector<8x32xf32>
    %126 = vector.shape_cast %123 : vector<8x32xf32> to vector<1x8x1x32xf32>
    tpu.vector_store %arg5[%c0_120, %c0_121, %c10, %c0_122], %126 {strides = array<i32>} : memref<1x8x32x32xf32, #tpu.memory_space<vmem>>, vector<1x8x1x32xf32>,
    %127 = vector.extract_strided_slice %102 {offsets = [0, 204], sizes = [8, 32], strides = [1, 1]} : vector<8x544xf32> to vector<8x32xf32>
    %c0_123 = arith.constant 0 : index
    %c0_124 = arith.constant 0 : index
    %c12 = arith.constant 12 : index
    %c0_125 = arith.constant 0 : index
    %128 = vector.load %arg5[%c0_123, %c0_124, %c12, %c0_125] : memref<1x8x32x32xf32, #tpu.memory_space<vmem>>, vector<1x8x1x32xf32>
    %129 = vector.shape_cast %128 : vector<1x8x1x32xf32> to vector<8x32xf32>
    %130 = vector.shape_cast %127 : vector<8x32xf32> to vector<1x8x1x32xf32>
    tpu.vector_store %arg5[%c0_123, %c0_124, %c12, %c0_125], %130 {strides = array<i32>} : memref<1x8x32x32xf32, #tpu.memory_space<vmem>>, vector<1x8x1x32xf32>,
    %131 = vector.extract_strided_slice %102 {offsets = [0, 238], sizes = [8, 32], strides = [1, 1]} : vector<8x544xf32> to vector<8x32xf32>
    %c0_126 = arith.constant 0 : index
    %c0_127 = arith.constant 0 : index
    %c14 = arith.constant 14 : index
    %c0_128 = arith.constant 0 : index
    %132 = vector.load %arg5[%c0_126, %c0_127, %c14, %c0_128] : memref<1x8x32x32xf32, #tpu.memory_space<vmem>>, vector<1x8x1x32xf32>
    %133 = vector.shape_cast %132 : vector<1x8x1x32xf32> to vector<8x32xf32>
    %134 = vector.shape_cast %131 : vector<8x32xf32> to vector<1x8x1x32xf32>
    tpu.vector_store %arg5[%c0_126, %c0_127, %c14, %c0_128], %134 {strides = array<i32>} : memref<1x8x32x32xf32, #tpu.memory_space<vmem>>, vector<1x8x1x32xf32>,
    %135 = vector.extract_strided_slice %102 {offsets = [0, 272], sizes = [8, 32], strides = [1, 1]} : vector<8x544xf32> to vector<8x32xf32>
    %c0_129 = arith.constant 0 : index
    %c0_130 = arith.constant 0 : index
    %c16_131 = arith.constant 16 : index
    %c0_132 = arith.constant 0 : index
    %136 = vector.load %arg5[%c0_129, %c0_130, %c16_131, %c0_132] : memref<1x8x32x32xf32, #tpu.memory_space<vmem>>, vector<1x8x1x32xf32>
    %137 = vector.shape_cast %136 : vector<1x8x1x32xf32> to vector<8x32xf32>
    %138 = vector.shape_cast %135 : vector<8x32xf32> to vector<1x8x1x32xf32>
    tpu.vector_store %arg5[%c0_129, %c0_130, %c16_131, %c0_132], %138 {strides = array<i32>} : memref<1x8x32x32xf32, #tpu.memory_space<vmem>>, vector<1x8x1x32xf32>,
    %139 = vector.extract_strided_slice %102 {offsets = [0, 306], sizes = [8, 32], strides = [1, 1]} : vector<8x544xf32> to vector<8x32xf32>
    %c0_133 = arith.constant 0 : index
    %c0_134 = arith.constant 0 : index
    %c18 = arith.constant 18 : index
    %c0_135 = arith.constant 0 : index
    %140 = vector.load %arg5[%c0_133, %c0_134, %c18, %c0_135] : memref<1x8x32x32xf32, #tpu.memory_space<vmem>>, vector<1x8x1x32xf32>
    %141 = vector.shape_cast %140 : vector<1x8x1x32xf32> to vector<8x32xf32>
    %142 = vector.shape_cast %139 : vector<8x32xf32> to vector<1x8x1x32xf32>
    tpu.vector_store %arg5[%c0_133, %c0_134, %c18, %c0_135], %142 {strides = array<i32>} : memref<1x8x32x32xf32, #tpu.memory_space<vmem>>, vector<1x8x1x32xf32>,
    %143 = vector.extract_strided_slice %102 {offsets = [0, 340], sizes = [8, 32], strides = [1, 1]} : vector<8x544xf32> to vector<8x32xf32>
    %c0_136 = arith.constant 0 : index
    %c0_137 = arith.constant 0 : index
    %c20 = arith.constant 20 : index
    %c0_138 = arith.constant 0 : index
    %144 = vector.load %arg5[%c0_136, %c0_137, %c20, %c0_138] : memref<1x8x32x32xf32, #tpu.memory_space<vmem>>, vector<1x8x1x32xf32>
    %145 = vector.shape_cast %144 : vector<1x8x1x32xf32> to vector<8x32xf32>
    %146 = vector.shape_cast %143 : vector<8x32xf32> to vector<1x8x1x32xf32>
    tpu.vector_store %arg5[%c0_136, %c0_137, %c20, %c0_138], %146 {strides = array<i32>} : memref<1x8x32x32xf32, #tpu.memory_space<vmem>>, vector<1x8x1x32xf32>,
    %147 = vector.extract_strided_slice %102 {offsets = [0, 374], sizes = [8, 32], strides = [1, 1]} : vector<8x544xf32> to vector<8x32xf32>
    %c0_139 = arith.constant 0 : index
    %c0_140 = arith.constant 0 : index
    %c22 = arith.constant 22 : index
    %c0_141 = arith.constant 0 : index
    %148 = vector.load %arg5[%c0_139, %c0_140, %c22, %c0_141] : memref<1x8x32x32xf32, #tpu.memory_space<vmem>>, vector<1x8x1x32xf32>
    %149 = vector.shape_cast %148 : vector<1x8x1x32xf32> to vector<8x32xf32>
    %150 = vector.shape_cast %147 : vector<8x32xf32> to vector<1x8x1x32xf32>
    tpu.vector_store %arg5[%c0_139, %c0_140, %c22, %c0_141], %150 {strides = array<i32>} : memref<1x8x32x32xf32, #tpu.memory_space<vmem>>, vector<1x8x1x32xf32>,
    %151 = vector.extract_strided_slice %102 {offsets = [0, 408], sizes = [8, 32], strides = [1, 1]} : vector<8x544xf32> to vector<8x32xf32>
    %c0_142 = arith.constant 0 : index
    %c0_143 = arith.constant 0 : index
    %c24 = arith.constant 24 : index
    %c0_144 = arith.constant 0 : index
    %152 = vector.load %arg5[%c0_142, %c0_143, %c24, %c0_144] : memref<1x8x32x32xf32, #tpu.memory_space<vmem>>, vector<1x8x1x32xf32>
    %153 = vector.shape_cast %152 : vector<1x8x1x32xf32> to vector<8x32xf32>
    %154 = vector.shape_cast %151 : vector<8x32xf32> to vector<1x8x1x32xf32>
    tpu.vector_store %arg5[%c0_142, %c0_143, %c24, %c0_144], %154 {strides = array<i32>} : memref<1x8x32x32xf32, #tpu.memory_space<vmem>>, vector<1x8x1x32xf32>,
    %155 = vector.extract_strided_slice %102 {offsets = [0, 442], sizes = [8, 32], strides = [1, 1]} : vector<8x544xf32> to vector<8x32xf32>
    %c0_145 = arith.constant 0 : index
    %c0_146 = arith.constant 0 : index
    %c26 = arith.constant 26 : index
    %c0_147 = arith.constant 0 : index
    %156 = vector.load %arg5[%c0_145, %c0_146, %c26, %c0_147] : memref<1x8x32x32xf32, #tpu.memory_space<vmem>>, vector<1x8x1x32xf32>
    %157 = vector.shape_cast %156 : vector<1x8x1x32xf32> to vector<8x32xf32>
    %158 = vector.shape_cast %155 : vector<8x32xf32> to vector<1x8x1x32xf32>
    tpu.vector_store %arg5[%c0_145, %c0_146, %c26, %c0_147], %158 {strides = array<i32>} : memref<1x8x32x32xf32, #tpu.memory_space<vmem>>, vector<1x8x1x32xf32>,
    %159 = vector.extract_strided_slice %102 {offsets = [0, 476], sizes = [8, 32], strides = [1, 1]} : vector<8x544xf32> to vector<8x32xf32>
    %c0_148 = arith.constant 0 : index
    %c0_149 = arith.constant 0 : index
    %c28 = arith.constant 28 : index
    %c0_150 = arith.constant 0 : index
    %160 = vector.load %arg5[%c0_148, %c0_149, %c28, %c0_150] : memref<1x8x32x32xf32, #tpu.memory_space<vmem>>, vector<1x8x1x32xf32>
    %161 = vector.shape_cast %160 : vector<1x8x1x32xf32> to vector<8x32xf32>
    %162 = vector.shape_cast %159 : vector<8x32xf32> to vector<1x8x1x32xf32>
    tpu.vector_store %arg5[%c0_148, %c0_149, %c28, %c0_150], %162 {strides = array<i32>} : memref<1x8x32x32xf32, #tpu.memory_space<vmem>>, vector<1x8x1x32xf32>,
    %163 = vector.extract_strided_slice %102 {offsets = [0, 510], sizes = [8, 32], strides = [1, 1]} : vector<8x544xf32> to vector<8x32xf32>
    %c0_151 = arith.constant 0 : index
    %c0_152 = arith.constant 0 : index
    %c30 = arith.constant 30 : index
    %c0_153 = arith.constant 0 : index
    %164 = vector.load %arg5[%c0_151, %c0_152, %c30, %c0_153] : memref<1x8x32x32xf32, #tpu.memory_space<vmem>>, vector<1x8x1x32xf32>
    %165 = vector.shape_cast %164 : vector<1x8x1x32xf32> to vector<8x32xf32>
    %166 = vector.shape_cast %163 : vector<8x32xf32> to vector<1x8x1x32xf32>
    tpu.vector_store %arg5[%c0_151, %c0_152, %c30, %c0_153], %166 {strides = array<i32>} : memref<1x8x32x32xf32, #tpu.memory_space<vmem>>, vector<1x8x1x32xf32>,
    %cst_154 = arith.constant 0.000000e+00 : f32
    %167 = vector.broadcast %cst_154 : f32 to vector<8x544xf32>
    %c0_155 = arith.constant 0 : index
    %c34_156 = arith.constant 34 : index
    %168 = vector.load %arg6[%c0_155, %c34_156] : memref<4x646xf32, #tpu.memory_space<vmem>>, vector<4x544xf32>
    %c6_157 = arith.constant 6 : index
    %c0_158 = arith.constant 0 : index
    %c0_159 = arith.constant 0 : index
    %169 = vector.load %arg3[%c6_157, %c0_158, %c0_159] : memref<12x8x4xf32, #tpu.memory_space<vmem>>, vector<1x8x4xf32>
    %170 = vector.shape_cast %169 : vector<1x8x4xf32> to vector<8x4xf32>
    %cst_160 = arith.constant dense<0.000000e+00> : vector<8x544xf32>
    %171 = tpu.matmul %170, %168, %cst_160 {dimension_numbers = #tpu.dot_dimension_numbers<[1], [0], [0], [1], [0, 0, 1, 1], [], []>} : vector<8x4xf32>, vector<4x544xf32>, vector<8x544xf32> -> vector<8x544xf32>
    %172 = arith.addf %167, %171 : vector<8x544xf32>
    %c0_161 = arith.constant 0 : index
    %c35_162 = arith.constant 35 : index
    %173 = vector.load %arg6[%c0_161, %c35_162] : memref<4x646xf32, #tpu.memory_space<vmem>>, vector<4x544xf32>
    %c7 = arith.constant 7 : index
    %c0_163 = arith.constant 0 : index
    %c0_164 = arith.constant 0 : index
    %174 = vector.load %arg3[%c7, %c0_163, %c0_164] : memref<12x8x4xf32, #tpu.memory_space<vmem>>, vector<1x8x4xf32>
    %175 = vector.shape_cast %174 : vector<1x8x4xf32> to vector<8x4xf32>
    %cst_165 = arith.constant dense<0.000000e+00> : vector<8x544xf32>
    %176 = tpu.matmul %175, %173, %cst_165 {dimension_numbers = #tpu.dot_dimension_numbers<[1], [0], [0], [1], [0, 0, 1, 1], [], []>} : vector<8x4xf32>, vector<4x544xf32>, vector<8x544xf32> -> vector<8x544xf32>
    %177 = arith.addf %172, %176 : vector<8x544xf32>
    %c0_166 = arith.constant 0 : index
    %c36_167 = arith.constant 36 : index
    %178 = vector.load %arg6[%c0_166, %c36_167] : memref<4x646xf32, #tpu.memory_space<vmem>>, vector<4x544xf32>
    %c8_168 = arith.constant 8 : index
    %c0_169 = arith.constant 0 : index
    %c0_170 = arith.constant 0 : index
    %179 = vector.load %arg3[%c8_168, %c0_169, %c0_170] : memref<12x8x4xf32, #tpu.memory_space<vmem>>, vector<1x8x4xf32>
    %180 = vector.shape_cast %179 : vector<1x8x4xf32> to vector<8x4xf32>
    %cst_171 = arith.constant dense<0.000000e+00> : vector<8x544xf32>
    %181 = tpu.matmul %180, %178, %cst_171 {dimension_numbers = #tpu.dot_dimension_numbers<[1], [0], [0], [1], [0, 0, 1, 1], [], []>} : vector<8x4xf32>, vector<4x544xf32>, vector<8x544xf32> -> vector<8x544xf32>
    %182 = arith.addf %177, %181 : vector<8x544xf32>
    %c0_172 = arith.constant 0 : index
    %c68_173 = arith.constant 68 : index
    %183 = vector.load %arg6[%c0_172, %c68_173] : memref<4x646xf32, #tpu.memory_space<vmem>>, vector<4x544xf32>
    %c9 = arith.constant 9 : index
    %c0_174 = arith.constant 0 : index
    %c0_175 = arith.constant 0 : index
    %184 = vector.load %arg3[%c9, %c0_174, %c0_175] : memref<12x8x4xf32, #tpu.memory_space<vmem>>, vector<1x8x4xf32>
    %185 = vector.shape_cast %184 : vector<1x8x4xf32> to vector<8x4xf32>
    %cst_176 = arith.constant dense<0.000000e+00> : vector<8x544xf32>
    %186 = tpu.matmul %185, %183, %cst_176 {dimension_numbers = #tpu.dot_dimension_numbers<[1], [0], [0], [1], [0, 0, 1, 1], [], []>} : vector<8x4xf32>, vector<4x544xf32>, vector<8x544xf32> -> vector<8x544xf32>
    %187 = arith.addf %182, %186 : vector<8x544xf32>
    %c0_177 = arith.constant 0 : index
    %c69 = arith.constant 69 : index
    %188 = vector.load %arg6[%c0_177, %c69] : memref<4x646xf32, #tpu.memory_space<vmem>>, vector<4x544xf32>
    %c10_178 = arith.constant 10 : index
    %c0_179 = arith.constant 0 : index
    %c0_180 = arith.constant 0 : index
    %189 = vector.load %arg3[%c10_178, %c0_179, %c0_180] : memref<12x8x4xf32, #tpu.memory_space<vmem>>, vector<1x8x4xf32>
    %190 = vector.shape_cast %189 : vector<1x8x4xf32> to vector<8x4xf32>
    %cst_181 = arith.constant dense<0.000000e+00> : vector<8x544xf32>
    %191 = tpu.matmul %190, %188, %cst_181 {dimension_numbers = #tpu.dot_dimension_numbers<[1], [0], [0], [1], [0, 0, 1, 1], [], []>} : vector<8x4xf32>, vector<4x544xf32>, vector<8x544xf32> -> vector<8x544xf32>
    %192 = arith.addf %187, %191 : vector<8x544xf32>
    %c0_182 = arith.constant 0 : index
    %c70 = arith.constant 70 : index
    %193 = vector.load %arg6[%c0_182, %c70] : memref<4x646xf32, #tpu.memory_space<vmem>>, vector<4x544xf32>
    %c11 = arith.constant 11 : index
    %c0_183 = arith.constant 0 : index
    %c0_184 = arith.constant 0 : index
    %194 = vector.load %arg3[%c11, %c0_183, %c0_184] : memref<12x8x4xf32, #tpu.memory_space<vmem>>, vector<1x8x4xf32>
    %195 = vector.shape_cast %194 : vector<1x8x4xf32> to vector<8x4xf32>
    %cst_185 = arith.constant dense<0.000000e+00> : vector<8x544xf32>
    %196 = tpu.matmul %195, %193, %cst_185 {dimension_numbers = #tpu.dot_dimension_numbers<[1], [0], [0], [1], [0, 0, 1, 1], [], []>} : vector<8x4xf32>, vector<4x544xf32>, vector<8x544xf32> -> vector<8x544xf32>
    %197 = arith.addf %192, %196 : vector<8x544xf32>
    %198 = vector.broadcast %69 : vector<8x1xf32> to vector<8x544xf32>
    %199 = arith.addf %197, %198 : vector<8x544xf32>
    %200 = vector.extract_strided_slice %199 {offsets = [0, 0], sizes = [8, 32], strides = [1, 1]} : vector<8x544xf32> to vector<8x32xf32>
    %c0_186 = arith.constant 0 : index
    %c0_187 = arith.constant 0 : index
    %c1_188 = arith.constant 1 : index
    %c0_189 = arith.constant 0 : index
    %201 = vector.load %arg5[%c0_186, %c0_187, %c1_188, %c0_189] : memref<1x8x32x32xf32, #tpu.memory_space<vmem>>, vector<1x8x1x32xf32>
    %202 = vector.shape_cast %201 : vector<1x8x1x32xf32> to vector<8x32xf32>
    %203 = vector.shape_cast %200 : vector<8x32xf32> to vector<1x8x1x32xf32>
    tpu.vector_store %arg5[%c0_186, %c0_187, %c1_188, %c0_189], %203 {strides = array<i32>} : memref<1x8x32x32xf32, #tpu.memory_space<vmem>>, vector<1x8x1x32xf32>,
    %204 = vector.extract_strided_slice %199 {offsets = [0, 34], sizes = [8, 32], strides = [1, 1]} : vector<8x544xf32> to vector<8x32xf32>
    %c0_190 = arith.constant 0 : index
    %c0_191 = arith.constant 0 : index
    %c3_192 = arith.constant 3 : index
    %c0_193 = arith.constant 0 : index
    %205 = vector.load %arg5[%c0_190, %c0_191, %c3_192, %c0_193] : memref<1x8x32x32xf32, #tpu.memory_space<vmem>>, vector<1x8x1x32xf32>
    %206 = vector.shape_cast %205 : vector<1x8x1x32xf32> to vector<8x32xf32>
    %207 = vector.shape_cast %204 : vector<8x32xf32> to vector<1x8x1x32xf32>
    tpu.vector_store %arg5[%c0_190, %c0_191, %c3_192, %c0_193], %207 {strides = array<i32>} : memref<1x8x32x32xf32, #tpu.memory_space<vmem>>, vector<1x8x1x32xf32>,
    %208 = vector.extract_strided_slice %199 {offsets = [0, 68], sizes = [8, 32], strides = [1, 1]} : vector<8x544xf32> to vector<8x32xf32>
    %c0_194 = arith.constant 0 : index
    %c0_195 = arith.constant 0 : index
    %c5_196 = arith.constant 5 : index
    %c0_197 = arith.constant 0 : index
    %209 = vector.load %arg5[%c0_194, %c0_195, %c5_196, %c0_197] : memref<1x8x32x32xf32, #tpu.memory_space<vmem>>, vector<1x8x1x32xf32>
    %210 = vector.shape_cast %209 : vector<1x8x1x32xf32> to vector<8x32xf32>
    %211 = vector.shape_cast %208 : vector<8x32xf32> to vector<1x8x1x32xf32>
    tpu.vector_store %arg5[%c0_194, %c0_195, %c5_196, %c0_197], %211 {strides = array<i32>} : memref<1x8x32x32xf32, #tpu.memory_space<vmem>>, vector<1x8x1x32xf32>,
    %212 = vector.extract_strided_slice %199 {offsets = [0, 102], sizes = [8, 32], strides = [1, 1]} : vector<8x544xf32> to vector<8x32xf32>
    %c0_198 = arith.constant 0 : index
    %c0_199 = arith.constant 0 : index
    %c7_200 = arith.constant 7 : index
    %c0_201 = arith.constant 0 : index
    %213 = vector.load %arg5[%c0_198, %c0_199, %c7_200, %c0_201] : memref<1x8x32x32xf32, #tpu.memory_space<vmem>>, vector<1x8x1x32xf32>
    %214 = vector.shape_cast %213 : vector<1x8x1x32xf32> to vector<8x32xf32>
    %215 = vector.shape_cast %212 : vector<8x32xf32> to vector<1x8x1x32xf32>
    tpu.vector_store %arg5[%c0_198, %c0_199, %c7_200, %c0_201], %215 {strides = array<i32>} : memref<1x8x32x32xf32, #tpu.memory_space<vmem>>, vector<1x8x1x32xf32>,
    %216 = vector.extract_strided_slice %199 {offsets = [0, 136], sizes = [8, 32], strides = [1, 1]} : vector<8x544xf32> to vector<8x32xf32>
    %c0_202 = arith.constant 0 : index
    %c0_203 = arith.constant 0 : index
    %c9_204 = arith.constant 9 : index
    %c0_205 = arith.constant 0 : index
    %217 = vector.load %arg5[%c0_202, %c0_203, %c9_204, %c0_205] : memref<1x8x32x32xf32, #tpu.memory_space<vmem>>, vector<1x8x1x32xf32>
    %218 = vector.shape_cast %217 : vector<1x8x1x32xf32> to vector<8x32xf32>
    %219 = vector.shape_cast %216 : vector<8x32xf32> to vector<1x8x1x32xf32>
    tpu.vector_store %arg5[%c0_202, %c0_203, %c9_204, %c0_205], %219 {strides = array<i32>} : memref<1x8x32x32xf32, #tpu.memory_space<vmem>>, vector<1x8x1x32xf32>,
    %220 = vector.extract_strided_slice %199 {offsets = [0, 170], sizes = [8, 32], strides = [1, 1]} : vector<8x544xf32> to vector<8x32xf32>
    %c0_206 = arith.constant 0 : index
    %c0_207 = arith.constant 0 : index
    %c11_208 = arith.constant 11 : index
    %c0_209 = arith.constant 0 : index
    %221 = vector.load %arg5[%c0_206, %c0_207, %c11_208, %c0_209] : memref<1x8x32x32xf32, #tpu.memory_space<vmem>>, vector<1x8x1x32xf32>
    %222 = vector.shape_cast %221 : vector<1x8x1x32xf32> to vector<8x32xf32>
    %223 = vector.shape_cast %220 : vector<8x32xf32> to vector<1x8x1x32xf32>
    tpu.vector_store %arg5[%c0_206, %c0_207, %c11_208, %c0_209], %223 {strides = array<i32>} : memref<1x8x32x32xf32, #tpu.memory_space<vmem>>, vector<1x8x1x32xf32>,
    %224 = vector.extract_strided_slice %199 {offsets = [0, 204], sizes = [8, 32], strides = [1, 1]} : vector<8x544xf32> to vector<8x32xf32>
    %c0_210 = arith.constant 0 : index
    %c0_211 = arith.constant 0 : index
    %c13 = arith.constant 13 : index
    %c0_212 = arith.constant 0 : index
    %225 = vector.load %arg5[%c0_210, %c0_211, %c13, %c0_212] : memref<1x8x32x32xf32, #tpu.memory_space<vmem>>, vector<1x8x1x32xf32>
    %226 = vector.shape_cast %225 : vector<1x8x1x32xf32> to vector<8x32xf32>
    %227 = vector.shape_cast %224 : vector<8x32xf32> to vector<1x8x1x32xf32>
    tpu.vector_store %arg5[%c0_210, %c0_211, %c13, %c0_212], %227 {strides = array<i32>} : memref<1x8x32x32xf32, #tpu.memory_space<vmem>>, vector<1x8x1x32xf32>,
    %228 = vector.extract_strided_slice %199 {offsets = [0, 238], sizes = [8, 32], strides = [1, 1]} : vector<8x544xf32> to vector<8x32xf32>
    %c0_213 = arith.constant 0 : index
    %c0_214 = arith.constant 0 : index
    %c15 = arith.constant 15 : index
    %c0_215 = arith.constant 0 : index
    %229 = vector.load %arg5[%c0_213, %c0_214, %c15, %c0_215] : memref<1x8x32x32xf32, #tpu.memory_space<vmem>>, vector<1x8x1x32xf32>
    %230 = vector.shape_cast %229 : vector<1x8x1x32xf32> to vector<8x32xf32>
    %231 = vector.shape_cast %228 : vector<8x32xf32> to vector<1x8x1x32xf32>
    tpu.vector_store %arg5[%c0_213, %c0_214, %c15, %c0_215], %231 {strides = array<i32>} : memref<1x8x32x32xf32, #tpu.memory_space<vmem>>, vector<1x8x1x32xf32>,
    %232 = vector.extract_strided_slice %199 {offsets = [0, 272], sizes = [8, 32], strides = [1, 1]} : vector<8x544xf32> to vector<8x32xf32>
    %c0_216 = arith.constant 0 : index
    %c0_217 = arith.constant 0 : index
    %c17 = arith.constant 17 : index
    %c0_218 = arith.constant 0 : index
    %233 = vector.load %arg5[%c0_216, %c0_217, %c17, %c0_218] : memref<1x8x32x32xf32, #tpu.memory_space<vmem>>, vector<1x8x1x32xf32>
    %234 = vector.shape_cast %233 : vector<1x8x1x32xf32> to vector<8x32xf32>
    %235 = vector.shape_cast %232 : vector<8x32xf32> to vector<1x8x1x32xf32>
    tpu.vector_store %arg5[%c0_216, %c0_217, %c17, %c0_218], %235 {strides = array<i32>} : memref<1x8x32x32xf32, #tpu.memory_space<vmem>>, vector<1x8x1x32xf32>,
    %236 = vector.extract_strided_slice %199 {offsets = [0, 306], sizes = [8, 32], strides = [1, 1]} : vector<8x544xf32> to vector<8x32xf32>
    %c0_219 = arith.constant 0 : index
    %c0_220 = arith.constant 0 : index
    %c19 = arith.constant 19 : index
    %c0_221 = arith.constant 0 : index
    %237 = vector.load %arg5[%c0_219, %c0_220, %c19, %c0_221] : memref<1x8x32x32xf32, #tpu.memory_space<vmem>>, vector<1x8x1x32xf32>
    %238 = vector.shape_cast %237 : vector<1x8x1x32xf32> to vector<8x32xf32>
    %239 = vector.shape_cast %236 : vector<8x32xf32> to vector<1x8x1x32xf32>
    tpu.vector_store %arg5[%c0_219, %c0_220, %c19, %c0_221], %239 {strides = array<i32>} : memref<1x8x32x32xf32, #tpu.memory_space<vmem>>, vector<1x8x1x32xf32>,
    %240 = vector.extract_strided_slice %199 {offsets = [0, 340], sizes = [8, 32], strides = [1, 1]} : vector<8x544xf32> to vector<8x32xf32>
    %c0_222 = arith.constant 0 : index
    %c0_223 = arith.constant 0 : index
    %c21 = arith.constant 21 : index
    %c0_224 = arith.constant 0 : index
    %241 = vector.load %arg5[%c0_222, %c0_223, %c21, %c0_224] : memref<1x8x32x32xf32, #tpu.memory_space<vmem>>, vector<1x8x1x32xf32>
    %242 = vector.shape_cast %241 : vector<1x8x1x32xf32> to vector<8x32xf32>
    %243 = vector.shape_cast %240 : vector<8x32xf32> to vector<1x8x1x32xf32>
    tpu.vector_store %arg5[%c0_222, %c0_223, %c21, %c0_224], %243 {strides = array<i32>} : memref<1x8x32x32xf32, #tpu.memory_space<vmem>>, vector<1x8x1x32xf32>,
    %244 = vector.extract_strided_slice %199 {offsets = [0, 374], sizes = [8, 32], strides = [1, 1]} : vector<8x544xf32> to vector<8x32xf32>
    %c0_225 = arith.constant 0 : index
    %c0_226 = arith.constant 0 : index
    %c23 = arith.constant 23 : index
    %c0_227 = arith.constant 0 : index
    %245 = vector.load %arg5[%c0_225, %c0_226, %c23, %c0_227] : memref<1x8x32x32xf32, #tpu.memory_space<vmem>>, vector<1x8x1x32xf32>
    %246 = vector.shape_cast %245 : vector<1x8x1x32xf32> to vector<8x32xf32>
    %247 = vector.shape_cast %244 : vector<8x32xf32> to vector<1x8x1x32xf32>
    tpu.vector_store %arg5[%c0_225, %c0_226, %c23, %c0_227], %247 {strides = array<i32>} : memref<1x8x32x32xf32, #tpu.memory_space<vmem>>, vector<1x8x1x32xf32>,
    %248 = vector.extract_strided_slice %199 {offsets = [0, 408], sizes = [8, 32], strides = [1, 1]} : vector<8x544xf32> to vector<8x32xf32>
    %c0_228 = arith.constant 0 : index
    %c0_229 = arith.constant 0 : index
    %c25 = arith.constant 25 : index
    %c0_230 = arith.constant 0 : index
    %249 = vector.load %arg5[%c0_228, %c0_229, %c25, %c0_230] : memref<1x8x32x32xf32, #tpu.memory_space<vmem>>, vector<1x8x1x32xf32>
    %250 = vector.shape_cast %249 : vector<1x8x1x32xf32> to vector<8x32xf32>
    %251 = vector.shape_cast %248 : vector<8x32xf32> to vector<1x8x1x32xf32>
    tpu.vector_store %arg5[%c0_228, %c0_229, %c25, %c0_230], %251 {strides = array<i32>} : memref<1x8x32x32xf32, #tpu.memory_space<vmem>>, vector<1x8x1x32xf32>,
    %252 = vector.extract_strided_slice %199 {offsets = [0, 442], sizes = [8, 32], strides = [1, 1]} : vector<8x544xf32> to vector<8x32xf32>
    %c0_231 = arith.constant 0 : index
    %c0_232 = arith.constant 0 : index
    %c27 = arith.constant 27 : index
    %c0_233 = arith.constant 0 : index
    %253 = vector.load %arg5[%c0_231, %c0_232, %c27, %c0_233] : memref<1x8x32x32xf32, #tpu.memory_space<vmem>>, vector<1x8x1x32xf32>
    %254 = vector.shape_cast %253 : vector<1x8x1x32xf32> to vector<8x32xf32>
    %255 = vector.shape_cast %252 : vector<8x32xf32> to vector<1x8x1x32xf32>
    tpu.vector_store %arg5[%c0_231, %c0_232, %c27, %c0_233], %255 {strides = array<i32>} : memref<1x8x32x32xf32, #tpu.memory_space<vmem>>, vector<1x8x1x32xf32>,
    %256 = vector.extract_strided_slice %199 {offsets = [0, 476], sizes = [8, 32], strides = [1, 1]} : vector<8x544xf32> to vector<8x32xf32>
    %c0_234 = arith.constant 0 : index
    %c0_235 = arith.constant 0 : index
    %c29 = arith.constant 29 : index
    %c0_236 = arith.constant 0 : index
    %257 = vector.load %arg5[%c0_234, %c0_235, %c29, %c0_236] : memref<1x8x32x32xf32, #tpu.memory_space<vmem>>, vector<1x8x1x32xf32>
    %258 = vector.shape_cast %257 : vector<1x8x1x32xf32> to vector<8x32xf32>
    %259 = vector.shape_cast %256 : vector<8x32xf32> to vector<1x8x1x32xf32>
    tpu.vector_store %arg5[%c0_234, %c0_235, %c29, %c0_236], %259 {strides = array<i32>} : memref<1x8x32x32xf32, #tpu.memory_space<vmem>>, vector<1x8x1x32xf32>,
    %260 = vector.extract_strided_slice %199 {offsets = [0, 510], sizes = [8, 32], strides = [1, 1]} : vector<8x544xf32> to vector<8x32xf32>
    %c0_237 = arith.constant 0 : index
    %c0_238 = arith.constant 0 : index
    %c31 = arith.constant 31 : index
    %c0_239 = arith.constant 0 : index
    %261 = vector.load %arg5[%c0_237, %c0_238, %c31, %c0_239] : memref<1x8x32x32xf32, #tpu.memory_space<vmem>>, vector<1x8x1x32xf32>
    %262 = vector.shape_cast %261 : vector<1x8x1x32xf32> to vector<8x32xf32>
    %263 = vector.shape_cast %260 : vector<8x32xf32> to vector<1x8x1x32xf32>
    tpu.vector_store %arg5[%c0_237, %c0_238, %c31, %c0_239], %263 {strides = array<i32>} : memref<1x8x32x32xf32, #tpu.memory_space<vmem>>, vector<1x8x1x32xf32>,
    return
  }
  func.func @transform_0(%arg0: i32) -> (i32, i32, i32) {
    %c0_i32 = arith.constant 0 : i32
    %c0_i32_0 = arith.constant 0 : i32
    %c0_i32_1 = arith.constant 0 : i32
    return %arg0, %c0_i32, %c0_i32_0 : i32, i32, i32
  }
  func.func @transform_1(%arg0: i32) -> (i32, i32) {
    %c0_i32 = arith.constant 0 : i32
    %c0_i32_0 = arith.constant 0 : i32
    %c0_i32_1 = arith.constant 0 : i32
    return %c0_i32, %c0_i32_0 : i32, i32
  }
  func.func @transform_2(%arg0: i32) -> (i32, i32, i32) {
    %c0_i32 = arith.constant 0 : i32
    %c0_i32_0 = arith.constant 0 : i32
    %c0_i32_1 = arith.constant 0 : i32
    %c0_i32_2 = arith.constant 0 : i32
    return %c0_i32, %c0_i32_0, %c0_i32_1 : i32, i32, i32
  }
  func.func @transform_3(%arg0: i32) -> (i32, i32) {
    %c0_i32 = arith.constant 0 : i32
    %c0_i32_0 = arith.constant 0 : i32
    %c0_i32_1 = arith.constant 0 : i32
    return %c0_i32, %c0_i32_0 : i32, i32
  }
  func.func @transform_4(%arg0: i32) -> (i32, i32, i32, i32) {
    %c0_i32 = arith.constant 0 : i32
    %c0_i32_0 = arith.constant 0 : i32
    %c0_i32_1 = arith.constant 0 : i32
    %c0_i32_2 = arith.constant 0 : i32
    return %arg0, %c0_i32, %c0_i32_0, %c0_i32_1 : i32, i32, i32, i32
  }
}

</mosaic_0001>

<llo_original>
// kernel: tpu_custom_call.1
$region0: #{tpu_custom_call.1}
  #allocation0 [shape = 'u32[]', space=smem, size = 0x4, offset = 0x4, fixed_abs, tag = 'smem constant byte address 0x4 - core index']
  #allocation1 [shape = 'u32[72,128]{1,0:T(1,128)}', space=vmem, size = 0x9000, scoped, tag = 'internal scratch']
  #allocation2 [shape = 'f32[4,646]{1,0:T(4,128)}', space=vmem, size = 0x3000, scoped, tag = 'scratch operand']
  %s0 = inlined_call_operand.vmem [shape: f32[2,4,256], index: 0, kind: input, shape index: {}]
  %s1 = inlined_call_operand.vmem [shape: f32[16,34], index: 1, kind: input, shape index: {}]
  %s2 = inlined_call_operand.vmem [shape: f32[12,8,4], index: 2, kind: input, shape index: {}]
  %s3 = inlined_call_operand.vmem [shape: f32[8,1], index: 3, kind: input, shape index: {}]
  %s4 = inlined_call_operand.hbm [shape: f32[2,8,32,32], index: 4, kind: output, shape index: {}]
  %s5 = sld [smem:[#allocation0]]
  $region49: #{tpu_custom_call.1} parent=0
    _
  %s7 = ssub.s32 1, %s5
  %s8 = scalar_select 0, %s7, %s5
  $region1: #{tpu_custom_call.1} parent=0
    #allocation3 [shape = 'u8[262144]{0}', space=vmem, size = 0x40000, scoped, tag = 'output window, operand 0']
    #allocation4 [shape = 's32[2]{0}', space=sflag, size = 0x8, scoped, tag = 'scoped memory for tpu_custom_call.1']
    %9 = vsyncpa [#allocation4], 0
    %s10 = scalar_lea.sflag [#allocation4], 1
    %11 = vsyncpa %s10, 0
    loop: start=0, step=1, limit=4
    $region2: #{tpu_custom_call.1} parent=1 // loop_pre_header
      _
    $region3: #{tpu_custom_call.1} parent=1 // loop_header
      %s13 = sphi 0, %s17
      %p14 = scmp.ge.s32.totalorder %s13, 4
      %s23 = sphi 0, %s25
      %s26 = sphi 0, %s23
      %s27 = sphi 0, %s26
      %s43 = sphi 0, %s27
      %s47 = sphi 0, %s47
      %s49 = sphi 0, %s47
      %s50 = sphi 0, %s49
      %s64 = sphi 0, %s50
      %s68 = sphi 0, %s68
      %s70 = sphi 0, %s68
      %s71 = sphi 0, %s70
      %s85 = sphi 0, %s71
      %s89 = sphi 0, %s89
      %s91 = sphi 0, %s89
      %s92 = sphi 0, %s91
      %s106 = sphi 0, %s92
      %s112 = sphi 0, %s114
      %s115 = sphi 0, %s112
      %s116 = sphi 0, %s115
      %s132 = sphi 0, %s116
    $region4: #{tpu_custom_call.1} parent=1 // loop_header_branch
      %16 = sbr.rel (%p14) target = $region8
    $region5: #{tpu_custom_call.1} parent=1 // loop_body
      %s18 = ssub.s32 %s13, 1
      %s19 = ssub.s32 %s13, 2
      %s20 = sadd.s32 %s13, 1
      %s21 = ssub.s32 %s13, %s20
      %p22 = scmp.eq.s32.totalorder %s21, 0
      %s24 = sadd.s32 %s23, 1
      %s25 = scalar_select %p22, %s23, %s24
      %p28 = pneg %p22
      %p29 = scmp.eq.s32.totalorder %s13, 1
      %p30 = por %p28, %p29
      %p31 = scmp.ne.s32.totalorder %s23, %s26
      %p32 = scmp.eq.s32.totalorder %s13, 0
      %p33 = por %p31, %p32
      %p34 = scmp.ne.s32.totalorder %s23, %s26
      %p35 = scmp.eq.s32.totalorder %s18, 1
      %p36 = por %p34, %p35
      %p37 = scmp.ne.s32.totalorder %s26, %s27
      %p38 = scmp.eq.s32.totalorder %s18, 0
      %p39 = por %p37, %p38
      %p40 = scmp.ne.s32.totalorder %s26, %s27
      %p41 = scmp.eq.s32.totalorder %s19, 1
      %p42 = por %p40, %p41
      %p44 = scmp.ne.s32.totalorder %s27, %s43
      %p45 = scmp.eq.s32.totalorder %s19, 0
      %p46 = por %p44, %p45
      %s48 = sadd.s32 %s47, 1
      %p51 = scmp.eq.s32.totalorder %s13, 1
      %p52 = scmp.ne.s32.totalorder %s47, %s49
      %p53 = scmp.eq.s32.totalorder %s13, 0
      %p54 = por %p52, %p53
      %p55 = scmp.ne.s32.totalorder %s47, %s49
      %p56 = scmp.eq.s32.totalorder %s18, 1
      %p57 = por %p55, %p56
      %p58 = scmp.ne.s32.totalorder %s49, %s50
      %p59 = scmp.eq.s32.totalorder %s18, 0
      %p60 = por %p58, %p59
      %p61 = scmp.ne.s32.totalorder %s49, %s50
      %p62 = scmp.eq.s32.totalorder %s19, 1
      %p63 = por %p61, %p62
      %p65 = scmp.ne.s32.totalorder %s50, %s64
      %p66 = scmp.eq.s32.totalorder %s19, 0
      %p67 = por %p65, %p66
      %s69 = sadd.s32 %s68, 1
      %p72 = scmp.eq.s32.totalorder %s13, 1
      %p73 = scmp.ne.s32.totalorder %s68, %s70
      %p74 = scmp.eq.s32.totalorder %s13, 0
      %p75 = por %p73, %p74
      %p76 = scmp.ne.s32.totalorder %s68, %s70
      %p77 = scmp.eq.s32.totalorder %s18, 1
      %p78 = por %p76, %p77
      %p79 = scmp.ne.s32.totalorder %s70, %s71
      %p80 = scmp.eq.s32.totalorder %s18, 0
      %p81 = por %p79, %p80
      %p82 = scmp.ne.s32.totalorder %s70, %s71
      %p83 = scmp.eq.s32.totalorder %s19, 1
      %p84 = por %p82, %p83
      %p86 = scmp.ne.s32.totalorder %s71, %s85
      %p87 = scmp.eq.s32.totalorder %s19, 0
      %p88 = por %p86, %p87
      %s90 = sadd.s32 %s89, 1
      %p93 = scmp.eq.s32.totalorder %s13, 1
      %p94 = scmp.ne.s32.totalorder %s89, %s91
      %p95 = scmp.eq.s32.totalorder %s13, 0
      %p96 = por %p94, %p95
      %p97 = scmp.ne.s32.totalorder %s89, %s91
      %p98 = scmp.eq.s32.totalorder %s18, 1
      %p99 = por %p97, %p98
      %p100 = scmp.ne.s32.totalorder %s91, %s92
      %p101 = scmp.eq.s32.totalorder %s18, 0
      %p102 = por %p100, %p101
      %p103 = scmp.ne.s32.totalorder %s91, %s92
      %p104 = scmp.eq.s32.totalorder %s19, 1
      %p105 = por %p103, %p104
      %p107 = scmp.ne.s32.totalorder %s92, %s106
      %p108 = scmp.eq.s32.totalorder %s19, 0
      %p109 = por %p107, %p108
      %s110 = ssub.s32 %s13, %s20
      %p111 = scmp.eq.s32.totalorder %s110, 0
      %s113 = sadd.s32 %s112, 1
      %s114 = scalar_select %p111, %s112, %s113
      %p117 = pneg %p111
      %p118 = scmp.eq.s32.totalorder %s13, 1
      %p119 = por %p117, %p118
      %p120 = scmp.ne.s32.totalorder %s112, %s115
      %p121 = scmp.eq.s32.totalorder %s13, 0
      %p122 = por %p120, %p121
      %p123 = scmp.ne.s32.totalorder %s112, %s115
      %p124 = scmp.eq.s32.totalorder %s18, 1
      %p125 = por %p123, %p124
      %p126 = scmp.ne.s32.totalorder %s115, %s116
      %p127 = scmp.eq.s32.totalorder %s18, 0
      %p128 = por %p126, %p127
      %p129 = scmp.ne.s32.totalorder %s115, %s116
      %p130 = scmp.eq.s32.totalorder %s19, 1
      %p131 = por %p129, %p130
      %p133 = scmp.ne.s32.totalorder %s116, %s132
      %p134 = scmp.eq.s32.totalorder %s19, 0
      %p135 = por %p133, %p134
      %p136 = scmp.le.s32.totalorder 1, %s13
      %p137 = scmp.lt.s32.totalorder %s13, 3
      %p138 = pnand %p136, %p137
      %p139 = pneg %p138
      // Predicated region
      $region9: #{tpu_custom_call.1} parent=5 // pred_check
        _
      $region10: #{tpu_custom_call.1} parent=5 // pred_check_branch
        %141 = sbr.rel (%p138) target = $region12
      $region11: #{tpu_custom_call.1} parent=5 // pred_region
        %s142 = ssub.s32 %s13, 1
        // Predicated region
        $region13: #{tpu_custom_call.1} parent=11 // pred_check
          %p143 = pneg %p60
        $region14: #{tpu_custom_call.1} parent=11 // pred_check_branch
          %145 = sbr.rel (%p143) target = $region16
        $region15: #{tpu_custom_call.1} parent=11 // pred_region
          _
        $region16: #{tpu_custom_call.1} parent=11 // pred_fallthru
          _
        // Predicated region
        $region17: #{tpu_custom_call.1} parent=11 // pred_check
          %p146 = pneg %p81
        $region18: #{tpu_custom_call.1} parent=11 // pred_check_branch
          %148 = sbr.rel (%p146) target = $region20
        $region19: #{tpu_custom_call.1} parent=11 // pred_region
          _
        $region20: #{tpu_custom_call.1} parent=11 // pred_fallthru
          _
        // Predicated region
        $region21: #{tpu_custom_call.1} parent=11 // pred_check
          %p149 = pneg %p102
        $region22: #{tpu_custom_call.1} parent=11 // pred_check_branch
          %151 = sbr.rel (%p149) target = $region24
        $region23: #{tpu_custom_call.1} parent=11 // pred_region
          _
        $region24: #{tpu_custom_call.1} parent=11 // pred_fallthru
          _
      $region12: #{tpu_custom_call.1} parent=5 // pred_fallthru
        _
      %p152 = scmp.lt.s32.totalorder %s13, 2
      // Predicated region
      $region25: #{tpu_custom_call.1} parent=5 // pred_check
        %p153 = pneg %p152
      $region26: #{tpu_custom_call.1} parent=5 // pred_check_branch
        %155 = sbr.rel (%p153) target = $region28
      $region27: #{tpu_custom_call.1} parent=5 // pred_region
        // Predicated region
        $region29: #{tpu_custom_call.1} parent=27 // pred_check
          %p156 = pneg %p33
        $region30: #{tpu_custom_call.1} parent=27 // pred_check_branch
          %158 = sbr.rel (%p156) target = $region32
        $region31: #{tpu_custom_call.1} parent=27 // pred_region
          %p159 = scmp.lt.s32.totalorder %s13, 1
          %s160 = scalar_select %p159, %s13, 1
          %s161 = smul.addr %s160, 2
          %s162 = smul.addr %s161, 4
          %s163 = scalar_lea.vmem %s0, %s162
        $region32: #{tpu_custom_call.1} parent=27 // pred_fallthru
          _
      $region28: #{tpu_custom_call.1} parent=5 // pred_fallthru
        _
      %p164 = scmp.le.s32.totalorder 1, %s13
      %p165 = scmp.lt.s32.totalorder %s13, 3
      %p166 = pnand %p164, %p165
      %p167 = pneg %p166
      // Predicated region
      $region33: #{tpu_custom_call.1} parent=5 // pred_check
        _
      $region34: #{tpu_custom_call.1} parent=5 // pred_check_branch
        %169 = sbr.rel (%p166) target = $region36
      $region35: #{tpu_custom_call.1} parent=5 // pred_region
        %s170 = ssub.s32 %s13, 1
        %p171 = scmp.lt.s32.totalorder %s18, 1
        %s172 = scalar_select %p171, %s18, 1
        %s173 = smul.addr %s172, 2
        %s174 = smul.addr %s173, 4
        %s175 = scalar_lea.vmem %s0, %s174
        %p176 = pneg %p39
        %p177 = pneg %p36
        %p178 = pneg %p60
        %p179 = pneg %p57
        %p180 = pneg %p81
        %p181 = pneg %p78
        %p182 = pneg %p102
        %p183 = pneg %p99
        %p184 = pneg %p128
        %p185 = pneg %p125
        %s186 = sand.u32 %s115, 1
        %s187 = scalar_lea.sflag [#allocation4], %s186
        %s188 = sand.u32 %s115, 1
        %s189 = smul.addr %s188, 256
        %s190 = scalar_lea.vmem [#allocation3], %s189
        %p191 = scmp.lt.s32.totalorder %s18, 1
        %s192 = scalar_select %p191, %s18, 1
        %s193 = smul.addr %s192, 2
        %s194 = smul.addr %s193, 4
        %s195 = scalar_lea.vmem %s0, %s194
        %vm196 = vcmask 273408
        %197 = vst.msk [vmem:[#allocation2] sm:$0xf] %vm196, 0.0
        %vm198 = vcmask 1043984
        %vm199 = vcmask 48132
        %vm200 = vmor %vm199, %vm198
        %201 = vst.msk [vmem:[#allocation2 + $0x10] sm:$0xff] %vm200, 0.0
        %v202 = vld [vmem:[%s1] sm:$0xff]
        %v203 = vld [vmem:[%s1 + $0x8] sm:$0xff]
        %v204 = vld [vmem:[%s195] sm:$0xf]
        %vm205 = vcmask 130048
        %v207 = vsel %vm205, %v204, 0
        %209 = vmatpush.msra.mxu0 0.0
        %210 = vmatpush.msra.mxu0 0.0
        %211 = vmatpush.msra.mxu0 0.0
        %212 = vmatpush.msra.mxu0 0.0
        %213 = vmatpush.msra.mxu0 0.0
        %214 = vmatpush.msra.mxu0 0.0
        %215 = vmatpush.msra.mxu0 0.0
        %216 = vmatpush.msra.mxu0 0.0
        %217 = vmatpush.msra.mxu0 0.0
        %218 = vmatpush.msra.mxu0 0.0
        %219 = vmatpush.msra.mxu0 0.0
        %220 = vmatpush.msra.mxu0 0.0
        %221 = vmatpush.msra.mxu0 0.0
        %222 = vmatpush.msra.mxu0 0.0
        %223 = vmatpush.msra.mxu0 %v203
        %224 = vmatpush.msra.mxu0 %v202
        %225 = vmatmul.f32.gmra.mxu0 %v207
        %v226 = vpop.f32.mrf.mxu0
        %v227 = vadd.f32 0.0, %v226
        %228 = vdwg.mxu0
        %230 = vrot.lane.b32.xlu0 %v227, 34
        %v231 = vpop.permute.xlu0 %230
        %vm233 = vcmask 552208
        %234 = vst.msk [vmem:[#allocation2] sm:$0xf] %vm233, %v231
        %v235 = vld [vmem:[%s195] sm:$0xf]
        %237 = vst [vmem:[#allocation1] ss:$2 sm:$0xff] %v235
        %v238 = vld.sshfl [vmem:[#allocation1] sm:$0xff pattern:$0x75316420]
        %239 = vrot.lane.b32.xlu0 %v238, 112
        %v240 = vpop.permute.xlu0 %239
        %v241 = vsel %vm205, %v240, 0
        %243 = vmatpush.msra.mxu0 0.0
        %244 = vmatpush.msra.mxu0 0.0
        %245 = vmatpush.msra.mxu0 0.0
        %246 = vmatpush.msra.mxu0 0.0
        %247 = vmatpush.msra.mxu0 0.0
        %248 = vmatpush.msra.mxu0 0.0
        %249 = vmatpush.msra.mxu0 0.0
        %250 = vmatpush.msra.mxu0 0.0
        %251 = vmatpush.msra.mxu0 0.0
        %252 = vmatpush.msra.mxu0 0.0
        %253 = vmatpush.msra.mxu0 0.0
        %254 = vmatpush.msra.mxu0 0.0
        %255 = vmatpush.msra.mxu0 0.0
        %256 = vmatpush.msra.mxu0 0.0
        %257 = vmatpush.msra.mxu0 %v203
        %258 = vmatpush.msra.mxu0 %v202
        %259 = vmatmul.f32.gmra.mxu0 %v241
        %v260 = vpop.f32.mrf.mxu0
        %v261 = vadd.f32 0.0, %v260
        %262 = vdwg.mxu0
        %264 = vrot.lane.b32.xlu0 %v261, 68
        %v265 = vpop.permute.xlu0 %264
        %vm267 = vcmask 831008
        %268 = vst.msk [vmem:[#allocation2] sm:$0xf] %vm267, %v265
        %v269 = vld [vmem:[%s195] sm:$0xf]
        %271 = vst [vmem:[#allocation1] ss:$2 sm:$0xff] %v269
        %v272 = vld.sshfl [vmem:[#allocation1] sm:$0xff pattern:$0x75316420]
        %273 = vrot.lane.b32.xlu0 %v272, 96
        %v274 = vpop.permute.xlu0 %273
        %v275 = vsel %vm205, %v274, 0
        %277 = vmatpush.msra.mxu0 0.0
        %278 = vmatpush.msra.mxu0 0.0
        %279 = vmatpush.msra.mxu0 0.0
        %280 = vmatpush.msra.mxu0 0.0
        %281 = vmatpush.msra.mxu0 0.0
        %282 = vmatpush.msra.mxu0 0.0
        %283 = vmatpush.msra.mxu0 0.0
        %284 = vmatpush.msra.mxu0 0.0
        %285 = vmatpush.msra.mxu0 0.0
        %286 = vmatpush.msra.mxu0 0.0
        %287 = vmatpush.msra.mxu0 0.0
        %288 = vmatpush.msra.mxu0 0.0
        %289 = vmatpush.msra.mxu0 0.0
        %290 = vmatpush.msra.mxu0 0.0
        %291 = vmatpush.msra.mxu0 %v203
        %292 = vmatpush.msra.mxu0 %v202
        %293 = vmatmul.f32.gmra.mxu0 %v275
        %v294 = vpop.f32.mrf.mxu0
        %v295 = vadd.f32 0.0, %v294
        %296 = vdwg.mxu0
        %298 = vrot.lane.b32.xlu0 %v295, 102
        %v299 = vpop.permute.xlu0 %298
        %v300 = vrot.slane %v299, 4
        %vm301 = vcmask 834560
        %v302 = vsel %vm301, %v300, %v299
        %vm304 = vcmask 1044272
        %vm305 = vcmask 64516
        %vm306 = vmor %vm305, %vm304
        %307 = vst.msk [vmem:[#allocation2] sm:$0xff] %vm306, %v302
        %v308 = vld [vmem:[%s195] sm:$0xf]
        %310 = vst [vmem:[#allocation1] ss:$2 sm:$0xff] %v308
        %v311 = vld.sshfl [vmem:[#allocation1] sm:$0xff pattern:$0x75316420]
        %312 = vrot.lane.b32.xlu0 %v311, 80
        %v313 = vpop.permute.xlu0 %312
        %v314 = vsel %vm205, %v313, 0
        %316 = vmatpush.msra.mxu0 0.0
        %317 = vmatpush.msra.mxu0 0.0
        %318 = vmatpush.msra.mxu0 0.0
        %319 = vmatpush.msra.mxu0 0.0
        %320 = vmatpush.msra.mxu0 0.0
        %321 = vmatpush.msra.mxu0 0.0
        %322 = vmatpush.msra.mxu0 0.0
        %323 = vmatpush.msra.mxu0 0.0
        %324 = vmatpush.msra.mxu0 0.0
        %325 = vmatpush.msra.mxu0 0.0
        %326 = vmatpush.msra.mxu0 0.0
        %327 = vmatpush.msra.mxu0 0.0
        %328 = vmatpush.msra.mxu0 0.0
        %329 = vmatpush.msra.mxu0 0.0
        %330 = vmatpush.msra.mxu0 %v203
        %331 = vmatpush.msra.mxu0 %v202
        %332 = vmatmul.f32.gmra.mxu0 %v314
        %v333 = vpop.f32.mrf.mxu0
        %v334 = vadd.f32 0.0, %v333
        %335 = vdwg.mxu0
        %337 = vrot.lane.b32.xlu0 %v334, 8
        %v338 = vpop.permute.xlu0 %337
        %vm340 = vcmask 339008
        %341 = vst.msk [vmem:[#allocation2 + $0x4] sm:$0xf] %vm340, %v338
        %v342 = vld [vmem:[%s195] sm:$0xf]
        %344 = vst [vmem:[#allocation1] ss:$2 sm:$0xff] %v342
        %v345 = vld.sshfl [vmem:[#allocation1] sm:$0xff pattern:$0x75316420]
        %346 = vrot.lane.b32.xlu0 %v345, 64
        %v347 = vpop.permute.xlu0 %346
        %v348 = vsel %vm205, %v347, 0
        %350 = vmatpush.msra.mxu0 0.0
        %351 = vmatpush.msra.mxu0 0.0
        %352 = vmatpush.msra.mxu0 0.0
        %353 = vmatpush.msra.mxu0 0.0
        %354 = vmatpush.msra.mxu0 0.0
        %355 = vmatpush.msra.mxu0 0.0
        %356 = vmatpush.msra.mxu0 0.0
        %357 = vmatpush.msra.mxu0 0.0
        %358 = vmatpush.msra.mxu0 0.0
        %359 = vmatpush.msra.mxu0 0.0
        %360 = vmatpush.msra.mxu0 0.0
        %361 = vmatpush.msra.mxu0 0.0
        %362 = vmatpush.msra.mxu0 0.0
        %363 = vmatpush.msra.mxu0 0.0
        %364 = vmatpush.msra.mxu0 %v203
        %365 = vmatpush.msra.mxu0 %v202
        %366 = vmatmul.f32.gmra.mxu0 %v348
        %v367 = vpop.f32.mrf.mxu0
        %v368 = vadd.f32 0.0, %v367
        %369 = vdwg.mxu0
        %371 = vrot.lane.b32.xlu0 %v368, 42
        %v372 = vpop.permute.xlu0 %371
        %vm374 = vcmask 617808
        %375 = vst.msk [vmem:[#allocation2 + $0x4] sm:$0xf] %vm374, %v372
        %v376 = vld [vmem:[%s195] sm:$0xf]
        %378 = vst [vmem:[#allocation1] ss:$2 sm:$0xff] %v376
        %v379 = vld.sshfl [vmem:[#allocation1] sm:$0xff pattern:$0x75316420]
        %380 = vrot.lane.b32.xlu0 %v379, 48
        %v381 = vpop.permute.xlu0 %380
        %v382 = vsel %vm205, %v381, 0
        %384 = vmatpush.msra.mxu0 0.0
        %385 = vmatpush.msra.mxu0 0.0
        %386 = vmatpush.msra.mxu0 0.0
        %387 = vmatpush.msra.mxu0 0.0
        %388 = vmatpush.msra.mxu0 0.0
        %389 = vmatpush.msra.mxu0 0.0
        %390 = vmatpush.msra.mxu0 0.0
        %391 = vmatpush.msra.mxu0 0.0
        %392 = vmatpush.msra.mxu0 0.0
        %393 = vmatpush.msra.mxu0 0.0
        %394 = vmatpush.msra.mxu0 0.0
        %395 = vmatpush.msra.mxu0 0.0
        %396 = vmatpush.msra.mxu0 0.0
        %397 = vmatpush.msra.mxu0 0.0
        %398 = vmatpush.msra.mxu0 %v203
        %399 = vmatpush.msra.mxu0 %v202
        %400 = vmatmul.f32.gmra.mxu0 %v382
        %v401 = vpop.f32.mrf.mxu0
        %v402 = vadd.f32 0.0, %v401
        %403 = vdwg.mxu0
        %405 = vrot.lane.b32.xlu0 %v402, 76
        %v406 = vpop.permute.xlu0 %405
        %vm408 = vcmask 896608
        %409 = vst.msk [vmem:[#allocation2 + $0x4] sm:$0xf] %vm408, %v406
        %v410 = vld [vmem:[%s195] sm:$0xf]
        %412 = vst [vmem:[#allocation1] ss:$2 sm:$0xff] %v410
        %v413 = vld.sshfl [vmem:[#allocation1] sm:$0xff pattern:$0x75316420]
        %414 = vrot.lane.b32.xlu0 %v413, 32
        %v415 = vpop.permute.xlu0 %414
        %v416 = vsel %vm205, %v415, 0
        %418 = vmatpush.msra.mxu0 0.0
        %419 = vmatpush.msra.mxu0 0.0
        %420 = vmatpush.msra.mxu0 0.0
        %421 = vmatpush.msra.mxu0 0.0
        %422 = vmatpush.msra.mxu0 0.0
        %423 = vmatpush.msra.mxu0 0.0
        %424 = vmatpush.msra.mxu0 0.0
        %425 = vmatpush.msra.mxu0 0.0
        %426 = vmatpush.msra.mxu0 0.0
        %427 = vmatpush.msra.mxu0 0.0
        %428 = vmatpush.msra.mxu0 0.0
        %429 = vmatpush.msra.mxu0 0.0
        %430 = vmatpush.msra.mxu0 0.0
        %431 = vmatpush.msra.mxu0 0.0
        %432 = vmatpush.msra.mxu0 %v203
        %433 = vmatpush.msra.mxu0 %v202
        %434 = vmatmul.f32.gmra.mxu0 %v416
        %v435 = vpop.f32.mrf.mxu0
        %v436 = vadd.f32 0.0, %v435
        %437 = vdwg.mxu0
        %439 = vrot.lane.b32.xlu0 %v436, 110
        %v440 = vpop.permute.xlu0 %439
        %v441 = vrot.slane %v440, 4
        %vm442 = vcmask 900096
        %v443 = vsel %vm442, %v441, %v440
        %vm445 = vcmask 1044336
        %vm446 = vcmask 130052
        %vm447 = vmor %vm446, %vm445
        %448 = vst.msk [vmem:[#allocation2 + $0x4] sm:$0xff] %vm447, %v443
        %v449 = vld [vmem:[%s195] sm:$0xf]
        %451 = vst [vmem:[#allocation1] ss:$2 sm:$0xff] %v449
        %v452 = vld.sshfl [vmem:[#allocation1] sm:$0xff pattern:$0x75316420]
        %453 = vrot.lane.b32.xlu0 %v452, 16
        %v454 = vpop.permute.xlu0 %453
        %v455 = vsel %vm205, %v454, 0
        %457 = vmatpush.msra.mxu0 0.0
        %458 = vmatpush.msra.mxu0 0.0
        %459 = vmatpush.msra.mxu0 0.0
        %460 = vmatpush.msra.mxu0 0.0
        %461 = vmatpush.msra.mxu0 0.0
        %462 = vmatpush.msra.mxu0 0.0
        %463 = vmatpush.msra.mxu0 0.0
        %464 = vmatpush.msra.mxu0 0.0
        %465 = vmatpush.msra.mxu0 0.0
        %466 = vmatpush.msra.mxu0 0.0
        %467 = vmatpush.msra.mxu0 0.0
        %468 = vmatpush.msra.mxu0 0.0
        %469 = vmatpush.msra.mxu0 0.0
        %470 = vmatpush.msra.mxu0 0.0
        %471 = vmatpush.msra.mxu0 %v203
        %472 = vmatpush.msra.mxu0 %v202
        %473 = vmatmul.f32.gmra.mxu0 %v455
        %v474 = vpop.f32.mrf.mxu0
        %v475 = vadd.f32 0.0, %v474
        %476 = vdwg.mxu0
        %478 = vrot.lane.b32.xlu0 %v475, 16
        %v479 = vpop.permute.xlu0 %478
        %vm481 = vcmask 404608
        %482 = vst.msk [vmem:[#allocation2 + $0x8] sm:$0xf] %vm481, %v479
        %v483 = vld [vmem:[%s195 + $0x4] sm:$0xf]
        %v485 = vsel %vm205, %v483, 0
        %487 = vmatpush.msra.mxu0 0.0
        %488 = vmatpush.msra.mxu0 0.0
        %489 = vmatpush.msra.mxu0 0.0
        %490 = vmatpush.msra.mxu0 0.0
        %491 = vmatpush.msra.mxu0 0.0
        %492 = vmatpush.msra.mxu0 0.0
        %493 = vmatpush.msra.mxu0 0.0
        %494 = vmatpush.msra.mxu0 0.0
        %495 = vmatpush.msra.mxu0 0.0
        %496 = vmatpush.msra.mxu0 0.0
        %497 = vmatpush.msra.mxu0 0.0
        %498 = vmatpush.msra.mxu0 0.0
        %499 = vmatpush.msra.mxu0 0.0
        %500 = vmatpush.msra.mxu0 0.0
        %501 = vmatpush.msra.mxu0 %v203
        %502 = vmatpush.msra.mxu0 %v202
        %503 = vmatmul.f32.gmra.mxu0 %v485
        %v504 = vpop.f32.mrf.mxu0
        %v505 = vadd.f32 0.0, %v504
        %506 = vdwg.mxu0
        %508 = vrot.lane.b32.xlu0 %v505, 50
        %v509 = vpop.permute.xlu0 %508
        %vm511 = vcmask 683408
        %512 = vst.msk [vmem:[#allocation2 + $0x8] sm:$0xf] %vm511, %v509
        %v513 = vld [vmem:[%s195 + $0x4] sm:$0xf]
        %515 = vst [vmem:[#allocation1] ss:$2 sm:$0xff] %v513
        %v516 = vld.sshfl [vmem:[#allocation1] sm:$0xff pattern:$0x75316420]
        %517 = vrot.lane.b32.xlu0 %v516, 112
        %v518 = vpop.permute.xlu0 %517
        %v519 = vsel %vm205, %v518, 0
        %521 = vmatpush.msra.mxu0 0.0
        %522 = vmatpush.msra.mxu0 0.0
        %523 = vmatpush.msra.mxu0 0.0
        %524 = vmatpush.msra.mxu0 0.0
        %525 = vmatpush.msra.mxu0 0.0
        %526 = vmatpush.msra.mxu0 0.0
        %527 = vmatpush.msra.mxu0 0.0
        %528 = vmatpush.msra.mxu0 0.0
        %529 = vmatpush.msra.mxu0 0.0
        %530 = vmatpush.msra.mxu0 0.0
        %531 = vmatpush.msra.mxu0 0.0
        %532 = vmatpush.msra.mxu0 0.0
        %533 = vmatpush.msra.mxu0 0.0
        %534 = vmatpush.msra.mxu0 0.0
        %535 = vmatpush.msra.mxu0 %v203
        %536 = vmatpush.msra.mxu0 %v202
        %537 = vmatmul.f32.gmra.mxu0 %v519
        %v538 = vpop.f32.mrf.mxu0
        %v539 = vadd.f32 0.0, %v538
        %540 = vdwg.mxu0
        %542 = vrot.lane.b32.xlu0 %v539, 84
        %v543 = vpop.permute.xlu0 %542
        %vm545 = vcmask 962208
        %546 = vst.msk [vmem:[#allocation2 + $0x8] sm:$0xf] %vm545, %v543
        %v547 = vld [vmem:[%s195 + $0x4] sm:$0xf]
        %549 = vst [vmem:[#allocation1] ss:$2 sm:$0xff] %v547
        %v550 = vld.sshfl [vmem:[#allocation1] sm:$0xff pattern:$0x75316420]
        %551 = vrot.lane.b32.xlu0 %v550, 96
        %v552 = vpop.permute.xlu0 %551
        %v553 = vsel %vm205, %v552, 0
        %555 = vmatpush.msra.mxu0 0.0
        %556 = vmatpush.msra.mxu0 0.0
        %557 = vmatpush.msra.mxu0 0.0
        %558 = vmatpush.msra.mxu0 0.0
        %559 = vmatpush.msra.mxu0 0.0
        %560 = vmatpush.msra.mxu0 0.0
        %561 = vmatpush.msra.mxu0 0.0
        %562 = vmatpush.msra.mxu0 0.0
        %563 = vmatpush.msra.mxu0 0.0
        %564 = vmatpush.msra.mxu0 0.0
        %565 = vmatpush.msra.mxu0 0.0
        %566 = vmatpush.msra.mxu0 0.0
        %567 = vmatpush.msra.mxu0 0.0
        %568 = vmatpush.msra.mxu0 0.0
        %569 = vmatpush.msra.mxu0 %v203
        %570 = vmatpush.msra.mxu0 %v202
        %571 = vmatmul.f32.gmra.mxu0 %v553
        %v572 = vpop.f32.mrf.mxu0
        %v573 = vadd.f32 0.0, %v572
        %574 = vdwg.mxu0
        %576 = vrot.lane.b32.xlu0 %v573, 118
        %v577 = vpop.permute.xlu0 %576
        %v578 = vrot.slane %v577, 4
        %vm579 = vcmask 965632
        %v580 = vsel %vm579, %v578, %v577
        %vm582 = vcmask 1044400
        %vm583 = vcmask 195588
        %vm584 = vmor %vm583, %vm582
        %585 = vst.msk [vmem:[#allocation2 + $0x8] sm:$0xff] %vm584, %v580
        %v586 = vld [vmem:[%s195 + $0x4] sm:$0xf]
        %588 = vst [vmem:[#allocation1] ss:$2 sm:$0xff] %v586
        %v589 = vld.sshfl [vmem:[#allocation1] sm:$0xff pattern:$0x75316420]
        %590 = vrot.lane.b32.xlu0 %v589, 80
        %v591 = vpop.permute.xlu0 %590
        %v592 = vsel %vm205, %v591, 0
        %594 = vmatpush.msra.mxu0 0.0
        %595 = vmatpush.msra.mxu0 0.0
        %596 = vmatpush.msra.mxu0 0.0
        %597 = vmatpush.msra.mxu0 0.0
        %598 = vmatpush.msra.mxu0 0.0
        %599 = vmatpush.msra.mxu0 0.0
        %600 = vmatpush.msra.mxu0 0.0
        %601 = vmatpush.msra.mxu0 0.0
        %602 = vmatpush.msra.mxu0 0.0
        %603 = vmatpush.msra.mxu0 0.0
        %604 = vmatpush.msra.mxu0 0.0
        %605 = vmatpush.msra.mxu0 0.0
        %606 = vmatpush.msra.mxu0 0.0
        %607 = vmatpush.msra.mxu0 0.0
        %608 = vmatpush.msra.mxu0 %v203
        %609 = vmatpush.msra.mxu0 %v202
        %610 = vmatmul.f32.gmra.mxu0 %v592
        %v611 = vpop.f32.mrf.mxu0
        %v612 = vadd.f32 0.0, %v611
        %613 = vdwg.mxu0
        %615 = vrot.lane.b32.xlu0 %v612, 24
        %v616 = vpop.permute.xlu0 %615
        %vm618 = vcmask 470208
        %619 = vst.msk [vmem:[#allocation2 + $0xc] sm:$0xf] %vm618, %v616
        %v620 = vld [vmem:[%s195 + $0x4] sm:$0xf]
        %622 = vst [vmem:[#allocation1] ss:$2 sm:$0xff] %v620
        %v623 = vld.sshfl [vmem:[#allocation1] sm:$0xff pattern:$0x75316420]
        %624 = vrot.lane.b32.xlu0 %v623, 64
        %v625 = vpop.permute.xlu0 %624
        %v626 = vsel %vm205, %v625, 0
        %628 = vmatpush.msra.mxu0 0.0
        %629 = vmatpush.msra.mxu0 0.0
        %630 = vmatpush.msra.mxu0 0.0
        %631 = vmatpush.msra.mxu0 0.0
        %632 = vmatpush.msra.mxu0 0.0
        %633 = vmatpush.msra.mxu0 0.0
        %634 = vmatpush.msra.mxu0 0.0
        %635 = vmatpush.msra.mxu0 0.0
        %636 = vmatpush.msra.mxu0 0.0
        %637 = vmatpush.msra.mxu0 0.0
        %638 = vmatpush.msra.mxu0 0.0
        %639 = vmatpush.msra.mxu0 0.0
        %640 = vmatpush.msra.mxu0 0.0
        %641 = vmatpush.msra.mxu0 0.0
        %642 = vmatpush.msra.mxu0 %v203
        %643 = vmatpush.msra.mxu0 %v202
        %644 = vmatmul.f32.gmra.mxu0 %v626
        %v645 = vpop.f32.mrf.mxu0
        %v646 = vadd.f32 0.0, %v645
        %647 = vdwg.mxu0
        %649 = vrot.lane.b32.xlu0 %v646, 58
        %v650 = vpop.permute.xlu0 %649
        %vm652 = vcmask 749008
        %653 = vst.msk [vmem:[#allocation2 + $0xc] sm:$0xf] %vm652, %v650
        %v654 = vld [vmem:[%s195 + $0x4] sm:$0xf]
        %656 = vst [vmem:[#allocation1] ss:$2 sm:$0xff] %v654
        %v657 = vld.sshfl [vmem:[#allocation1] sm:$0xff pattern:$0x75316420]
        %658 = vrot.lane.b32.xlu0 %v657, 48
        %v659 = vpop.permute.xlu0 %658
        %v660 = vsel %vm205, %v659, 0
        %662 = vmatpush.msra.mxu0 0.0
        %663 = vmatpush.msra.mxu0 0.0
        %664 = vmatpush.msra.mxu0 0.0
        %665 = vmatpush.msra.mxu0 0.0
        %666 = vmatpush.msra.mxu0 0.0
        %667 = vmatpush.msra.mxu0 0.0
        %668 = vmatpush.msra.mxu0 0.0
        %669 = vmatpush.msra.mxu0 0.0
        %670 = vmatpush.msra.mxu0 0.0
        %671 = vmatpush.msra.mxu0 0.0
        %672 = vmatpush.msra.mxu0 0.0
        %673 = vmatpush.msra.mxu0 0.0
        %674 = vmatpush.msra.mxu0 0.0
        %675 = vmatpush.msra.mxu0 0.0
        %676 = vmatpush.msra.mxu0 %v203
        %677 = vmatpush.msra.mxu0 %v202
        %678 = vmatmul.f32.gmra.mxu0 %v660
        %v679 = vpop.f32.mrf.mxu0
        %v680 = vadd.f32 0.0, %v679
        %681 = vdwg.mxu0
        %683 = vrot.lane.b32.xlu0 %v680, 92
        %v684 = vpop.permute.xlu0 %683
        %vm686 = vcmask 1027808
        %687 = vst.msk [vmem:[#allocation2 + $0xc] sm:$0xf] %vm686, %v684
        %v688 = vld [vmem:[%s195 + $0x4] sm:$0xf]
        %690 = vst [vmem:[#allocation1] ss:$2 sm:$0xff] %v688
        %v691 = vld.sshfl [vmem:[#allocation1] sm:$0xff pattern:$0x75316420]
        %692 = vrot.lane.b32.xlu0 %v691, 32
        %v693 = vpop.permute.xlu0 %692
        %v694 = vsel %vm205, %v693, 0
        %696 = vmatpush.msra.mxu0 0.0
        %697 = vmatpush.msra.mxu0 0.0
        %698 = vmatpush.msra.mxu0 0.0
        %699 = vmatpush.msra.mxu0 0.0
        %700 = vmatpush.msra.mxu0 0.0
        %701 = vmatpush.msra.mxu0 0.0
        %702 = vmatpush.msra.mxu0 0.0
        %703 = vmatpush.msra.mxu0 0.0
        %704 = vmatpush.msra.mxu0 0.0
        %705 = vmatpush.msra.mxu0 0.0
        %706 = vmatpush.msra.mxu0 0.0
        %707 = vmatpush.msra.mxu0 0.0
        %708 = vmatpush.msra.mxu0 0.0
        %709 = vmatpush.msra.mxu0 0.0
        %710 = vmatpush.msra.mxu0 %v203
        %711 = vmatpush.msra.mxu0 %v202
        %712 = vmatmul.f32.gmra.mxu0 %v694
        %v713 = vpop.f32.mrf.mxu0
        %v714 = vadd.f32 0.0, %v713
        %715 = vdwg.mxu0
        %717 = vrot.lane.b32.xlu0 %v714, 126
        %v718 = vpop.permute.xlu0 %717
        %v719 = vrot.slane %v718, 4
        %vm720 = vcmask 1031168
        %v721 = vsel %vm720, %v719, %v718
        %vm723 = vcmask 1044464
        %vm724 = vcmask 261124
        %vm725 = vmor %vm724, %vm723
        %726 = vst.msk [vmem:[#allocation2 + $0xc] sm:$0xff] %vm725, %v721
        %v727 = vld [vmem:[%s195 + $0x4] sm:$0xf]
        %729 = vst [vmem:[#allocation1] ss:$2 sm:$0xff] %v727
        %v730 = vld.sshfl [vmem:[#allocation1] sm:$0xff pattern:$0x75316420]
        %731 = vrot.lane.b32.xlu0 %v730, 16
        %v732 = vpop.permute.xlu0 %731
        %v733 = vsel %vm205, %v732, 0
        %735 = vmatpush.msra.mxu0 0.0
        %736 = vmatpush.msra.mxu0 0.0
        %737 = vmatpush.msra.mxu0 0.0
        %738 = vmatpush.msra.mxu0 0.0
        %739 = vmatpush.msra.mxu0 0.0
        %740 = vmatpush.msra.mxu0 0.0
        %741 = vmatpush.msra.mxu0 0.0
        %742 = vmatpush.msra.mxu0 0.0
        %743 = vmatpush.msra.mxu0 0.0
        %744 = vmatpush.msra.mxu0 0.0
        %745 = vmatpush.msra.mxu0 0.0
        %746 = vmatpush.msra.mxu0 0.0
        %747 = vmatpush.msra.mxu0 0.0
        %748 = vmatpush.msra.mxu0 0.0
        %749 = vmatpush.msra.mxu0 %v203
        %750 = vmatpush.msra.mxu0 %v202
        %751 = vmatmul.f32.gmra.mxu0 %v733
        %v752 = vpop.f32.mrf.mxu0
        %v753 = vadd.f32 0.0, %v752
        %754 = vdwg.mxu0
        %756 = vrot.lane.b32.xlu0 %v753, 32
        %v757 = vpop.permute.xlu0 %756
        %vm759 = vcmask 535808
        %760 = vst.msk [vmem:[#allocation2 + $0x10] sm:$0xf] %vm759, %v757
        %v761 = vld [vmem:[%s3] sm:$0xff]
        %v762 = vld [vmem:[#allocation2] sm:$0xff]
        %v763 = vld [vmem:[#allocation2 + $0x8] sm:$0xff]
        %v764 = vld [vmem:[#allocation2 + $0x10] sm:$0xf]
        %v765 = vld [vmem:[%s2] sm:$0xff]
        %s766 = scalar_lea.vmem %s2, 8
        %v767 = vld [vmem:[%s766] sm:$0xff]
        %771 = vst [vmem:[#allocation1] ss:$2 sm:$0xff] %v762
        %s772 = scalar_lea.vmem [#allocation1], 16
        %773 = vst [vmem:[%s772] ss:$2 sm:$0xff] %v763
        %s774 = scalar_lea.vmem [#allocation1], 32
        %775 = vst [vmem:[%s774] ss:$2 sm:$0xff] %v764
        %v776 = vld.sshfl [vmem:[#allocation1] sm:$0xff pattern:$0x75316420]
        %v777 = vld.sshfl [vmem:[#allocation1 + $0x8] sm:$0xff pattern:$0x75316420]
        %v778 = vld.sshfl [vmem:[#allocation1 + $0x10] sm:$0xff pattern:$0x75316420]
        %v779 = vld.sshfl [vmem:[#allocation1 + $0x18] sm:$0xff pattern:$0x75316420]
        %v780 = vld.sshfl [vmem:[#allocation1 + $0x20] sm:$0xff pattern:$0x75316420]
        %781 = vrot.lane.b32.xlu0 %v776, 127
        %v782 = vpop.permute.xlu0 %781
        %783 = vrot.lane.b32.xlu0 %v777, 127
        %v784 = vpop.permute.xlu0 %783
        %785 = vrot.lane.b32.xlu0 %v778, 127
        %v786 = vpop.permute.xlu0 %785
        %787 = vrot.lane.b32.xlu0 %v779, 127
        %v788 = vpop.permute.xlu0 %787
        %789 = vrot.lane.b32.xlu0 %v780, 127
        %v790 = vpop.permute.xlu0 %789
        %vm791 = vcmask 1039360
        %v792 = vsel %vm791, %v782, %v784
        %v793 = vsel %vm791, %v784, %v786
        %v794 = vsel %vm791, %v786, %v788
        %v795 = vsel %vm791, %v788, %v790
        %vm796 = vcmask 31744
        %v798 = vsel %vm796, %v767, 0
        %vm800 = vcmask 1043456
        %v801 = vsel %vm800, %v792, 0
        %v803 = vsel %vm800, %v793, 0
        %v805 = vsel %vm800, %v794, 0
        %v807 = vsel %vm800, %v795, 0
        %v809 = vsel %vm800, %v790, 0
        %811 = vmatpush.msra.mxu0 0.0
        %812 = vmatpush.msra.mxu0 0.0
        %813 = vmatpush.msra.mxu0 0.0
        %814 = vmatpush.msra.mxu0 0.0
        %815 = vmatpush.msra.mxu0 0.0
        %816 = vmatpush.msra.mxu0 0.0
        %817 = vmatpush.msra.mxu0 0.0
        %818 = vmatpush.msra.mxu0 0.0
        %819 = vmatpush.msra.mxu0 0.0
        %820 = vmatpush.msra.mxu0 0.0
        %821 = vmatpush.msra.mxu0 0.0
        %822 = vmatpush.msra.mxu0 0.0
        %823 = vmatpush.msra.mxu0 0.0
        %824 = vmatpush.msra.mxu0 0.0
        %825 = vmatpush.msra.mxu0 0.0
        %826 = vmatpush.msra.mxu0 %v801
        %827 = vmatmul.f32.gmra.mxu0 %v798
        %v828 = vpop.f32.mrf.mxu0
        %v829 = vadd.f32 0.0, %v828
        %830 = vdwg.mxu0
        %831 = vmatpush.msra.mxu0 0.0
        %832 = vmatpush.msra.mxu0 0.0
        %833 = vmatpush.msra.mxu0 0.0
        %834 = vmatpush.msra.mxu0 0.0
        %835 = vmatpush.msra.mxu0 0.0
        %836 = vmatpush.msra.mxu0 0.0
        %837 = vmatpush.msra.mxu0 0.0
        %838 = vmatpush.msra.mxu0 0.0
        %839 = vmatpush.msra.mxu0 0.0
        %840 = vmatpush.msra.mxu0 0.0
        %841 = vmatpush.msra.mxu0 0.0
        %842 = vmatpush.msra.mxu0 0.0
        %843 = vmatpush.msra.mxu0 0.0
        %844 = vmatpush.msra.mxu0 0.0
        %845 = vmatpush.msra.mxu0 0.0
        %846 = vmatpush.msra.mxu0 %v803
        %847 = vmatmul.f32.gmra.mxu0 %v798
        %v848 = vpop.f32.mrf.mxu0
        %v849 = vadd.f32 0.0, %v848
        %850 = vdwg.mxu0
        %851 = vmatpush.msra.mxu0 0.0
        %852 = vmatpush.msra.mxu0 0.0
        %853 = vmatpush.msra.mxu0 0.0
        %854 = vmatpush.msra.mxu0 0.0
        %855 = vmatpush.msra.mxu0 0.0
        %856 = vmatpush.msra.mxu0 0.0
        %857 = vmatpush.msra.mxu0 0.0
        %858 = vmatpush.msra.mxu0 0.0
        %859 = vmatpush.msra.mxu0 0.0
        %860 = vmatpush.msra.mxu0 0.0
        %861 = vmatpush.msra.mxu0 0.0
        %862 = vmatpush.msra.mxu0 0.0
        %863 = vmatpush.msra.mxu0 0.0
        %864 = vmatpush.msra.mxu0 0.0
        %865 = vmatpush.msra.mxu0 0.0
        %866 = vmatpush.msra.mxu0 %v805
        %867 = vmatmul.f32.gmra.mxu0 %v798
        %v868 = vpop.f32.mrf.mxu0
        %v869 = vadd.f32 0.0, %v868
        %870 = vdwg.mxu0
        %871 = vmatpush.msra.mxu0 0.0
        %872 = vmatpush.msra.mxu0 0.0
        %873 = vmatpush.msra.mxu0 0.0
        %874 = vmatpush.msra.mxu0 0.0
        %875 = vmatpush.msra.mxu0 0.0
        %876 = vmatpush.msra.mxu0 0.0
        %877 = vmatpush.msra.mxu0 0.0
        %878 = vmatpush.msra.mxu0 0.0
        %879 = vmatpush.msra.mxu0 0.0
        %880 = vmatpush.msra.mxu0 0.0
        %881 = vmatpush.msra.mxu0 0.0
        %882 = vmatpush.msra.mxu0 0.0
        %883 = vmatpush.msra.mxu0 0.0
        %884 = vmatpush.msra.mxu0 0.0
        %885 = vmatpush.msra.mxu0 0.0
        %886 = vmatpush.msra.mxu0 %v807
        %887 = vmatmul.f32.gmra.mxu0 %v798
        %v888 = vpop.f32.mrf.mxu0
        %v889 = vadd.f32 0.0, %v888
        %890 = vdwg.mxu0
        %891 = vmatpush.msra.mxu0 0.0
        %892 = vmatpush.msra.mxu0 0.0
        %893 = vmatpush.msra.mxu0 0.0
        %894 = vmatpush.msra.mxu0 0.0
        %895 = vmatpush.msra.mxu0 0.0
        %896 = vmatpush.msra.mxu0 0.0
        %897 = vmatpush.msra.mxu0 0.0
        %898 = vmatpush.msra.mxu0 0.0
        %899 = vmatpush.msra.mxu0 0.0
        %900 = vmatpush.msra.mxu0 0.0
        %901 = vmatpush.msra.mxu0 0.0
        %902 = vmatpush.msra.mxu0 0.0
        %903 = vmatpush.msra.mxu0 0.0
        %904 = vmatpush.msra.mxu0 0.0
        %905 = vmatpush.msra.mxu0 0.0
        %906 = vmatpush.msra.mxu0 %v809
        %907 = vmatmul.f32.gmra.mxu0 %v798
        %v908 = vpop.f32.mrf.mxu0
        %v909 = vadd.f32 0.0, %v908
        %910 = vdwg.mxu0
        %911 = vst [vmem:[#allocation1] ss:$2 sm:$0xff] %v762
        %s912 = scalar_lea.vmem [#allocation1], 16
        %913 = vst [vmem:[%s912] ss:$2 sm:$0xff] %v763
        %s914 = scalar_lea.vmem [#allocation1], 32
        %915 = vst [vmem:[%s914] ss:$2 sm:$0xff] %v764
        %v916 = vld.sshfl [vmem:[#allocation1] sm:$0xff pattern:$0x75316420]
        %v917 = vld.sshfl [vmem:[#allocation1 + $0x8] sm:$0xff pattern:$0x75316420]
        %v918 = vld.sshfl [vmem:[#allocation1 + $0x10] sm:$0xff pattern:$0x75316420]
        %v919 = vld.sshfl [vmem:[#allocation1 + $0x18] sm:$0xff pattern:$0x75316420]
        %v920 = vld.sshfl [vmem:[#allocation1 + $0x20] sm:$0xff pattern:$0x75316420]
        %v922 = vsel %vm796, %v765, 0
        %v924 = vsel %vm800, %v916, 0
        %v926 = vsel %vm800, %v917, 0
        %v928 = vsel %vm800, %v918, 0
        %v930 = vsel %vm800, %v919, 0
        %v932 = vsel %vm800, %v920, 0
        %934 = vmatpush.msra.mxu0 0.0
        %935 = vmatpush.msra.mxu0 0.0
        %936 = vmatpush.msra.mxu0 0.0
        %937 = vmatpush.msra.mxu0 0.0
        %938 = vmatpush.msra.mxu0 0.0
        %939 = vmatpush.msra.mxu0 0.0
        %940 = vmatpush.msra.mxu0 0.0
        %941 = vmatpush.msra.mxu0 0.0
        %942 = vmatpush.msra.mxu0 0.0
        %943 = vmatpush.msra.mxu0 0.0
        %944 = vmatpush.msra.mxu0 0.0
        %945 = vmatpush.msra.mxu0 0.0
        %946 = vmatpush.msra.mxu0 0.0
        %947 = vmatpush.msra.mxu0 0.0
        %948 = vmatpush.msra.mxu0 0.0
        %949 = vmatpush.msra.mxu0 %v924
        %950 = vmatmul.f32.gmra.mxu0 %v922
        %v951 = vpop.f32.mrf.mxu0
        %v952 = vadd.f32 %v829, %v951
        %953 = vdwg.mxu0
        %954 = vmatpush.msra.mxu0 0.0
        %955 = vmatpush.msra.mxu0 0.0
        %956 = vmatpush.msra.mxu0 0.0
        %957 = vmatpush.msra.mxu0 0.0
        %958 = vmatpush.msra.mxu0 0.0
        %959 = vmatpush.msra.mxu0 0.0
        %960 = vmatpush.msra.mxu0 0.0
        %961 = vmatpush.msra.mxu0 0.0
        %962 = vmatpush.msra.mxu0 0.0
        %963 = vmatpush.msra.mxu0 0.0
        %964 = vmatpush.msra.mxu0 0.0
        %965 = vmatpush.msra.mxu0 0.0
        %966 = vmatpush.msra.mxu0 0.0
        %967 = vmatpush.msra.mxu0 0.0
        %968 = vmatpush.msra.mxu0 0.0
        %969 = vmatpush.msra.mxu0 %v926
        %970 = vmatmul.f32.gmra.mxu0 %v922
        %v971 = vpop.f32.mrf.mxu0
        %v972 = vadd.f32 %v849, %v971
        %973 = vdwg.mxu0
        %974 = vmatpush.msra.mxu0 0.0
        %975 = vmatpush.msra.mxu0 0.0
        %976 = vmatpush.msra.mxu0 0.0
        %977 = vmatpush.msra.mxu0 0.0
        %978 = vmatpush.msra.mxu0 0.0
        %979 = vmatpush.msra.mxu0 0.0
        %980 = vmatpush.msra.mxu0 0.0
        %981 = vmatpush.msra.mxu0 0.0
        %982 = vmatpush.msra.mxu0 0.0
        %983 = vmatpush.msra.mxu0 0.0
        %984 = vmatpush.msra.mxu0 0.0
        %985 = vmatpush.msra.mxu0 0.0
        %986 = vmatpush.msra.mxu0 0.0
        %987 = vmatpush.msra.mxu0 0.0
        %988 = vmatpush.msra.mxu0 0.0
        %989 = vmatpush.msra.mxu0 %v928
        %990 = vmatmul.f32.gmra.mxu0 %v922
        %v991 = vpop.f32.mrf.mxu0
        %v992 = vadd.f32 %v869, %v991
        %993 = vdwg.mxu0
        %994 = vmatpush.msra.mxu0 0.0
        %995 = vmatpush.msra.mxu0 0.0
        %996 = vmatpush.msra.mxu0 0.0
        %997 = vmatpush.msra.mxu0 0.0
        %998 = vmatpush.msra.mxu0 0.0
        %999 = vmatpush.msra.mxu0 0.0
        %1000 = vmatpush.msra.mxu0 0.0
        %1001 = vmatpush.msra.mxu0 0.0
        %1002 = vmatpush.msra.mxu0 0.0
        %1003 = vmatpush.msra.mxu0 0.0
        %1004 = vmatpush.msra.mxu0 0.0
        %1005 = vmatpush.msra.mxu0 0.0
        %1006 = vmatpush.msra.mxu0 0.0
        %1007 = vmatpush.msra.mxu0 0.0
        %1008 = vmatpush.msra.mxu0 0.0
        %1009 = vmatpush.msra.mxu0 %v930
        %1010 = vmatmul.f32.gmra.mxu0 %v922
        %v1011 = vpop.f32.mrf.mxu0
        %v1012 = vadd.f32 %v889, %v1011
        %1013 = vdwg.mxu0
        %1014 = vmatpush.msra.mxu0 0.0
        %1015 = vmatpush.msra.mxu0 0.0
        %1016 = vmatpush.msra.mxu0 0.0
        %1017 = vmatpush.msra.mxu0 0.0
        %1018 = vmatpush.msra.mxu0 0.0
        %1019 = vmatpush.msra.mxu0 0.0
        %1020 = vmatpush.msra.mxu0 0.0
        %1021 = vmatpush.msra.mxu0 0.0
        %1022 = vmatpush.msra.mxu0 0.0
        %1023 = vmatpush.msra.mxu0 0.0
        %1024 = vmatpush.msra.mxu0 0.0
        %1025 = vmatpush.msra.mxu0 0.0
        %1026 = vmatpush.msra.mxu0 0.0
        %1027 = vmatpush.msra.mxu0 0.0
        %1028 = vmatpush.msra.mxu0 0.0
        %1029 = vmatpush.msra.mxu0 %v932
        %1030 = vmatmul.f32.gmra.mxu0 %v922
        %v1031 = vpop.f32.mrf.mxu0
        %v1032 = vadd.f32 %v909, %v1031
        %1033 = vdwg.mxu0
        %v1034 = vld [vmem:[#allocation2] sm:$0xff]
        %v1035 = vld [vmem:[#allocation2 + $0x8] sm:$0xff]
        %v1036 = vld [vmem:[#allocation2 + $0x10] sm:$0xf]
        %s1037 = scalar_lea.vmem %s2, 16
        %v1038 = vld [vmem:[%s1037] sm:$0xff]
        %1042 = vst [vmem:[#allocation1] ss:$2 sm:$0xff] %v1034
        %s1043 = scalar_lea.vmem [#allocation1], 16
        %1044 = vst [vmem:[%s1043] ss:$2 sm:$0xff] %v1035
        %s1045 = scalar_lea.vmem [#allocation1], 32
        %1046 = vst [vmem:[%s1045] ss:$2 sm:$0xff] %v1036
        %v1047 = vld.sshfl [vmem:[#allocation1] sm:$0xff pattern:$0x75316420]
        %v1048 = vld.sshfl [vmem:[#allocation1 + $0x8] sm:$0xff pattern:$0x75316420]
        %v1049 = vld.sshfl [vmem:[#allocation1 + $0x10] sm:$0xff pattern:$0x75316420]
        %v1050 = vld.sshfl [vmem:[#allocation1 + $0x18] sm:$0xff pattern:$0x75316420]
        %v1051 = vld.sshfl [vmem:[#allocation1 + $0x20] sm:$0xff pattern:$0x75316420]
        %1052 = vrot.lane.b32.xlu0 %v1047, 126
        %v1053 = vpop.permute.xlu0 %1052
        %1054 = vrot.lane.b32.xlu0 %v1048, 126
        %v1055 = vpop.permute.xlu0 %1054
        %1056 = vrot.lane.b32.xlu0 %v1049, 126
        %v1057 = vpop.permute.xlu0 %1056
        %1058 = vrot.lane.b32.xlu0 %v1050, 126
        %v1059 = vpop.permute.xlu0 %1058
        %1060 = vrot.lane.b32.xlu0 %v1051, 126
        %v1061 = vpop.permute.xlu0 %1060
        %v1062 = vsel %vm720, %v1053, %v1055
        %v1063 = vsel %vm720, %v1055, %v1057
        %v1064 = vsel %vm720, %v1057, %v1059
        %v1065 = vsel %vm720, %v1059, %v1061
        %v1067 = vsel %vm796, %v1038, 0
        %v1069 = vsel %vm800, %v1062, 0
        %v1071 = vsel %vm800, %v1063, 0
        %v1073 = vsel %vm800, %v1064, 0
        %v1075 = vsel %vm800, %v1065, 0
        %v1077 = vsel %vm800, %v1061, 0
        %1079 = vmatpush.msra.mxu0 0.0
        %1080 = vmatpush.msra.mxu0 0.0
        %1081 = vmatpush.msra.mxu0 0.0
        %1082 = vmatpush.msra.mxu0 0.0
        %1083 = vmatpush.msra.mxu0 0.0
        %1084 = vmatpush.msra.mxu0 0.0
        %1085 = vmatpush.msra.mxu0 0.0
        %1086 = vmatpush.msra.mxu0 0.0
        %1087 = vmatpush.msra.mxu0 0.0
        %1088 = vmatpush.msra.mxu0 0.0
        %1089 = vmatpush.msra.mxu0 0.0
        %1090 = vmatpush.msra.mxu0 0.0
        %1091 = vmatpush.msra.mxu0 0.0
        %1092 = vmatpush.msra.mxu0 0.0
        %1093 = vmatpush.msra.mxu0 0.0
        %1094 = vmatpush.msra.mxu0 %v1069
        %1095 = vmatmul.f32.gmra.mxu0 %v1067
        %v1096 = vpop.f32.mrf.mxu0
        %v1097 = vadd.f32 0.0, %v1096
        %1098 = vdwg.mxu0
        %1099 = vmatpush.msra.mxu0 0.0
        %1100 = vmatpush.msra.mxu0 0.0
        %1101 = vmatpush.msra.mxu0 0.0
        %1102 = vmatpush.msra.mxu0 0.0
        %1103 = vmatpush.msra.mxu0 0.0
        %1104 = vmatpush.msra.mxu0 0.0
        %1105 = vmatpush.msra.mxu0 0.0
        %1106 = vmatpush.msra.mxu0 0.0
        %1107 = vmatpush.msra.mxu0 0.0
        %1108 = vmatpush.msra.mxu0 0.0
        %1109 = vmatpush.msra.mxu0 0.0
        %1110 = vmatpush.msra.mxu0 0.0
        %1111 = vmatpush.msra.mxu0 0.0
        %1112 = vmatpush.msra.mxu0 0.0
        %1113 = vmatpush.msra.mxu0 0.0
        %1114 = vmatpush.msra.mxu0 %v1071
        %1115 = vmatmul.f32.gmra.mxu0 %v1067
        %v1116 = vpop.f32.mrf.mxu0
        %v1117 = vadd.f32 0.0, %v1116
        %1118 = vdwg.mxu0
        %1119 = vmatpush.msra.mxu0 0.0
        %1120 = vmatpush.msra.mxu0 0.0
        %1121 = vmatpush.msra.mxu0 0.0
        %1122 = vmatpush.msra.mxu0 0.0
        %1123 = vmatpush.msra.mxu0 0.0
        %1124 = vmatpush.msra.mxu0 0.0
        %1125 = vmatpush.msra.mxu0 0.0
        %1126 = vmatpush.msra.mxu0 0.0
        %1127 = vmatpush.msra.mxu0 0.0
        %1128 = vmatpush.msra.mxu0 0.0
        %1129 = vmatpush.msra.mxu0 0.0
        %1130 = vmatpush.msra.mxu0 0.0
        %1131 = vmatpush.msra.mxu0 0.0
        %1132 = vmatpush.msra.mxu0 0.0
        %1133 = vmatpush.msra.mxu0 0.0
        %1134 = vmatpush.msra.mxu0 %v1073
        %1135 = vmatmul.f32.gmra.mxu0 %v1067
        %v1136 = vpop.f32.mrf.mxu0
        %v1137 = vadd.f32 0.0, %v1136
        %1138 = vdwg.mxu0
        %1139 = vmatpush.msra.mxu0 0.0
        %1140 = vmatpush.msra.mxu0 0.0
        %1141 = vmatpush.msra.mxu0 0.0
        %1142 = vmatpush.msra.mxu0 0.0
        %1143 = vmatpush.msra.mxu0 0.0
        %1144 = vmatpush.msra.mxu0 0.0
        %1145 = vmatpush.msra.mxu0 0.0
        %1146 = vmatpush.msra.mxu0 0.0
        %1147 = vmatpush.msra.mxu0 0.0
        %1148 = vmatpush.msra.mxu0 0.0
        %1149 = vmatpush.msra.mxu0 0.0
        %1150 = vmatpush.msra.mxu0 0.0
        %1151 = vmatpush.msra.mxu0 0.0
        %1152 = vmatpush.msra.mxu0 0.0
        %1153 = vmatpush.msra.mxu0 0.0
        %1154 = vmatpush.msra.mxu0 %v1075
        %1155 = vmatmul.f32.gmra.mxu0 %v1067
        %v1156 = vpop.f32.mrf.mxu0
        %v1157 = vadd.f32 0.0, %v1156
        %1158 = vdwg.mxu0
        %1159 = vmatpush.msra.mxu0 0.0
        %1160 = vmatpush.msra.mxu0 0.0
        %1161 = vmatpush.msra.mxu0 0.0
        %1162 = vmatpush.msra.mxu0 0.0
        %1163 = vmatpush.msra.mxu0 0.0
        %1164 = vmatpush.msra.mxu0 0.0
        %1165 = vmatpush.msra.mxu0 0.0
        %1166 = vmatpush.msra.mxu0 0.0
        %1167 = vmatpush.msra.mxu0 0.0
        %1168 = vmatpush.msra.mxu0 0.0
        %1169 = vmatpush.msra.mxu0 0.0
        %1170 = vmatpush.msra.mxu0 0.0
        %1171 = vmatpush.msra.mxu0 0.0
        %1172 = vmatpush.msra.mxu0 0.0
        %1173 = vmatpush.msra.mxu0 0.0
        %1174 = vmatpush.msra.mxu0 %v1077
        %1175 = vmatmul.f32.gmra.mxu0 %v1067
        %v1176 = vpop.f32.mrf.mxu0
        %v1177 = vadd.f32 0.0, %v1176
        %1178 = vdwg.mxu0
        %v1179 = vadd.f32 %v952, %v1097
        %v1180 = vadd.f32 %v972, %v1117
        %v1181 = vadd.f32 %v992, %v1137
        %v1182 = vadd.f32 %v1012, %v1157
        %v1183 = vadd.f32 %v1032, %v1177
        %v1184 = vld [vmem:[#allocation2] sm:$0xff]
        %v1185 = vld [vmem:[#allocation2 + $0x8] sm:$0xff]
        %v1186 = vld [vmem:[#allocation2 + $0x10] sm:$0xf]
        %s1187 = scalar_lea.vmem %s2, 24
        %v1188 = vld [vmem:[%s1187] sm:$0xff]
        %1192 = vst [vmem:[#allocation1] ss:$2 sm:$0xff] %v1184
        %s1193 = scalar_lea.vmem [#allocation1], 16
        %1194 = vst [vmem:[%s1193] ss:$2 sm:$0xff] %v1185
        %s1195 = scalar_lea.vmem [#allocation1], 32
        %1196 = vst [vmem:[%s1195] ss:$2 sm:$0xff] %v1186
        %v1197 = vld.sshfl [vmem:[#allocation1] sm:$0xff pattern:$0x75316420]
        %v1198 = vld.sshfl [vmem:[#allocation1 + $0x8] sm:$0xff pattern:$0x75316420]
        %v1199 = vld.sshfl [vmem:[#allocation1 + $0x10] sm:$0xff pattern:$0x75316420]
        %v1200 = vld.sshfl [vmem:[#allocation1 + $0x18] sm:$0xff pattern:$0x75316420]
        %v1201 = vld.sshfl [vmem:[#allocation1 + $0x20] sm:$0xff pattern:$0x75316420]
        %1202 = vrot.lane.b32.xlu0 %v1197, 94
        %v1203 = vpop.permute.xlu0 %1202
        %1204 = vrot.lane.b32.xlu0 %v1198, 94
        %v1205 = vpop.permute.xlu0 %1204
        %1206 = vrot.lane.b32.xlu0 %v1199, 94
        %v1207 = vpop.permute.xlu0 %1206
        %1208 = vrot.lane.b32.xlu0 %v1200, 94
        %v1209 = vpop.permute.xlu0 %1208
        %1210 = vrot.lane.b32.xlu0 %v1201, 94
        %v1211 = vpop.permute.xlu0 %1210
        %vm1212 = vcmask 769024
        %v1213 = vsel %vm1212, %v1203, %v1205
        %v1214 = vsel %vm1212, %v1205, %v1207
        %v1215 = vsel %vm1212, %v1207, %v1209
        %v1216 = vsel %vm1212, %v1209, %v1211
        %v1218 = vsel %vm796, %v1188, 0
        %v1220 = vsel %vm800, %v1213, 0
        %v1222 = vsel %vm800, %v1214, 0
        %v1224 = vsel %vm800, %v1215, 0
        %v1226 = vsel %vm800, %v1216, 0
        %v1228 = vsel %vm800, %v1211, 0
        %1230 = vmatpush.msra.mxu0 0.0
        %1231 = vmatpush.msra.mxu0 0.0
        %1232 = vmatpush.msra.mxu0 0.0
        %1233 = vmatpush.msra.mxu0 0.0
        %1234 = vmatpush.msra.mxu0 0.0
        %1235 = vmatpush.msra.mxu0 0.0
        %1236 = vmatpush.msra.mxu0 0.0
        %1237 = vmatpush.msra.mxu0 0.0
        %1238 = vmatpush.msra.mxu0 0.0
        %1239 = vmatpush.msra.mxu0 0.0
        %1240 = vmatpush.msra.mxu0 0.0
        %1241 = vmatpush.msra.mxu0 0.0
        %1242 = vmatpush.msra.mxu0 0.0
        %1243 = vmatpush.msra.mxu0 0.0
        %1244 = vmatpush.msra.mxu0 0.0
        %1245 = vmatpush.msra.mxu0 %v1220
        %1246 = vmatmul.f32.gmra.mxu0 %v1218
        %v1247 = vpop.f32.mrf.mxu0
        %v1248 = vadd.f32 0.0, %v1247
        %1249 = vdwg.mxu0
        %1250 = vmatpush.msra.mxu0 0.0
        %1251 = vmatpush.msra.mxu0 0.0
        %1252 = vmatpush.msra.mxu0 0.0
        %1253 = vmatpush.msra.mxu0 0.0
        %1254 = vmatpush.msra.mxu0 0.0
        %1255 = vmatpush.msra.mxu0 0.0
        %1256 = vmatpush.msra.mxu0 0.0
        %1257 = vmatpush.msra.mxu0 0.0
        %1258 = vmatpush.msra.mxu0 0.0
        %1259 = vmatpush.msra.mxu0 0.0
        %1260 = vmatpush.msra.mxu0 0.0
        %1261 = vmatpush.msra.mxu0 0.0
        %1262 = vmatpush.msra.mxu0 0.0
        %1263 = vmatpush.msra.mxu0 0.0
        %1264 = vmatpush.msra.mxu0 0.0
        %1265 = vmatpush.msra.mxu0 %v1222
        %1266 = vmatmul.f32.gmra.mxu0 %v1218
        %v1267 = vpop.f32.mrf.mxu0
        %v1268 = vadd.f32 0.0, %v1267
        %1269 = vdwg.mxu0
        %1270 = vmatpush.msra.mxu0 0.0
        %1271 = vmatpush.msra.mxu0 0.0
        %1272 = vmatpush.msra.mxu0 0.0
        %1273 = vmatpush.msra.mxu0 0.0
        %1274 = vmatpush.msra.mxu0 0.0
        %1275 = vmatpush.msra.mxu0 0.0
        %1276 = vmatpush.msra.mxu0 0.0
        %1277 = vmatpush.msra.mxu0 0.0
        %1278 = vmatpush.msra.mxu0 0.0
        %1279 = vmatpush.msra.mxu0 0.0
        %1280 = vmatpush.msra.mxu0 0.0
        %1281 = vmatpush.msra.mxu0 0.0
        %1282 = vmatpush.msra.mxu0 0.0
        %1283 = vmatpush.msra.mxu0 0.0
        %1284 = vmatpush.msra.mxu0 0.0
        %1285 = vmatpush.msra.mxu0 %v1224
        %1286 = vmatmul.f32.gmra.mxu0 %v1218
        %v1287 = vpop.f32.mrf.mxu0
        %v1288 = vadd.f32 0.0, %v1287
        %1289 = vdwg.mxu0
        %1290 = vmatpush.msra.mxu0 0.0
        %1291 = vmatpush.msra.mxu0 0.0
        %1292 = vmatpush.msra.mxu0 0.0
        %1293 = vmatpush.msra.mxu0 0.0
        %1294 = vmatpush.msra.mxu0 0.0
        %1295 = vmatpush.msra.mxu0 0.0
        %1296 = vmatpush.msra.mxu0 0.0
        %1297 = vmatpush.msra.mxu0 0.0
        %1298 = vmatpush.msra.mxu0 0.0
        %1299 = vmatpush.msra.mxu0 0.0
        %1300 = vmatpush.msra.mxu0 0.0
        %1301 = vmatpush.msra.mxu0 0.0
        %1302 = vmatpush.msra.mxu0 0.0
        %1303 = vmatpush.msra.mxu0 0.0
        %1304 = vmatpush.msra.mxu0 0.0
        %1305 = vmatpush.msra.mxu0 %v1226
        %1306 = vmatmul.f32.gmra.mxu0 %v1218
        %v1307 = vpop.f32.mrf.mxu0
        %v1308 = vadd.f32 0.0, %v1307
        %1309 = vdwg.mxu0
        %1310 = vmatpush.msra.mxu0 0.0
        %1311 = vmatpush.msra.mxu0 0.0
        %1312 = vmatpush.msra.mxu0 0.0
        %1313 = vmatpush.msra.mxu0 0.0
        %1314 = vmatpush.msra.mxu0 0.0
        %1315 = vmatpush.msra.mxu0 0.0
        %1316 = vmatpush.msra.mxu0 0.0
        %1317 = vmatpush.msra.mxu0 0.0
        %1318 = vmatpush.msra.mxu0 0.0
        %1319 = vmatpush.msra.mxu0 0.0
        %1320 = vmatpush.msra.mxu0 0.0
        %1321 = vmatpush.msra.mxu0 0.0
        %1322 = vmatpush.msra.mxu0 0.0
        %1323 = vmatpush.msra.mxu0 0.0
        %1324 = vmatpush.msra.mxu0 0.0
        %1325 = vmatpush.msra.mxu0 %v1228
        %1326 = vmatmul.f32.gmra.mxu0 %v1218
        %v1327 = vpop.f32.mrf.mxu0
        %v1328 = vadd.f32 0.0, %v1327
        %1329 = vdwg.mxu0
        %v1330 = vadd.f32 %v1179, %v1248
        %v1331 = vadd.f32 %v1180, %v1268
        %v1332 = vadd.f32 %v1181, %v1288
        %v1333 = vadd.f32 %v1182, %v1308
        %v1334 = vadd.f32 %v1183, %v1328
        %v1335 = vld [vmem:[#allocation2] sm:$0xff]
        %v1336 = vld [vmem:[#allocation2 + $0x8] sm:$0xff]
        %v1337 = vld [vmem:[#allocation2 + $0x10] sm:$0xf]
        %s1338 = scalar_lea.vmem %s2, 32
        %v1339 = vld [vmem:[%s1338] sm:$0xff]
        %1343 = vst [vmem:[#allocation1] ss:$2 sm:$0xff] %v1335
        %s1344 = scalar_lea.vmem [#allocation1], 16
        %1345 = vst [vmem:[%s1344] ss:$2 sm:$0xff] %v1336
        %s1346 = scalar_lea.vmem [#allocation1], 32
        %1347 = vst [vmem:[%s1346] ss:$2 sm:$0xff] %v1337
        %v1348 = vld.sshfl [vmem:[#allocation1] sm:$0xff pattern:$0x75316420]
        %v1349 = vld.sshfl [vmem:[#allocation1 + $0x8] sm:$0xff pattern:$0x75316420]
        %v1350 = vld.sshfl [vmem:[#allocation1 + $0x10] sm:$0xff pattern:$0x75316420]
        %v1351 = vld.sshfl [vmem:[#allocation1 + $0x18] sm:$0xff pattern:$0x75316420]
        %v1352 = vld.sshfl [vmem:[#allocation1 + $0x20] sm:$0xff pattern:$0x75316420]
        %1353 = vrot.lane.b32.xlu0 %v1348, 93
        %v1354 = vpop.permute.xlu0 %1353
        %1355 = vrot.lane.b32.xlu0 %v1349, 93
        %v1356 = vpop.permute.xlu0 %1355
        %1357 = vrot.lane.b32.xlu0 %v1350, 93
        %v1358 = vpop.permute.xlu0 %1357
        %1359 = vrot.lane.b32.xlu0 %v1351, 93
        %v1360 = vpop.permute.xlu0 %1359
        %1361 = vrot.lane.b32.xlu0 %v1352, 93
        %v1362 = vpop.permute.xlu0 %1361
        %vm1363 = vcmask 760832
        %v1364 = vsel %vm1363, %v1354, %v1356
        %v1365 = vsel %vm1363, %v1356, %v1358
        %v1366 = vsel %vm1363, %v1358, %v1360
        %v1367 = vsel %vm1363, %v1360, %v1362
        %v1369 = vsel %vm796, %v1339, 0
        %v1371 = vsel %vm800, %v1364, 0
        %v1373 = vsel %vm800, %v1365, 0
        %v1375 = vsel %vm800, %v1366, 0
        %v1377 = vsel %vm800, %v1367, 0
        %v1379 = vsel %vm800, %v1362, 0
        %1381 = vmatpush.msra.mxu0 0.0
        %1382 = vmatpush.msra.mxu0 0.0
        %1383 = vmatpush.msra.mxu0 0.0
        %1384 = vmatpush.msra.mxu0 0.0
        %1385 = vmatpush.msra.mxu0 0.0
        %1386 = vmatpush.msra.mxu0 0.0
        %1387 = vmatpush.msra.mxu0 0.0
        %1388 = vmatpush.msra.mxu0 0.0
        %1389 = vmatpush.msra.mxu0 0.0
        %1390 = vmatpush.msra.mxu0 0.0
        %1391 = vmatpush.msra.mxu0 0.0
        %1392 = vmatpush.msra.mxu0 0.0
        %1393 = vmatpush.msra.mxu0 0.0
        %1394 = vmatpush.msra.mxu0 0.0
        %1395 = vmatpush.msra.mxu0 0.0
        %1396 = vmatpush.msra.mxu0 %v1371
        %1397 = vmatmul.f32.gmra.mxu0 %v1369
        %v1398 = vpop.f32.mrf.mxu0
        %v1399 = vadd.f32 0.0, %v1398
        %1400 = vdwg.mxu0
        %1401 = vmatpush.msra.mxu0 0.0
        %1402 = vmatpush.msra.mxu0 0.0
        %1403 = vmatpush.msra.mxu0 0.0
        %1404 = vmatpush.msra.mxu0 0.0
        %1405 = vmatpush.msra.mxu0 0.0
        %1406 = vmatpush.msra.mxu0 0.0
        %1407 = vmatpush.msra.mxu0 0.0
        %1408 = vmatpush.msra.mxu0 0.0
        %1409 = vmatpush.msra.mxu0 0.0
        %1410 = vmatpush.msra.mxu0 0.0
        %1411 = vmatpush.msra.mxu0 0.0
        %1412 = vmatpush.msra.mxu0 0.0
        %1413 = vmatpush.msra.mxu0 0.0
        %1414 = vmatpush.msra.mxu0 0.0
        %1415 = vmatpush.msra.mxu0 0.0
        %1416 = vmatpush.msra.mxu0 %v1373
        %1417 = vmatmul.f32.gmra.mxu0 %v1369
        %v1418 = vpop.f32.mrf.mxu0
        %v1419 = vadd.f32 0.0, %v1418
        %1420 = vdwg.mxu0
        %1421 = vmatpush.msra.mxu0 0.0
        %1422 = vmatpush.msra.mxu0 0.0
        %1423 = vmatpush.msra.mxu0 0.0
        %1424 = vmatpush.msra.mxu0 0.0
        %1425 = vmatpush.msra.mxu0 0.0
        %1426 = vmatpush.msra.mxu0 0.0
        %1427 = vmatpush.msra.mxu0 0.0
        %1428 = vmatpush.msra.mxu0 0.0
        %1429 = vmatpush.msra.mxu0 0.0
        %1430 = vmatpush.msra.mxu0 0.0
        %1431 = vmatpush.msra.mxu0 0.0
        %1432 = vmatpush.msra.mxu0 0.0
        %1433 = vmatpush.msra.mxu0 0.0
        %1434 = vmatpush.msra.mxu0 0.0
        %1435 = vmatpush.msra.mxu0 0.0
        %1436 = vmatpush.msra.mxu0 %v1375
        %1437 = vmatmul.f32.gmra.mxu0 %v1369
        %v1438 = vpop.f32.mrf.mxu0
        %v1439 = vadd.f32 0.0, %v1438
        %1440 = vdwg.mxu0
        %1441 = vmatpush.msra.mxu0 0.0
        %1442 = vmatpush.msra.mxu0 0.0
        %1443 = vmatpush.msra.mxu0 0.0
        %1444 = vmatpush.msra.mxu0 0.0
        %1445 = vmatpush.msra.mxu0 0.0
        %1446 = vmatpush.msra.mxu0 0.0
        %1447 = vmatpush.msra.mxu0 0.0
        %1448 = vmatpush.msra.mxu0 0.0
        %1449 = vmatpush.msra.mxu0 0.0
        %1450 = vmatpush.msra.mxu0 0.0
        %1451 = vmatpush.msra.mxu0 0.0
        %1452 = vmatpush.msra.mxu0 0.0
        %1453 = vmatpush.msra.mxu0 0.0
        %1454 = vmatpush.msra.mxu0 0.0
        %1455 = vmatpush.msra.mxu0 0.0
        %1456 = vmatpush.msra.mxu0 %v1377
        %1457 = vmatmul.f32.gmra.mxu0 %v1369
        %v1458 = vpop.f32.mrf.mxu0
        %v1459 = vadd.f32 0.0, %v1458
        %1460 = vdwg.mxu0
        %1461 = vmatpush.msra.mxu0 0.0
        %1462 = vmatpush.msra.mxu0 0.0
        %1463 = vmatpush.msra.mxu0 0.0
        %1464 = vmatpush.msra.mxu0 0.0
        %1465 = vmatpush.msra.mxu0 0.0
        %1466 = vmatpush.msra.mxu0 0.0
        %1467 = vmatpush.msra.mxu0 0.0
        %1468 = vmatpush.msra.mxu0 0.0
        %1469 = vmatpush.msra.mxu0 0.0
        %1470 = vmatpush.msra.mxu0 0.0
        %1471 = vmatpush.msra.mxu0 0.0
        %1472 = vmatpush.msra.mxu0 0.0
        %1473 = vmatpush.msra.mxu0 0.0
        %1474 = vmatpush.msra.mxu0 0.0
        %1475 = vmatpush.msra.mxu0 0.0
        %1476 = vmatpush.msra.mxu0 %v1379
        %1477 = vmatmul.f32.gmra.mxu0 %v1369
        %v1478 = vpop.f32.mrf.mxu0
        %v1479 = vadd.f32 0.0, %v1478
        %1480 = vdwg.mxu0
        %v1481 = vadd.f32 %v1330, %v1399
        %v1482 = vadd.f32 %v1331, %v1419
        %v1483 = vadd.f32 %v1332, %v1439
        %v1484 = vadd.f32 %v1333, %v1459
        %v1485 = vadd.f32 %v1334, %v1479
        %v1486 = vld [vmem:[#allocation2] sm:$0xff]
        %v1487 = vld [vmem:[#allocation2 + $0x8] sm:$0xff]
        %v1488 = vld [vmem:[#allocation2 + $0x10] sm:$0xf]
        %s1489 = scalar_lea.vmem %s2, 40
        %v1490 = vld [vmem:[%s1489] sm:$0xff]
        %1494 = vst [vmem:[#allocation1] ss:$2 sm:$0xff] %v1486
        %s1495 = scalar_lea.vmem [#allocation1], 16
        %1496 = vst [vmem:[%s1495] ss:$2 sm:$0xff] %v1487
        %s1497 = scalar_lea.vmem [#allocation1], 32
        %1498 = vst [vmem:[%s1497] ss:$2 sm:$0xff] %v1488
        %v1499 = vld.sshfl [vmem:[#allocation1] sm:$0xff pattern:$0x75316420]
        %v1500 = vld.sshfl [vmem:[#allocation1 + $0x8] sm:$0xff pattern:$0x75316420]
        %v1501 = vld.sshfl [vmem:[#allocation1 + $0x10] sm:$0xff pattern:$0x75316420]
        %v1502 = vld.sshfl [vmem:[#allocation1 + $0x18] sm:$0xff pattern:$0x75316420]
        %v1503 = vld.sshfl [vmem:[#allocation1 + $0x20] sm:$0xff pattern:$0x75316420]
        %1504 = vrot.lane.b32.xlu0 %v1499, 92
        %v1505 = vpop.permute.xlu0 %1504
        %1506 = vrot.lane.b32.xlu0 %v1500, 92
        %v1507 = vpop.permute.xlu0 %1506
        %1508 = vrot.lane.b32.xlu0 %v1501, 92
        %v1509 = vpop.permute.xlu0 %1508
        %1510 = vrot.lane.b32.xlu0 %v1502, 92
        %v1511 = vpop.permute.xlu0 %1510
        %1512 = vrot.lane.b32.xlu0 %v1503, 92
        %v1513 = vpop.permute.xlu0 %1512
        %vm1514 = vcmask 752640
        %v1515 = vsel %vm1514, %v1505, %v1507
        %v1516 = vsel %vm1514, %v1507, %v1509
        %v1517 = vsel %vm1514, %v1509, %v1511
        %v1518 = vsel %vm1514, %v1511, %v1513
        %v1520 = vsel %vm796, %v1490, 0
        %v1522 = vsel %vm800, %v1515, 0
        %v1524 = vsel %vm800, %v1516, 0
        %v1526 = vsel %vm800, %v1517, 0
        %v1528 = vsel %vm800, %v1518, 0
        %v1530 = vsel %vm800, %v1513, 0
        %1532 = vmatpush.msra.mxu0 0.0
        %1533 = vmatpush.msra.mxu0 0.0
        %1534 = vmatpush.msra.mxu0 0.0
        %1535 = vmatpush.msra.mxu0 0.0
        %1536 = vmatpush.msra.mxu0 0.0
        %1537 = vmatpush.msra.mxu0 0.0
        %1538 = vmatpush.msra.mxu0 0.0
        %1539 = vmatpush.msra.mxu0 0.0
        %1540 = vmatpush.msra.mxu0 0.0
        %1541 = vmatpush.msra.mxu0 0.0
        %1542 = vmatpush.msra.mxu0 0.0
        %1543 = vmatpush.msra.mxu0 0.0
        %1544 = vmatpush.msra.mxu0 0.0
        %1545 = vmatpush.msra.mxu0 0.0
        %1546 = vmatpush.msra.mxu0 0.0
        %1547 = vmatpush.msra.mxu0 %v1522
        %1548 = vmatmul.f32.gmra.mxu0 %v1520
        %v1549 = vpop.f32.mrf.mxu0
        %v1550 = vadd.f32 0.0, %v1549
        %1551 = vdwg.mxu0
        %1552 = vmatpush.msra.mxu0 0.0
        %1553 = vmatpush.msra.mxu0 0.0
        %1554 = vmatpush.msra.mxu0 0.0
        %1555 = vmatpush.msra.mxu0 0.0
        %1556 = vmatpush.msra.mxu0 0.0
        %1557 = vmatpush.msra.mxu0 0.0
        %1558 = vmatpush.msra.mxu0 0.0
        %1559 = vmatpush.msra.mxu0 0.0
        %1560 = vmatpush.msra.mxu0 0.0
        %1561 = vmatpush.msra.mxu0 0.0
        %1562 = vmatpush.msra.mxu0 0.0
        %1563 = vmatpush.msra.mxu0 0.0
        %1564 = vmatpush.msra.mxu0 0.0
        %1565 = vmatpush.msra.mxu0 0.0
        %1566 = vmatpush.msra.mxu0 0.0
        %1567 = vmatpush.msra.mxu0 %v1524
        %1568 = vmatmul.f32.gmra.mxu0 %v1520
        %v1569 = vpop.f32.mrf.mxu0
        %v1570 = vadd.f32 0.0, %v1569
        %1571 = vdwg.mxu0
        %1572 = vmatpush.msra.mxu0 0.0
        %1573 = vmatpush.msra.mxu0 0.0
        %1574 = vmatpush.msra.mxu0 0.0
        %1575 = vmatpush.msra.mxu0 0.0
        %1576 = vmatpush.msra.mxu0 0.0
        %1577 = vmatpush.msra.mxu0 0.0
        %1578 = vmatpush.msra.mxu0 0.0
        %1579 = vmatpush.msra.mxu0 0.0
        %1580 = vmatpush.msra.mxu0 0.0
        %1581 = vmatpush.msra.mxu0 0.0
        %1582 = vmatpush.msra.mxu0 0.0
        %1583 = vmatpush.msra.mxu0 0.0
        %1584 = vmatpush.msra.mxu0 0.0
        %1585 = vmatpush.msra.mxu0 0.0
        %1586 = vmatpush.msra.mxu0 0.0
        %1587 = vmatpush.msra.mxu0 %v1526
        %1588 = vmatmul.f32.gmra.mxu0 %v1520
        %v1589 = vpop.f32.mrf.mxu0
        %v1590 = vadd.f32 0.0, %v1589
        %1591 = vdwg.mxu0
        %1592 = vmatpush.msra.mxu0 0.0
        %1593 = vmatpush.msra.mxu0 0.0
        %1594 = vmatpush.msra.mxu0 0.0
        %1595 = vmatpush.msra.mxu0 0.0
        %1596 = vmatpush.msra.mxu0 0.0
        %1597 = vmatpush.msra.mxu0 0.0
        %1598 = vmatpush.msra.mxu0 0.0
        %1599 = vmatpush.msra.mxu0 0.0
        %1600 = vmatpush.msra.mxu0 0.0
        %1601 = vmatpush.msra.mxu0 0.0
        %1602 = vmatpush.msra.mxu0 0.0
        %1603 = vmatpush.msra.mxu0 0.0
        %1604 = vmatpush.msra.mxu0 0.0
        %1605 = vmatpush.msra.mxu0 0.0
        %1606 = vmatpush.msra.mxu0 0.0
        %1607 = vmatpush.msra.mxu0 %v1528
        %1608 = vmatmul.f32.gmra.mxu0 %v1520
        %v1609 = vpop.f32.mrf.mxu0
        %v1610 = vadd.f32 0.0, %v1609
        %1611 = vdwg.mxu0
        %1612 = vmatpush.msra.mxu0 0.0
        %1613 = vmatpush.msra.mxu0 0.0
        %1614 = vmatpush.msra.mxu0 0.0
        %1615 = vmatpush.msra.mxu0 0.0
        %1616 = vmatpush.msra.mxu0 0.0
        %1617 = vmatpush.msra.mxu0 0.0
        %1618 = vmatpush.msra.mxu0 0.0
        %1619 = vmatpush.msra.mxu0 0.0
        %1620 = vmatpush.msra.mxu0 0.0
        %1621 = vmatpush.msra.mxu0 0.0
        %1622 = vmatpush.msra.mxu0 0.0
        %1623 = vmatpush.msra.mxu0 0.0
        %1624 = vmatpush.msra.mxu0 0.0
        %1625 = vmatpush.msra.mxu0 0.0
        %1626 = vmatpush.msra.mxu0 0.0
        %1627 = vmatpush.msra.mxu0 %v1530
        %1628 = vmatmul.f32.gmra.mxu0 %v1520
        %v1629 = vpop.f32.mrf.mxu0
        %v1630 = vadd.f32 0.0, %v1629
        %1631 = vdwg.mxu0
        %v1632 = vadd.f32 %v1481, %v1550
        %v1633 = vadd.f32 %v1482, %v1570
        %v1634 = vadd.f32 %v1483, %v1590
        %v1635 = vadd.f32 %v1484, %v1610
        %v1636 = vadd.f32 %v1485, %v1630
        %1638 = vset.pattern.permute.xlu0 0
        %1639 = vperm.xlu0 %1638, %v761
        %v1640 = vpop.permute.xlu0 %1639
        %v1642 = vadd.f32 %v1632, %v1640
        %v1643 = vadd.f32 %v1633, %v1640
        %v1644 = vadd.f32 %v1634, %v1640
        %v1645 = vadd.f32 %v1635, %v1640
        %v1646 = vadd.f32 %v1636, %v1640
        %v1648 = vrot.slane %v1642, 1
        %v1649 = vrot.slane %v1642, 2
        %v1650 = vrot.slane %v1642, 3
        %v1651 = vrot.slane %v1642, 4
        %v1652 = vrot.slane %v1642, 5
        %v1653 = vrot.slane %v1642, 6
        %v1654 = vrot.slane %v1642, 7
        %vm1662 = vcmask 253952
        %1663 = vst.msk [vmem:[%s190] sm:$0x1] %vm1662, %v1642
        %1664 = vst.msk [vmem:[%s190 + $0x20] sm:$0x1] %vm1662, %v1648
        %1665 = vst.msk [vmem:[%s190 + $0x40] sm:$0x1] %vm1662, %v1649
        %1666 = vst.msk [vmem:[%s190 + $0x60] sm:$0x1] %vm1662, %v1650
        %1667 = vst.msk [vmem:[%s190 + $0x80] sm:$0x1] %vm1662, %v1651
        %1668 = vst.msk [vmem:[%s190 + $0xa0] sm:$0x1] %vm1662, %v1652
        %1669 = vst.msk [vmem:[%s190 + $0xc0] sm:$0x1] %vm1662, %v1653
        %1670 = vst.msk [vmem:[%s190 + $0xe0] sm:$0x1] %vm1662, %v1654
        %v1671 = vperm.slane %v1642, 0
        %v1672 = vperm.slane %v1648, 0
        %v1673 = vperm.slane %v1649, 0
        %v1674 = vperm.slane %v1650, 0
        %v1675 = vperm.slane %v1651, 0
        %v1676 = vperm.slane %v1652, 0
        %v1677 = vperm.slane %v1653, 0
        %v1678 = vperm.slane %v1654, 0
        %1679 = vrot.lane.b32.xlu0 %v1671, 94
        %v1680 = vpop.permute.xlu0 %1679
        %1681 = vrot.lane.b32.xlu0 %v1672, 94
        %v1682 = vpop.permute.xlu0 %1681
        %1683 = vrot.lane.b32.xlu0 %v1673, 94
        %v1684 = vpop.permute.xlu0 %1683
        %1685 = vrot.lane.b32.xlu0 %v1674, 94
        %v1686 = vpop.permute.xlu0 %1685
        %1687 = vrot.lane.b32.xlu0 %v1675, 94
        %v1688 = vpop.permute.xlu0 %1687
        %1689 = vrot.lane.b32.xlu0 %v1676, 94
        %v1690 = vpop.permute.xlu0 %1689
        %1691 = vrot.lane.b32.xlu0 %v1677, 94
        %v1692 = vpop.permute.xlu0 %1691
        %1693 = vrot.lane.b32.xlu0 %v1678, 94
        %v1694 = vpop.permute.xlu0 %1693
        %1703 = vst.msk [vmem:[%s190 + $0x2] sm:$0x1] %vm1662, %v1680
        %1704 = vst.msk [vmem:[%s190 + $0x22] sm:$0x1] %vm1662, %v1682
        %1705 = vst.msk [vmem:[%s190 + $0x42] sm:$0x1] %vm1662, %v1684
        %1706 = vst.msk [vmem:[%s190 + $0x62] sm:$0x1] %vm1662, %v1686
        %1707 = vst.msk [vmem:[%s190 + $0x82] sm:$0x1] %vm1662, %v1688
        %1708 = vst.msk [vmem:[%s190 + $0xa2] sm:$0x1] %vm1662, %v1690
        %1709 = vst.msk [vmem:[%s190 + $0xc2] sm:$0x1] %vm1662, %v1692
        %1710 = vst.msk [vmem:[%s190 + $0xe2] sm:$0x1] %vm1662, %v1694
        %1711 = vrot.lane.b32.xlu0 %v1671, 60
        %v1712 = vpop.permute.xlu0 %1711
        %1713 = vrot.lane.b32.xlu0 %v1672, 60
        %v1714 = vpop.permute.xlu0 %1713
        %1715 = vrot.lane.b32.xlu0 %v1673, 60
        %v1716 = vpop.permute.xlu0 %1715
        %1717 = vrot.lane.b32.xlu0 %v1674, 60
        %v1718 = vpop.permute.xlu0 %1717
        %1719 = vrot.lane.b32.xlu0 %v1675, 60
        %v1720 = vpop.permute.xlu0 %1719
        %1721 = vrot.lane.b32.xlu0 %v1676, 60
        %v1722 = vpop.permute.xlu0 %1721
        %1723 = vrot.lane.b32.xlu0 %v1677, 60
        %v1724 = vpop.permute.xlu0 %1723
        %1725 = vrot.lane.b32.xlu0 %v1678, 60
        %v1726 = vpop.permute.xlu0 %1725
        %1735 = vst.msk [vmem:[%s190 + $0x4] sm:$0x1] %vm1662, %v1712
        %1736 = vst.msk [vmem:[%s190 + $0x24] sm:$0x1] %vm1662, %v1714
        %1737 = vst.msk [vmem:[%s190 + $0x44] sm:$0x1] %vm1662, %v1716
        %1738 = vst.msk [vmem:[%s190 + $0x64] sm:$0x1] %vm1662, %v1718
        %1739 = vst.msk [vmem:[%s190 + $0x84] sm:$0x1] %vm1662, %v1720
        %1740 = vst.msk [vmem:[%s190 + $0xa4] sm:$0x1] %vm1662, %v1722
        %1741 = vst.msk [vmem:[%s190 + $0xc4] sm:$0x1] %vm1662, %v1724
        %1742 = vst.msk [vmem:[%s190 + $0xe4] sm:$0x1] %vm1662, %v1726
        %v1744 = vrot.slane %v1643, 7
        %vm1745 = vcmask 1040384
        %v1746 = vsel %vm1745, %v1642, %v1744
        %vm1747 = vcmask 1041409
        %v1748 = vsel %vm1747, %v1642, %v1744
        %v1749 = vrot.slane %v1748, 1
        %vm1750 = vcmask 1042434
        %v1751 = vsel %vm1750, %v1642, %v1744
        %v1752 = vrot.slane %v1751, 2
        %vm1753 = vcmask 1043459
        %v1754 = vsel %vm1753, %v1642, %v1744
        %v1755 = vrot.slane %v1754, 3
        %vm1756 = vcmask 1044484
        %v1757 = vsel %vm1756, %v1642, %v1744
        %v1758 = vrot.slane %v1757, 4
        %vm1759 = vcmask 1045509
        %v1760 = vsel %vm1759, %v1642, %v1744
        %v1761 = vrot.slane %v1760, 5
        %vm1762 = vcmask 1046534
        %v1763 = vsel %vm1762, %v1642, %v1744
        %v1764 = vrot.slane %v1763, 6
        %vm1765 = vcmask 1046528
        %v1766 = vsel %vm1765, %v1744, %v1642
        %v1767 = vrot.slane %v1766, 7
        %v1768 = vperm.slane %v1746, 0
        %v1769 = vperm.slane %v1746, 1
        %v1770 = vperm.slane %v1749, 0
        %v1771 = vperm.slane %v1749, 1
        %v1772 = vperm.slane %v1752, 0
        %v1773 = vperm.slane %v1752, 1
        %v1774 = vperm.slane %v1755, 0
        %v1775 = vperm.slane %v1755, 1
        %v1776 = vperm.slane %v1758, 0
        %v1777 = vperm.slane %v1758, 1
        %v1778 = vperm.slane %v1761, 0
        %v1779 = vperm.slane %v1761, 1
        %v1780 = vperm.slane %v1764, 0
        %v1781 = vperm.slane %v1764, 1
        %v1782 = vperm.slane %v1767, 0
        %v1783 = vperm.slane %v1767, 1
        %1784 = vrot.lane.b32.xlu0 %v1768, 26
        %v1785 = vpop.permute.xlu0 %1784
        %1786 = vrot.lane.b32.xlu0 %v1769, 26
        %v1787 = vpop.permute.xlu0 %1786
        %1788 = vrot.lane.b32.xlu0 %v1770, 26
        %v1789 = vpop.permute.xlu0 %1788
        %1790 = vrot.lane.b32.xlu0 %v1771, 26
        %v1791 = vpop.permute.xlu0 %1790
        %1792 = vrot.lane.b32.xlu0 %v1772, 26
        %v1793 = vpop.permute.xlu0 %1792
        %1794 = vrot.lane.b32.xlu0 %v1773, 26
        %v1795 = vpop.permute.xlu0 %1794
        %1796 = vrot.lane.b32.xlu0 %v1774, 26
        %v1797 = vpop.permute.xlu0 %1796
        %1798 = vrot.lane.b32.xlu0 %v1775, 26
        %v1799 = vpop.permute.xlu0 %1798
        %1800 = vrot.lane.b32.xlu0 %v1776, 26
        %v1801 = vpop.permute.xlu0 %1800
        %1802 = vrot.lane.b32.xlu0 %v1777, 26
        %v1803 = vpop.permute.xlu0 %1802
        %1804 = vrot.lane.b32.xlu0 %v1778, 26
        %v1805 = vpop.permute.xlu0 %1804
        %1806 = vrot.lane.b32.xlu0 %v1779, 26
        %v1807 = vpop.permute.xlu0 %1806
        %1808 = vrot.lane.b32.xlu0 %v1780, 26
        %v1809 = vpop.permute.xlu0 %1808
        %1810 = vrot.lane.b32.xlu0 %v1781, 26
        %v1811 = vpop.permute.xlu0 %1810
        %1812 = vrot.lane.b32.xlu0 %v1782, 26
        %v1813 = vpop.permute.xlu0 %1812
        %1814 = vrot.lane.b32.xlu0 %v1783, 26
        %v1815 = vpop.permute.xlu0 %1814
        %vm1816 = vcmask 211968
        %v1817 = vsel %vm1816, %v1785, %v1787
        %v1818 = vsel %vm1816, %v1789, %v1791
        %v1819 = vsel %vm1816, %v1793, %v1795
        %v1820 = vsel %vm1816, %v1797, %v1799
        %v1821 = vsel %vm1816, %v1801, %v1803
        %v1822 = vsel %vm1816, %v1805, %v1807
        %v1823 = vsel %vm1816, %v1809, %v1811
        %v1824 = vsel %vm1816, %v1813, %v1815
        %1833 = vst.msk [vmem:[%s190 + $0x6] sm:$0x1] %vm1662, %v1817
        %1834 = vst.msk [vmem:[%s190 + $0x26] sm:$0x1] %vm1662, %v1818
        %1835 = vst.msk [vmem:[%s190 + $0x46] sm:$0x1] %vm1662, %v1819
        %1836 = vst.msk [vmem:[%s190 + $0x66] sm:$0x1] %vm1662, %v1820
        %1837 = vst.msk [vmem:[%s190 + $0x86] sm:$0x1] %vm1662, %v1821
        %1838 = vst.msk [vmem:[%s190 + $0xa6] sm:$0x1] %vm1662, %v1822
        %1839 = vst.msk [vmem:[%s190 + $0xc6] sm:$0x1] %vm1662, %v1823
        %1840 = vst.msk [vmem:[%s190 + $0xe6] sm:$0x1] %vm1662, %v1824
        %v1841 = vrot.slane %v1643, 1
        %v1842 = vrot.slane %v1643, 2
        %v1843 = vrot.slane %v1643, 3
        %v1844 = vrot.slane %v1643, 4
        %v1845 = vrot.slane %v1643, 5
        %v1846 = vrot.slane %v1643, 6
        %v1847 = vperm.slane %v1643, 0
        %v1848 = vperm.slane %v1841, 0
        %v1849 = vperm.slane %v1842, 0
        %v1850 = vperm.slane %v1843, 0
        %v1851 = vperm.slane %v1844, 0
        %v1852 = vperm.slane %v1845, 0
        %v1853 = vperm.slane %v1846, 0
        %v1854 = vperm.slane %v1744, 0
        %1855 = vrot.lane.b32.xlu0 %v1847, 120
        %v1856 = vpop.permute.xlu0 %1855
        %1857 = vrot.lane.b32.xlu0 %v1848, 120
        %v1858 = vpop.permute.xlu0 %1857
        %1859 = vrot.lane.b32.xlu0 %v1849, 120
        %v1860 = vpop.permute.xlu0 %1859
        %1861 = vrot.lane.b32.xlu0 %v1850, 120
        %v1862 = vpop.permute.xlu0 %1861
        %1863 = vrot.lane.b32.xlu0 %v1851, 120
        %v1864 = vpop.permute.xlu0 %1863
        %1865 = vrot.lane.b32.xlu0 %v1852, 120
        %v1866 = vpop.permute.xlu0 %1865
        %1867 = vrot.lane.b32.xlu0 %v1853, 120
        %v1868 = vpop.permute.xlu0 %1867
        %1869 = vrot.lane.b32.xlu0 %v1854, 120
        %v1870 = vpop.permute.xlu0 %1869
        %1879 = vst.msk [vmem:[%s190 + $0x8] sm:$0x1] %vm1662, %v1856
        %1880 = vst.msk [vmem:[%s190 + $0x28] sm:$0x1] %vm1662, %v1858
        %1881 = vst.msk [vmem:[%s190 + $0x48] sm:$0x1] %vm1662, %v1860
        %1882 = vst.msk [vmem:[%s190 + $0x68] sm:$0x1] %vm1662, %v1862
        %1883 = vst.msk [vmem:[%s190 + $0x88] sm:$0x1] %vm1662, %v1864
        %1884 = vst.msk [vmem:[%s190 + $0xa8] sm:$0x1] %vm1662, %v1866
        %1885 = vst.msk [vmem:[%s190 + $0xc8] sm:$0x1] %vm1662, %v1868
        %1886 = vst.msk [vmem:[%s190 + $0xe8] sm:$0x1] %vm1662, %v1870
        %1887 = vrot.lane.b32.xlu0 %v1847, 86
        %v1888 = vpop.permute.xlu0 %1887
        %1889 = vrot.lane.b32.xlu0 %v1848, 86
        %v1890 = vpop.permute.xlu0 %1889
        %1891 = vrot.lane.b32.xlu0 %v1849, 86
        %v1892 = vpop.permute.xlu0 %1891
        %1893 = vrot.lane.b32.xlu0 %v1850, 86
        %v1894 = vpop.permute.xlu0 %1893
        %1895 = vrot.lane.b32.xlu0 %v1851, 86
        %v1896 = vpop.permute.xlu0 %1895
        %1897 = vrot.lane.b32.xlu0 %v1852, 86
        %v1898 = vpop.permute.xlu0 %1897
        %1899 = vrot.lane.b32.xlu0 %v1853, 86
        %v1900 = vpop.permute.xlu0 %1899
        %1901 = vrot.lane.b32.xlu0 %v1854, 86
        %v1902 = vpop.permute.xlu0 %1901
        %1911 = vst.msk [vmem:[%s190 + $0xa] sm:$0x1] %vm1662, %v1888
        %1912 = vst.msk [vmem:[%s190 + $0x2a] sm:$0x1] %vm1662, %v1890
        %1913 = vst.msk [vmem:[%s190 + $0x4a] sm:$0x1] %vm1662, %v1892
        %1914 = vst.msk [vmem:[%s190 + $0x6a] sm:$0x1] %vm1662, %v1894
        %1915 = vst.msk [vmem:[%s190 + $0x8a] sm:$0x1] %vm1662, %v1896
        %1916 = vst.msk [vmem:[%s190 + $0xaa] sm:$0x1] %vm1662, %v1898
        %1917 = vst.msk [vmem:[%s190 + $0xca] sm:$0x1] %vm1662, %v1900
        %1918 = vst.msk [vmem:[%s190 + $0xea] sm:$0x1] %vm1662, %v1902
        %1919 = vrot.lane.b32.xlu0 %v1847, 52
        %v1920 = vpop.permute.xlu0 %1919
        %1921 = vrot.lane.b32.xlu0 %v1848, 52
        %v1922 = vpop.permute.xlu0 %1921
        %1923 = vrot.lane.b32.xlu0 %v1849, 52
        %v1924 = vpop.permute.xlu0 %1923
        %1925 = vrot.lane.b32.xlu0 %v1850, 52
        %v1926 = vpop.permute.xlu0 %1925
        %1927 = vrot.lane.b32.xlu0 %v1851, 52
        %v1928 = vpop.permute.xlu0 %1927
        %1929 = vrot.lane.b32.xlu0 %v1852, 52
        %v1930 = vpop.permute.xlu0 %1929
        %1931 = vrot.lane.b32.xlu0 %v1853, 52
        %v1932 = vpop.permute.xlu0 %1931
        %1933 = vrot.lane.b32.xlu0 %v1854, 52
        %v1934 = vpop.permute.xlu0 %1933
        %1943 = vst.msk [vmem:[%s190 + $0xc] sm:$0x1] %vm1662, %v1920
        %1944 = vst.msk [vmem:[%s190 + $0x2c] sm:$0x1] %vm1662, %v1922
        %1945 = vst.msk [vmem:[%s190 + $0x4c] sm:$0x1] %vm1662, %v1924
        %1946 = vst.msk [vmem:[%s190 + $0x6c] sm:$0x1] %vm1662, %v1926
        %1947 = vst.msk [vmem:[%s190 + $0x8c] sm:$0x1] %vm1662, %v1928
        %1948 = vst.msk [vmem:[%s190 + $0xac] sm:$0x1] %vm1662, %v1930
        %1949 = vst.msk [vmem:[%s190 + $0xcc] sm:$0x1] %vm1662, %v1932
        %1950 = vst.msk [vmem:[%s190 + $0xec] sm:$0x1] %vm1662, %v1934
        %v1952 = vrot.slane %v1644, 7
        %v1953 = vsel %vm1745, %v1643, %v1952
        %v1954 = vsel %vm1747, %v1643, %v1952
        %v1955 = vrot.slane %v1954, 1
        %v1956 = vsel %vm1750, %v1643, %v1952
        %v1957 = vrot.slane %v1956, 2
        %v1958 = vsel %vm1753, %v1643, %v1952
        %v1959 = vrot.slane %v1958, 3
        %v1960 = vsel %vm1756, %v1643, %v1952
        %v1961 = vrot.slane %v1960, 4
        %v1962 = vsel %vm1759, %v1643, %v1952
        %v1963 = vrot.slane %v1962, 5
        %v1964 = vsel %vm1762, %v1643, %v1952
        %v1965 = vrot.slane %v1964, 6
        %v1966 = vsel %vm1765, %v1952, %v1643
        %v1967 = vrot.slane %v1966, 7
        %v1968 = vperm.slane %v1953, 0
        %v1969 = vperm.slane %v1953, 1
        %v1970 = vperm.slane %v1955, 0
        %v1971 = vperm.slane %v1955, 1
        %v1972 = vperm.slane %v1957, 0
        %v1973 = vperm.slane %v1957, 1
        %v1974 = vperm.slane %v1959, 0
        %v1975 = vperm.slane %v1959, 1
        %v1976 = vperm.slane %v1961, 0
        %v1977 = vperm.slane %v1961, 1
        %v1978 = vperm.slane %v1963, 0
        %v1979 = vperm.slane %v1963, 1
        %v1980 = vperm.slane %v1965, 0
        %v1981 = vperm.slane %v1965, 1
        %v1982 = vperm.slane %v1967, 0
        %v1983 = vperm.slane %v1967, 1
        %1984 = vrot.lane.b32.xlu0 %v1968, 18
        %v1985 = vpop.permute.xlu0 %1984
        %1986 = vrot.lane.b32.xlu0 %v1969, 18
        %v1987 = vpop.permute.xlu0 %1986
        %1988 = vrot.lane.b32.xlu0 %v1970, 18
        %v1989 = vpop.permute.xlu0 %1988
        %1990 = vrot.lane.b32.xlu0 %v1971, 18
        %v1991 = vpop.permute.xlu0 %1990
        %1992 = vrot.lane.b32.xlu0 %v1972, 18
        %v1993 = vpop.permute.xlu0 %1992
        %1994 = vrot.lane.b32.xlu0 %v1973, 18
        %v1995 = vpop.permute.xlu0 %1994
        %1996 = vrot.lane.b32.xlu0 %v1974, 18
        %v1997 = vpop.permute.xlu0 %1996
        %1998 = vrot.lane.b32.xlu0 %v1975, 18
        %v1999 = vpop.permute.xlu0 %1998
        %2000 = vrot.lane.b32.xlu0 %v1976, 18
        %v2001 = vpop.permute.xlu0 %2000
        %2002 = vrot.lane.b32.xlu0 %v1977, 18
        %v2003 = vpop.permute.xlu0 %2002
        %2004 = vrot.lane.b32.xlu0 %v1978, 18
        %v2005 = vpop.permute.xlu0 %2004
        %2006 = vrot.lane.b32.xlu0 %v1979, 18
        %v2007 = vpop.permute.xlu0 %2006
        %2008 = vrot.lane.b32.xlu0 %v1980, 18
        %v2009 = vpop.permute.xlu0 %2008
        %2010 = vrot.lane.b32.xlu0 %v1981, 18
        %v2011 = vpop.permute.xlu0 %2010
        %2012 = vrot.lane.b32.xlu0 %v1982, 18
        %v2013 = vpop.permute.xlu0 %2012
        %2014 = vrot.lane.b32.xlu0 %v1983, 18
        %v2015 = vpop.permute.xlu0 %2014
        %vm2016 = vcmask 146432
        %v2017 = vsel %vm2016, %v1985, %v1987
        %v2018 = vsel %vm2016, %v1989, %v1991
        %v2019 = vsel %vm2016, %v1993, %v1995
        %v2020 = vsel %vm2016, %v1997, %v1999
        %v2021 = vsel %vm2016, %v2001, %v2003
        %v2022 = vsel %vm2016, %v2005, %v2007
        %v2023 = vsel %vm2016, %v2009, %v2011
        %v2024 = vsel %vm2016, %v2013, %v2015
        %2033 = vst.msk [vmem:[%s190 + $0xe] sm:$0x1] %vm1662, %v2017
        %2034 = vst.msk [vmem:[%s190 + $0x2e] sm:$0x1] %vm1662, %v2018
        %2035 = vst.msk [vmem:[%s190 + $0x4e] sm:$0x1] %vm1662, %v2019
        %2036 = vst.msk [vmem:[%s190 + $0x6e] sm:$0x1] %vm1662, %v2020
        %2037 = vst.msk [vmem:[%s190 + $0x8e] sm:$0x1] %vm1662, %v2021
        %2038 = vst.msk [vmem:[%s190 + $0xae] sm:$0x1] %vm1662, %v2022
        %2039 = vst.msk [vmem:[%s190 + $0xce] sm:$0x1] %vm1662, %v2023
        %2040 = vst.msk [vmem:[%s190 + $0xee] sm:$0x1] %vm1662, %v2024
        %v2041 = vrot.slane %v1644, 1
        %v2042 = vrot.slane %v1644, 2
        %v2043 = vrot.slane %v1644, 3
        %v2044 = vrot.slane %v1644, 4
        %v2045 = vrot.slane %v1644, 5
        %v2046 = vrot.slane %v1644, 6
        %v2047 = vperm.slane %v1644, 0
        %v2048 = vperm.slane %v2041, 0
        %v2049 = vperm.slane %v2042, 0
        %v2050 = vperm.slane %v2043, 0
        %v2051 = vperm.slane %v2044, 0
        %v2052 = vperm.slane %v2045, 0
        %v2053 = vperm.slane %v2046, 0
        %v2054 = vperm.slane %v1952, 0
        %2055 = vrot.lane.b32.xlu0 %v2047, 112
        %v2056 = vpop.permute.xlu0 %2055
        %2057 = vrot.lane.b32.xlu0 %v2048, 112
        %v2058 = vpop.permute.xlu0 %2057
        %2059 = vrot.lane.b32.xlu0 %v2049, 112
        %v2060 = vpop.permute.xlu0 %2059
        %2061 = vrot.lane.b32.xlu0 %v2050, 112
        %v2062 = vpop.permute.xlu0 %2061
        %2063 = vrot.lane.b32.xlu0 %v2051, 112
        %v2064 = vpop.permute.xlu0 %2063
        %2065 = vrot.lane.b32.xlu0 %v2052, 112
        %v2066 = vpop.permute.xlu0 %2065
        %2067 = vrot.lane.b32.xlu0 %v2053, 112
        %v2068 = vpop.permute.xlu0 %2067
        %2069 = vrot.lane.b32.xlu0 %v2054, 112
        %v2070 = vpop.permute.xlu0 %2069
        %2079 = vst.msk [vmem:[%s190 + $0x10] sm:$0x1] %vm1662, %v2056
        %2080 = vst.msk [vmem:[%s190 + $0x30] sm:$0x1] %vm1662, %v2058
        %2081 = vst.msk [vmem:[%s190 + $0x50] sm:$0x1] %vm1662, %v2060
        %2082 = vst.msk [vmem:[%s190 + $0x70] sm:$0x1] %vm1662, %v2062
        %2083 = vst.msk [vmem:[%s190 + $0x90] sm:$0x1] %vm1662, %v2064
        %2084 = vst.msk [vmem:[%s190 + $0xb0] sm:$0x1] %vm1662, %v2066
        %2085 = vst.msk [vmem:[%s190 + $0xd0] sm:$0x1] %vm1662, %v2068
        %2086 = vst.msk [vmem:[%s190 + $0xf0] sm:$0x1] %vm1662, %v2070
        %2087 = vrot.lane.b32.xlu0 %v2047, 78
        %v2088 = vpop.permute.xlu0 %2087
        %2089 = vrot.lane.b32.xlu0 %v2048, 78
        %v2090 = vpop.permute.xlu0 %2089
        %2091 = vrot.lane.b32.xlu0 %v2049, 78
        %v2092 = vpop.permute.xlu0 %2091
        %2093 = vrot.lane.b32.xlu0 %v2050, 78
        %v2094 = vpop.permute.xlu0 %2093
        %2095 = vrot.lane.b32.xlu0 %v2051, 78
        %v2096 = vpop.permute.xlu0 %2095
        %2097 = vrot.lane.b32.xlu0 %v2052, 78
        %v2098 = vpop.permute.xlu0 %2097
        %2099 = vrot.lane.b32.xlu0 %v2053, 78
        %v2100 = vpop.permute.xlu0 %2099
        %2101 = vrot.lane.b32.xlu0 %v2054, 78
        %v2102 = vpop.permute.xlu0 %2101
        %2111 = vst.msk [vmem:[%s190 + $0x12] sm:$0x1] %vm1662, %v2088
        %2112 = vst.msk [vmem:[%s190 + $0x32] sm:$0x1] %vm1662, %v2090
        %2113 = vst.msk [vmem:[%s190 + $0x52] sm:$0x1] %vm1662, %v2092
        %2114 = vst.msk [vmem:[%s190 + $0x72] sm:$0x1] %vm1662, %v2094
        %2115 = vst.msk [vmem:[%s190 + $0x92] sm:$0x1] %vm1662, %v2096
        %2116 = vst.msk [vmem:[%s190 + $0xb2] sm:$0x1] %vm1662, %v2098
        %2117 = vst.msk [vmem:[%s190 + $0xd2] sm:$0x1] %vm1662, %v2100
        %2118 = vst.msk [vmem:[%s190 + $0xf2] sm:$0x1] %vm1662, %v2102
        %2119 = vrot.lane.b32.xlu0 %v2047, 44
        %v2120 = vpop.permute.xlu0 %2119
        %2121 = vrot.lane.b32.xlu0 %v2048, 44
        %v2122 = vpop.permute.xlu0 %2121
        %2123 = vrot.lane.b32.xlu0 %v2049, 44
        %v2124 = vpop.permute.xlu0 %2123
        %2125 = vrot.lane.b32.xlu0 %v2050, 44
        %v2126 = vpop.permute.xlu0 %2125
        %2127 = vrot.lane.b32.xlu0 %v2051, 44
        %v2128 = vpop.permute.xlu0 %2127
        %2129 = vrot.lane.b32.xlu0 %v2052, 44
        %v2130 = vpop.permute.xlu0 %2129
        %2131 = vrot.lane.b32.xlu0 %v2053, 44
        %v2132 = vpop.permute.xlu0 %2131
        %2133 = vrot.lane.b32.xlu0 %v2054, 44
        %v2134 = vpop.permute.xlu0 %2133
        %2143 = vst.msk [vmem:[%s190 + $0x14] sm:$0x1] %vm1662, %v2120
        %2144 = vst.msk [vmem:[%s190 + $0x34] sm:$0x1] %vm1662, %v2122
        %2145 = vst.msk [vmem:[%s190 + $0x54] sm:$0x1] %vm1662, %v2124
        %2146 = vst.msk [vmem:[%s190 + $0x74] sm:$0x1] %vm1662, %v2126
        %2147 = vst.msk [vmem:[%s190 + $0x94] sm:$0x1] %vm1662, %v2128
        %2148 = vst.msk [vmem:[%s190 + $0xb4] sm:$0x1] %vm1662, %v2130
        %2149 = vst.msk [vmem:[%s190 + $0xd4] sm:$0x1] %vm1662, %v2132
        %2150 = vst.msk [vmem:[%s190 + $0xf4] sm:$0x1] %vm1662, %v2134
        %v2152 = vrot.slane %v1645, 7
        %v2153 = vsel %vm1745, %v1644, %v2152
        %v2154 = vsel %vm1747, %v1644, %v2152
        %v2155 = vrot.slane %v2154, 1
        %v2156 = vsel %vm1750, %v1644, %v2152
        %v2157 = vrot.slane %v2156, 2
        %v2158 = vsel %vm1753, %v1644, %v2152
        %v2159 = vrot.slane %v2158, 3
        %v2160 = vsel %vm1756, %v1644, %v2152
        %v2161 = vrot.slane %v2160, 4
        %v2162 = vsel %vm1759, %v1644, %v2152
        %v2163 = vrot.slane %v2162, 5
        %v2164 = vsel %vm1762, %v1644, %v2152
        %v2165 = vrot.slane %v2164, 6
        %v2166 = vsel %vm1765, %v2152, %v1644
        %v2167 = vrot.slane %v2166, 7
        %v2168 = vperm.slane %v2153, 0
        %v2169 = vperm.slane %v2153, 1
        %v2170 = vperm.slane %v2155, 0
        %v2171 = vperm.slane %v2155, 1
        %v2172 = vperm.slane %v2157, 0
        %v2173 = vperm.slane %v2157, 1
        %v2174 = vperm.slane %v2159, 0
        %v2175 = vperm.slane %v2159, 1
        %v2176 = vperm.slane %v2161, 0
        %v2177 = vperm.slane %v2161, 1
        %v2178 = vperm.slane %v2163, 0
        %v2179 = vperm.slane %v2163, 1
        %v2180 = vperm.slane %v2165, 0
        %v2181 = vperm.slane %v2165, 1
        %v2182 = vperm.slane %v2167, 0
        %v2183 = vperm.slane %v2167, 1
        %2184 = vrot.lane.b32.xlu0 %v2168, 10
        %v2185 = vpop.permute.xlu0 %2184
        %2186 = vrot.lane.b32.xlu0 %v2169, 10
        %v2187 = vpop.permute.xlu0 %2186
        %2188 = vrot.lane.b32.xlu0 %v2170, 10
        %v2189 = vpop.permute.xlu0 %2188
        %2190 = vrot.lane.b32.xlu0 %v2171, 10
        %v2191 = vpop.permute.xlu0 %2190
        %2192 = vrot.lane.b32.xlu0 %v2172, 10
        %v2193 = vpop.permute.xlu0 %2192
        %2194 = vrot.lane.b32.xlu0 %v2173, 10
        %v2195 = vpop.permute.xlu0 %2194
        %2196 = vrot.lane.b32.xlu0 %v2174, 10
        %v2197 = vpop.permute.xlu0 %2196
        %2198 = vrot.lane.b32.xlu0 %v2175, 10
        %v2199 = vpop.permute.xlu0 %2198
        %2200 = vrot.lane.b32.xlu0 %v2176, 10
        %v2201 = vpop.permute.xlu0 %2200
        %2202 = vrot.lane.b32.xlu0 %v2177, 10
        %v2203 = vpop.permute.xlu0 %2202
        %2204 = vrot.lane.b32.xlu0 %v2178, 10
        %v2205 = vpop.permute.xlu0 %2204
        %2206 = vrot.lane.b32.xlu0 %v2179, 10
        %v2207 = vpop.permute.xlu0 %2206
        %2208 = vrot.lane.b32.xlu0 %v2180, 10
        %v2209 = vpop.permute.xlu0 %2208
        %2210 = vrot.lane.b32.xlu0 %v2181, 10
        %v2211 = vpop.permute.xlu0 %2210
        %2212 = vrot.lane.b32.xlu0 %v2182, 10
        %v2213 = vpop.permute.xlu0 %2212
        %2214 = vrot.lane.b32.xlu0 %v2183, 10
        %v2215 = vpop.permute.xlu0 %2214
        %vm2216 = vcmask 80896
        %v2217 = vsel %vm2216, %v2185, %v2187
        %v2218 = vsel %vm2216, %v2189, %v2191
        %v2219 = vsel %vm2216, %v2193, %v2195
        %v2220 = vsel %vm2216, %v2197, %v2199
        %v2221 = vsel %vm2216, %v2201, %v2203
        %v2222 = vsel %vm2216, %v2205, %v2207
        %v2223 = vsel %vm2216, %v2209, %v2211
        %v2224 = vsel %vm2216, %v2213, %v2215
        %2233 = vst.msk [vmem:[%s190 + $0x16] sm:$0x1] %vm1662, %v2217
        %2234 = vst.msk [vmem:[%s190 + $0x36] sm:$0x1] %vm1662, %v2218
        %2235 = vst.msk [vmem:[%s190 + $0x56] sm:$0x1] %vm1662, %v2219
        %2236 = vst.msk [vmem:[%s190 + $0x76] sm:$0x1] %vm1662, %v2220
        %2237 = vst.msk [vmem:[%s190 + $0x96] sm:$0x1] %vm1662, %v2221
        %2238 = vst.msk [vmem:[%s190 + $0xb6] sm:$0x1] %vm1662, %v2222
        %2239 = vst.msk [vmem:[%s190 + $0xd6] sm:$0x1] %vm1662, %v2223
        %2240 = vst.msk [vmem:[%s190 + $0xf6] sm:$0x1] %vm1662, %v2224
        %v2241 = vrot.slane %v1645, 1
        %v2242 = vrot.slane %v1645, 2
        %v2243 = vrot.slane %v1645, 3
        %v2244 = vrot.slane %v1645, 4
        %v2245 = vrot.slane %v1645, 5
        %v2246 = vrot.slane %v1645, 6
        %v2247 = vperm.slane %v1645, 0
        %v2248 = vperm.slane %v2241, 0
        %v2249 = vperm.slane %v2242, 0
        %v2250 = vperm.slane %v2243, 0
        %v2251 = vperm.slane %v2244, 0
        %v2252 = vperm.slane %v2245, 0
        %v2253 = vperm.slane %v2246, 0
        %v2254 = vperm.slane %v2152, 0
        %2255 = vrot.lane.b32.xlu0 %v2247, 104
        %v2256 = vpop.permute.xlu0 %2255
        %2257 = vrot.lane.b32.xlu0 %v2248, 104
        %v2258 = vpop.permute.xlu0 %2257
        %2259 = vrot.lane.b32.xlu0 %v2249, 104
        %v2260 = vpop.permute.xlu0 %2259
        %2261 = vrot.lane.b32.xlu0 %v2250, 104
        %v2262 = vpop.permute.xlu0 %2261
        %2263 = vrot.lane.b32.xlu0 %v2251, 104
        %v2264 = vpop.permute.xlu0 %2263
        %2265 = vrot.lane.b32.xlu0 %v2252, 104
        %v2266 = vpop.permute.xlu0 %2265
        %2267 = vrot.lane.b32.xlu0 %v2253, 104
        %v2268 = vpop.permute.xlu0 %2267
        %2269 = vrot.lane.b32.xlu0 %v2254, 104
        %v2270 = vpop.permute.xlu0 %2269
        %2279 = vst.msk [vmem:[%s190 + $0x18] sm:$0x1] %vm1662, %v2256
        %2280 = vst.msk [vmem:[%s190 + $0x38] sm:$0x1] %vm1662, %v2258
        %2281 = vst.msk [vmem:[%s190 + $0x58] sm:$0x1] %vm1662, %v2260
        %2282 = vst.msk [vmem:[%s190 + $0x78] sm:$0x1] %vm1662, %v2262
        %2283 = vst.msk [vmem:[%s190 + $0x98] sm:$0x1] %vm1662, %v2264
        %2284 = vst.msk [vmem:[%s190 + $0xb8] sm:$0x1] %vm1662, %v2266
        %2285 = vst.msk [vmem:[%s190 + $0xd8] sm:$0x1] %vm1662, %v2268
        %2286 = vst.msk [vmem:[%s190 + $0xf8] sm:$0x1] %vm1662, %v2270
        %2287 = vrot.lane.b32.xlu0 %v2247, 70
        %v2288 = vpop.permute.xlu0 %2287
        %2289 = vrot.lane.b32.xlu0 %v2248, 70
        %v2290 = vpop.permute.xlu0 %2289
        %2291 = vrot.lane.b32.xlu0 %v2249, 70
        %v2292 = vpop.permute.xlu0 %2291
        %2293 = vrot.lane.b32.xlu0 %v2250, 70
        %v2294 = vpop.permute.xlu0 %2293
        %2295 = vrot.lane.b32.xlu0 %v2251, 70
        %v2296 = vpop.permute.xlu0 %2295
        %2297 = vrot.lane.b32.xlu0 %v2252, 70
        %v2298 = vpop.permute.xlu0 %2297
        %2299 = vrot.lane.b32.xlu0 %v2253, 70
        %v2300 = vpop.permute.xlu0 %2299
        %2301 = vrot.lane.b32.xlu0 %v2254, 70
        %v2302 = vpop.permute.xlu0 %2301
        %2311 = vst.msk [vmem:[%s190 + $0x1a] sm:$0x1] %vm1662, %v2288
        %2312 = vst.msk [vmem:[%s190 + $0x3a] sm:$0x1] %vm1662, %v2290
        %2313 = vst.msk [vmem:[%s190 + $0x5a] sm:$0x1] %vm1662, %v2292
        %2314 = vst.msk [vmem:[%s190 + $0x7a] sm:$0x1] %vm1662, %v2294
        %2315 = vst.msk [vmem:[%s190 + $0x9a] sm:$0x1] %vm1662, %v2296
        %2316 = vst.msk [vmem:[%s190 + $0xba] sm:$0x1] %vm1662, %v2298
        %2317 = vst.msk [vmem:[%s190 + $0xda] sm:$0x1] %vm1662, %v2300
        %2318 = vst.msk [vmem:[%s190 + $0xfa] sm:$0x1] %vm1662, %v2302
        %2319 = vrot.lane.b32.xlu0 %v2247, 36
        %v2320 = vpop.permute.xlu0 %2319
        %2321 = vrot.lane.b32.xlu0 %v2248, 36
        %v2322 = vpop.permute.xlu0 %2321
        %2323 = vrot.lane.b32.xlu0 %v2249, 36
        %v2324 = vpop.permute.xlu0 %2323
        %2325 = vrot.lane.b32.xlu0 %v2250, 36
        %v2326 = vpop.permute.xlu0 %2325
        %2327 = vrot.lane.b32.xlu0 %v2251, 36
        %v2328 = vpop.permute.xlu0 %2327
        %2329 = vrot.lane.b32.xlu0 %v2252, 36
        %v2330 = vpop.permute.xlu0 %2329
        %2331 = vrot.lane.b32.xlu0 %v2253, 36
        %v2332 = vpop.permute.xlu0 %2331
        %2333 = vrot.lane.b32.xlu0 %v2254, 36
        %v2334 = vpop.permute.xlu0 %2333
        %2343 = vst.msk [vmem:[%s190 + $0x1c] sm:$0x1] %vm1662, %v2320
        %2344 = vst.msk [vmem:[%s190 + $0x3c] sm:$0x1] %vm1662, %v2322
        %2345 = vst.msk [vmem:[%s190 + $0x5c] sm:$0x1] %vm1662, %v2324
        %2346 = vst.msk [vmem:[%s190 + $0x7c] sm:$0x1] %vm1662, %v2326
        %2347 = vst.msk [vmem:[%s190 + $0x9c] sm:$0x1] %vm1662, %v2328
        %2348 = vst.msk [vmem:[%s190 + $0xbc] sm:$0x1] %vm1662, %v2330
        %2349 = vst.msk [vmem:[%s190 + $0xdc] sm:$0x1] %vm1662, %v2332
        %2350 = vst.msk [vmem:[%s190 + $0xfc] sm:$0x1] %vm1662, %v2334
        %v2352 = vrot.slane %v1646, 7
        %v2353 = vsel %vm1745, %v1645, %v2352
        %v2354 = vsel %vm1747, %v1645, %v2352
        %v2355 = vrot.slane %v2354, 1
        %v2356 = vsel %vm1750, %v1645, %v2352
        %v2357 = vrot.slane %v2356, 2
        %v2358 = vsel %vm1753, %v1645, %v2352
        %v2359 = vrot.slane %v2358, 3
        %v2360 = vsel %vm1756, %v1645, %v2352
        %v2361 = vrot.slane %v2360, 4
        %v2362 = vsel %vm1759, %v1645, %v2352
        %v2363 = vrot.slane %v2362, 5
        %v2364 = vsel %vm1762, %v1645, %v2352
        %v2365 = vrot.slane %v2364, 6
        %v2366 = vsel %vm1765, %v2352, %v1645
        %v2367 = vrot.slane %v2366, 7
        %v2368 = vperm.slane %v2353, 0
        %v2369 = vperm.slane %v2353, 1
        %v2370 = vperm.slane %v2355, 0
        %v2371 = vperm.slane %v2355, 1
        %v2372 = vperm.slane %v2357, 0
        %v2373 = vperm.slane %v2357, 1
        %v2374 = vperm.slane %v2359, 0
        %v2375 = vperm.slane %v2359, 1
        %v2376 = vperm.slane %v2361, 0
        %v2377 = vperm.slane %v2361, 1
        %v2378 = vperm.slane %v2363, 0
        %v2379 = vperm.slane %v2363, 1
        %v2380 = vperm.slane %v2365, 0
        %v2381 = vperm.slane %v2365, 1
        %v2382 = vperm.slane %v2367, 0
        %v2383 = vperm.slane %v2367, 1
        %2384 = vrot.lane.b32.xlu0 %v2368, 2
        %v2385 = vpop.permute.xlu0 %2384
        %2386 = vrot.lane.b32.xlu0 %v2369, 2
        %v2387 = vpop.permute.xlu0 %2386
        %2388 = vrot.lane.b32.xlu0 %v2370, 2
        %v2389 = vpop.permute.xlu0 %2388
        %2390 = vrot.lane.b32.xlu0 %v2371, 2
        %v2391 = vpop.permute.xlu0 %2390
        %2392 = vrot.lane.b32.xlu0 %v2372, 2
        %v2393 = vpop.permute.xlu0 %2392
        %2394 = vrot.lane.b32.xlu0 %v2373, 2
        %v2395 = vpop.permute.xlu0 %2394
        %2396 = vrot.lane.b32.xlu0 %v2374, 2
        %v2397 = vpop.permute.xlu0 %2396
        %2398 = vrot.lane.b32.xlu0 %v2375, 2
        %v2399 = vpop.permute.xlu0 %2398
        %2400 = vrot.lane.b32.xlu0 %v2376, 2
        %v2401 = vpop.permute.xlu0 %2400
        %2402 = vrot.lane.b32.xlu0 %v2377, 2
        %v2403 = vpop.permute.xlu0 %2402
        %2404 = vrot.lane.b32.xlu0 %v2378, 2
        %v2405 = vpop.permute.xlu0 %2404
        %2406 = vrot.lane.b32.xlu0 %v2379, 2
        %v2407 = vpop.permute.xlu0 %2406
        %2408 = vrot.lane.b32.xlu0 %v2380, 2
        %v2409 = vpop.permute.xlu0 %2408
        %2410 = vrot.lane.b32.xlu0 %v2381, 2
        %v2411 = vpop.permute.xlu0 %2410
        %2412 = vrot.lane.b32.xlu0 %v2382, 2
        %v2413 = vpop.permute.xlu0 %2412
        %2414 = vrot.lane.b32.xlu0 %v2383, 2
        %v2415 = vpop.permute.xlu0 %2414
        %vm2416 = vcmask 15360
        %v2417 = vsel %vm2416, %v2385, %v2387
        %v2418 = vsel %vm2416, %v2389, %v2391
        %v2419 = vsel %vm2416, %v2393, %v2395
        %v2420 = vsel %vm2416, %v2397, %v2399
        %v2421 = vsel %vm2416, %v2401, %v2403
        %v2422 = vsel %vm2416, %v2405, %v2407
        %v2423 = vsel %vm2416, %v2409, %v2411
        %v2424 = vsel %vm2416, %v2413, %v2415
        %2433 = vst.msk [vmem:[%s190 + $0x1e] sm:$0x1] %vm1662, %v2417
        %2434 = vst.msk [vmem:[%s190 + $0x3e] sm:$0x1] %vm1662, %v2418
        %2435 = vst.msk [vmem:[%s190 + $0x5e] sm:$0x1] %vm1662, %v2419
        %2436 = vst.msk [vmem:[%s190 + $0x7e] sm:$0x1] %vm1662, %v2420
        %2437 = vst.msk [vmem:[%s190 + $0x9e] sm:$0x1] %vm1662, %v2421
        %2438 = vst.msk [vmem:[%s190 + $0xbe] sm:$0x1] %vm1662, %v2422
        %2439 = vst.msk [vmem:[%s190 + $0xde] sm:$0x1] %vm1662, %v2423
        %2440 = vst.msk [vmem:[%s190 + $0xfe] sm:$0x1] %vm1662, %v2424
        %v2441 = vld [vmem:[#allocation2] sm:$0xff]
        %v2442 = vld [vmem:[#allocation2 + $0x8] sm:$0xff]
        %v2443 = vld [vmem:[#allocation2 + $0x10] sm:$0xf]
        %s2444 = scalar_lea.vmem %s2, 48
        %v2445 = vld [vmem:[%s2444] sm:$0xff]
        %s2446 = scalar_lea.vmem %s2, 56
        %v2447 = vld [vmem:[%s2446] sm:$0xff]
        %2451 = vst [vmem:[#allocation1] ss:$2 sm:$0xff] %v2441
        %s2452 = scalar_lea.vmem [#allocation1], 16
        %2453 = vst [vmem:[%s2452] ss:$2 sm:$0xff] %v2442
        %s2454 = scalar_lea.vmem [#allocation1], 32
        %2455 = vst [vmem:[%s2454] ss:$2 sm:$0xff] %v2443
        %v2456 = vld.sshfl [vmem:[#allocation1] sm:$0xff pattern:$0x75316420]
        %v2457 = vld.sshfl [vmem:[#allocation1 + $0x8] sm:$0xff pattern:$0x75316420]
        %v2458 = vld.sshfl [vmem:[#allocation1 + $0x10] sm:$0xff pattern:$0x75316420]
        %v2459 = vld.sshfl [vmem:[#allocation1 + $0x18] sm:$0xff pattern:$0x75316420]
        %v2460 = vld.sshfl [vmem:[#allocation1 + $0x20] sm:$0xff pattern:$0x75316420]
        %2461 = vrot.lane.b32.xlu0 %v2456, 93
        %v2462 = vpop.permute.xlu0 %2461
        %2463 = vrot.lane.b32.xlu0 %v2457, 93
        %v2464 = vpop.permute.xlu0 %2463
        %2465 = vrot.lane.b32.xlu0 %v2458, 93
        %v2466 = vpop.permute.xlu0 %2465
        %2467 = vrot.lane.b32.xlu0 %v2459, 93
        %v2468 = vpop.permute.xlu0 %2467
        %2469 = vrot.lane.b32.xlu0 %v2460, 93
        %v2470 = vpop.permute.xlu0 %2469
        %v2471 = vsel %vm1363, %v2462, %v2464
        %v2472 = vsel %vm1363, %v2464, %v2466
        %v2473 = vsel %vm1363, %v2466, %v2468
        %v2474 = vsel %vm1363, %v2468, %v2470
        %v2476 = vsel %vm796, %v2447, 0
        %v2478 = vsel %vm800, %v2471, 0
        %v2480 = vsel %vm800, %v2472, 0
        %v2482 = vsel %vm800, %v2473, 0
        %v2484 = vsel %vm800, %v2474, 0
        %v2486 = vsel %vm800, %v2470, 0
        %2488 = vmatpush.msra.mxu0 0.0
        %2489 = vmatpush.msra.mxu0 0.0
        %2490 = vmatpush.msra.mxu0 0.0
        %2491 = vmatpush.msra.mxu0 0.0
        %2492 = vmatpush.msra.mxu0 0.0
        %2493 = vmatpush.msra.mxu0 0.0
        %2494 = vmatpush.msra.mxu0 0.0
        %2495 = vmatpush.msra.mxu0 0.0
        %2496 = vmatpush.msra.mxu0 0.0
        %2497 = vmatpush.msra.mxu0 0.0
        %2498 = vmatpush.msra.mxu0 0.0
        %2499 = vmatpush.msra.mxu0 0.0
        %2500 = vmatpush.msra.mxu0 0.0
        %2501 = vmatpush.msra.mxu0 0.0
        %2502 = vmatpush.msra.mxu0 0.0
        %2503 = vmatpush.msra.mxu0 %v2478
        %2504 = vmatmul.f32.gmra.mxu0 %v2476
        %v2505 = vpop.f32.mrf.mxu0
        %v2506 = vadd.f32 0.0, %v2505
        %2507 = vdwg.mxu0
        %2508 = vmatpush.msra.mxu0 0.0
        %2509 = vmatpush.msra.mxu0 0.0
        %2510 = vmatpush.msra.mxu0 0.0
        %2511 = vmatpush.msra.mxu0 0.0
        %2512 = vmatpush.msra.mxu0 0.0
        %2513 = vmatpush.msra.mxu0 0.0
        %2514 = vmatpush.msra.mxu0 0.0
        %2515 = vmatpush.msra.mxu0 0.0
        %2516 = vmatpush.msra.mxu0 0.0
        %2517 = vmatpush.msra.mxu0 0.0
        %2518 = vmatpush.msra.mxu0 0.0
        %2519 = vmatpush.msra.mxu0 0.0
        %2520 = vmatpush.msra.mxu0 0.0
        %2521 = vmatpush.msra.mxu0 0.0
        %2522 = vmatpush.msra.mxu0 0.0
        %2523 = vmatpush.msra.mxu0 %v2480
        %2524 = vmatmul.f32.gmra.mxu0 %v2476
        %v2525 = vpop.f32.mrf.mxu0
        %v2526 = vadd.f32 0.0, %v2525
        %2527 = vdwg.mxu0
        %2528 = vmatpush.msra.mxu0 0.0
        %2529 = vmatpush.msra.mxu0 0.0
        %2530 = vmatpush.msra.mxu0 0.0
        %2531 = vmatpush.msra.mxu0 0.0
        %2532 = vmatpush.msra.mxu0 0.0
        %2533 = vmatpush.msra.mxu0 0.0
        %2534 = vmatpush.msra.mxu0 0.0
        %2535 = vmatpush.msra.mxu0 0.0
        %2536 = vmatpush.msra.mxu0 0.0
        %2537 = vmatpush.msra.mxu0 0.0
        %2538 = vmatpush.msra.mxu0 0.0
        %2539 = vmatpush.msra.mxu0 0.0
        %2540 = vmatpush.msra.mxu0 0.0
        %2541 = vmatpush.msra.mxu0 0.0
        %2542 = vmatpush.msra.mxu0 0.0
        %2543 = vmatpush.msra.mxu0 %v2482
        %2544 = vmatmul.f32.gmra.mxu0 %v2476
        %v2545 = vpop.f32.mrf.mxu0
        %v2546 = vadd.f32 0.0, %v2545
        %2547 = vdwg.mxu0
        %2548 = vmatpush.msra.mxu0 0.0
        %2549 = vmatpush.msra.mxu0 0.0
        %2550 = vmatpush.msra.mxu0 0.0
        %2551 = vmatpush.msra.mxu0 0.0
        %2552 = vmatpush.msra.mxu0 0.0
        %2553 = vmatpush.msra.mxu0 0.0
        %2554 = vmatpush.msra.mxu0 0.0
        %2555 = vmatpush.msra.mxu0 0.0
        %2556 = vmatpush.msra.mxu0 0.0
        %2557 = vmatpush.msra.mxu0 0.0
        %2558 = vmatpush.msra.mxu0 0.0
        %2559 = vmatpush.msra.mxu0 0.0
        %2560 = vmatpush.msra.mxu0 0.0
        %2561 = vmatpush.msra.mxu0 0.0
        %2562 = vmatpush.msra.mxu0 0.0
        %2563 = vmatpush.msra.mxu0 %v2484
        %2564 = vmatmul.f32.gmra.mxu0 %v2476
        %v2565 = vpop.f32.mrf.mxu0
        %v2566 = vadd.f32 0.0, %v2565
        %2567 = vdwg.mxu0
        %2568 = vmatpush.msra.mxu0 0.0
        %2569 = vmatpush.msra.mxu0 0.0
        %2570 = vmatpush.msra.mxu0 0.0
        %2571 = vmatpush.msra.mxu0 0.0
        %2572 = vmatpush.msra.mxu0 0.0
        %2573 = vmatpush.msra.mxu0 0.0
        %2574 = vmatpush.msra.mxu0 0.0
        %2575 = vmatpush.msra.mxu0 0.0
        %2576 = vmatpush.msra.mxu0 0.0
        %2577 = vmatpush.msra.mxu0 0.0
        %2578 = vmatpush.msra.mxu0 0.0
        %2579 = vmatpush.msra.mxu0 0.0
        %2580 = vmatpush.msra.mxu0 0.0
        %2581 = vmatpush.msra.mxu0 0.0
        %2582 = vmatpush.msra.mxu0 0.0
        %2583 = vmatpush.msra.mxu0 %v2486
        %2584 = vmatmul.f32.gmra.mxu0 %v2476
        %v2585 = vpop.f32.mrf.mxu0
        %v2586 = vadd.f32 0.0, %v2585
        %2587 = vdwg.mxu0
        %2588 = vst [vmem:[#allocation1] ss:$2 sm:$0xff] %v2441
        %s2589 = scalar_lea.vmem [#allocation1], 16
        %2590 = vst [vmem:[%s2589] ss:$2 sm:$0xff] %v2442
        %s2591 = scalar_lea.vmem [#allocation1], 32
        %2592 = vst [vmem:[%s2591] ss:$2 sm:$0xff] %v2443
        %v2593 = vld.sshfl [vmem:[#allocation1] sm:$0xff pattern:$0x75316420]
        %v2594 = vld.sshfl [vmem:[#allocation1 + $0x8] sm:$0xff pattern:$0x75316420]
        %v2595 = vld.sshfl [vmem:[#allocation1 + $0x10] sm:$0xff pattern:$0x75316420]
        %v2596 = vld.sshfl [vmem:[#allocation1 + $0x18] sm:$0xff pattern:$0x75316420]
        %v2597 = vld.sshfl [vmem:[#allocation1 + $0x20] sm:$0xff pattern:$0x75316420]
        %2598 = vrot.lane.b32.xlu0 %v2593, 94
        %v2599 = vpop.permute.xlu0 %2598
        %2600 = vrot.lane.b32.xlu0 %v2594, 94
        %v2601 = vpop.permute.xlu0 %2600
        %2602 = vrot.lane.b32.xlu0 %v2595, 94
        %v2603 = vpop.permute.xlu0 %2602
        %2604 = vrot.lane.b32.xlu0 %v2596, 94
        %v2605 = vpop.permute.xlu0 %2604
        %2606 = vrot.lane.b32.xlu0 %v2597, 94
        %v2607 = vpop.permute.xlu0 %2606
        %v2608 = vsel %vm1212, %v2599, %v2601
        %v2609 = vsel %vm1212, %v2601, %v2603
        %v2610 = vsel %vm1212, %v2603, %v2605
        %v2611 = vsel %vm1212, %v2605, %v2607
        %v2613 = vsel %vm796, %v2445, 0
        %v2615 = vsel %vm800, %v2608, 0
        %v2617 = vsel %vm800, %v2609, 0
        %v2619 = vsel %vm800, %v2610, 0
        %v2621 = vsel %vm800, %v2611, 0
        %v2623 = vsel %vm800, %v2607, 0
        %2625 = vmatpush.msra.mxu0 0.0
        %2626 = vmatpush.msra.mxu0 0.0
        %2627 = vmatpush.msra.mxu0 0.0
        %2628 = vmatpush.msra.mxu0 0.0
        %2629 = vmatpush.msra.mxu0 0.0
        %2630 = vmatpush.msra.mxu0 0.0
        %2631 = vmatpush.msra.mxu0 0.0
        %2632 = vmatpush.msra.mxu0 0.0
        %2633 = vmatpush.msra.mxu0 0.0
        %2634 = vmatpush.msra.mxu0 0.0
        %2635 = vmatpush.msra.mxu0 0.0
        %2636 = vmatpush.msra.mxu0 0.0
        %2637 = vmatpush.msra.mxu0 0.0
        %2638 = vmatpush.msra.mxu0 0.0
        %2639 = vmatpush.msra.mxu0 0.0
        %2640 = vmatpush.msra.mxu0 %v2615
        %2641 = vmatmul.f32.gmra.mxu0 %v2613
        %v2642 = vpop.f32.mrf.mxu0
        %v2643 = vadd.f32 %v2506, %v2642
        %2644 = vdwg.mxu0
        %2645 = vmatpush.msra.mxu0 0.0
        %2646 = vmatpush.msra.mxu0 0.0
        %2647 = vmatpush.msra.mxu0 0.0
        %2648 = vmatpush.msra.mxu0 0.0
        %2649 = vmatpush.msra.mxu0 0.0
        %2650 = vmatpush.msra.mxu0 0.0
        %2651 = vmatpush.msra.mxu0 0.0
        %2652 = vmatpush.msra.mxu0 0.0
        %2653 = vmatpush.msra.mxu0 0.0
        %2654 = vmatpush.msra.mxu0 0.0
        %2655 = vmatpush.msra.mxu0 0.0
        %2656 = vmatpush.msra.mxu0 0.0
        %2657 = vmatpush.msra.mxu0 0.0
        %2658 = vmatpush.msra.mxu0 0.0
        %2659 = vmatpush.msra.mxu0 0.0
        %2660 = vmatpush.msra.mxu0 %v2617
        %2661 = vmatmul.f32.gmra.mxu0 %v2613
        %v2662 = vpop.f32.mrf.mxu0
        %v2663 = vadd.f32 %v2526, %v2662
        %2664 = vdwg.mxu0
        %2665 = vmatpush.msra.mxu0 0.0
        %2666 = vmatpush.msra.mxu0 0.0
        %2667 = vmatpush.msra.mxu0 0.0
        %2668 = vmatpush.msra.mxu0 0.0
        %2669 = vmatpush.msra.mxu0 0.0
        %2670 = vmatpush.msra.mxu0 0.0
        %2671 = vmatpush.msra.mxu0 0.0
        %2672 = vmatpush.msra.mxu0 0.0
        %2673 = vmatpush.msra.mxu0 0.0
        %2674 = vmatpush.msra.mxu0 0.0
        %2675 = vmatpush.msra.mxu0 0.0
        %2676 = vmatpush.msra.mxu0 0.0
        %2677 = vmatpush.msra.mxu0 0.0
        %2678 = vmatpush.msra.mxu0 0.0
        %2679 = vmatpush.msra.mxu0 0.0
        %2680 = vmatpush.msra.mxu0 %v2619
        %2681 = vmatmul.f32.gmra.mxu0 %v2613
        %v2682 = vpop.f32.mrf.mxu0
        %v2683 = vadd.f32 %v2546, %v2682
        %2684 = vdwg.mxu0
        %2685 = vmatpush.msra.mxu0 0.0
        %2686 = vmatpush.msra.mxu0 0.0
        %2687 = vmatpush.msra.mxu0 0.0
        %2688 = vmatpush.msra.mxu0 0.0
        %2689 = vmatpush.msra.mxu0 0.0
        %2690 = vmatpush.msra.mxu0 0.0
        %2691 = vmatpush.msra.mxu0 0.0
        %2692 = vmatpush.msra.mxu0 0.0
        %2693 = vmatpush.msra.mxu0 0.0
        %2694 = vmatpush.msra.mxu0 0.0
        %2695 = vmatpush.msra.mxu0 0.0
        %2696 = vmatpush.msra.mxu0 0.0
        %2697 = vmatpush.msra.mxu0 0.0
        %2698 = vmatpush.msra.mxu0 0.0
        %2699 = vmatpush.msra.mxu0 0.0
        %2700 = vmatpush.msra.mxu0 %v2621
        %2701 = vmatmul.f32.gmra.mxu0 %v2613
        %v2702 = vpop.f32.mrf.mxu0
        %v2703 = vadd.f32 %v2566, %v2702
        %2704 = vdwg.mxu0
        %2705 = vmatpush.msra.mxu0 0.0
        %2706 = vmatpush.msra.mxu0 0.0
        %2707 = vmatpush.msra.mxu0 0.0
        %2708 = vmatpush.msra.mxu0 0.0
        %2709 = vmatpush.msra.mxu0 0.0
        %2710 = vmatpush.msra.mxu0 0.0
        %2711 = vmatpush.msra.mxu0 0.0
        %2712 = vmatpush.msra.mxu0 0.0
        %2713 = vmatpush.msra.mxu0 0.0
        %2714 = vmatpush.msra.mxu0 0.0
        %2715 = vmatpush.msra.mxu0 0.0
        %2716 = vmatpush.msra.mxu0 0.0
        %2717 = vmatpush.msra.mxu0 0.0
        %2718 = vmatpush.msra.mxu0 0.0
        %2719 = vmatpush.msra.mxu0 0.0
        %2720 = vmatpush.msra.mxu0 %v2623
        %2721 = vmatmul.f32.gmra.mxu0 %v2613
        %v2722 = vpop.f32.mrf.mxu0
        %v2723 = vadd.f32 %v2586, %v2722
        %2724 = vdwg.mxu0
        %v2725 = vld [vmem:[#allocation2] sm:$0xff]
        %v2726 = vld [vmem:[#allocation2 + $0x8] sm:$0xff]
        %v2727 = vld [vmem:[#allocation2 + $0x10] sm:$0xf]
        %s2728 = scalar_lea.vmem %s2, 64
        %v2729 = vld [vmem:[%s2728] sm:$0xff]
        %2733 = vst [vmem:[#allocation1] ss:$2 sm:$0xff] %v2725
        %s2734 = scalar_lea.vmem [#allocation1], 16
        %2735 = vst [vmem:[%s2734] ss:$2 sm:$0xff] %v2726
        %s2736 = scalar_lea.vmem [#allocation1], 32
        %2737 = vst [vmem:[%s2736] ss:$2 sm:$0xff] %v2727
        %v2738 = vld.sshfl [vmem:[#allocation1] sm:$0xff pattern:$0x75316420]
        %v2739 = vld.sshfl [vmem:[#allocation1 + $0x8] sm:$0xff pattern:$0x75316420]
        %v2740 = vld.sshfl [vmem:[#allocation1 + $0x10] sm:$0xff pattern:$0x75316420]
        %v2741 = vld.sshfl [vmem:[#allocation1 + $0x18] sm:$0xff pattern:$0x75316420]
        %v2742 = vld.sshfl [vmem:[#allocation1 + $0x20] sm:$0xff pattern:$0x75316420]
        %2743 = vrot.lane.b32.xlu0 %v2738, 92
        %v2744 = vpop.permute.xlu0 %2743
        %2745 = vrot.lane.b32.xlu0 %v2739, 92
        %v2746 = vpop.permute.xlu0 %2745
        %2747 = vrot.lane.b32.xlu0 %v2740, 92
        %v2748 = vpop.permute.xlu0 %2747
        %2749 = vrot.lane.b32.xlu0 %v2741, 92
        %v2750 = vpop.permute.xlu0 %2749
        %2751 = vrot.lane.b32.xlu0 %v2742, 92
        %v2752 = vpop.permute.xlu0 %2751
        %v2753 = vsel %vm1514, %v2744, %v2746
        %v2754 = vsel %vm1514, %v2746, %v2748
        %v2755 = vsel %vm1514, %v2748, %v2750
        %v2756 = vsel %vm1514, %v2750, %v2752
        %v2758 = vsel %vm796, %v2729, 0
        %v2760 = vsel %vm800, %v2753, 0
        %v2762 = vsel %vm800, %v2754, 0
        %v2764 = vsel %vm800, %v2755, 0
        %v2766 = vsel %vm800, %v2756, 0
        %v2768 = vsel %vm800, %v2752, 0
        %2770 = vmatpush.msra.mxu0 0.0
        %2771 = vmatpush.msra.mxu0 0.0
        %2772 = vmatpush.msra.mxu0 0.0
        %2773 = vmatpush.msra.mxu0 0.0
        %2774 = vmatpush.msra.mxu0 0.0
        %2775 = vmatpush.msra.mxu0 0.0
        %2776 = vmatpush.msra.mxu0 0.0
        %2777 = vmatpush.msra.mxu0 0.0
        %2778 = vmatpush.msra.mxu0 0.0
        %2779 = vmatpush.msra.mxu0 0.0
        %2780 = vmatpush.msra.mxu0 0.0
        %2781 = vmatpush.msra.mxu0 0.0
        %2782 = vmatpush.msra.mxu0 0.0
        %2783 = vmatpush.msra.mxu0 0.0
        %2784 = vmatpush.msra.mxu0 0.0
        %2785 = vmatpush.msra.mxu0 %v2760
        %2786 = vmatmul.f32.gmra.mxu0 %v2758
        %v2787 = vpop.f32.mrf.mxu0
        %v2788 = vadd.f32 0.0, %v2787
        %2789 = vdwg.mxu0
        %2790 = vmatpush.msra.mxu0 0.0
        %2791 = vmatpush.msra.mxu0 0.0
        %2792 = vmatpush.msra.mxu0 0.0
        %2793 = vmatpush.msra.mxu0 0.0
        %2794 = vmatpush.msra.mxu0 0.0
        %2795 = vmatpush.msra.mxu0 0.0
        %2796 = vmatpush.msra.mxu0 0.0
        %2797 = vmatpush.msra.mxu0 0.0
        %2798 = vmatpush.msra.mxu0 0.0
        %2799 = vmatpush.msra.mxu0 0.0
        %2800 = vmatpush.msra.mxu0 0.0
        %2801 = vmatpush.msra.mxu0 0.0
        %2802 = vmatpush.msra.mxu0 0.0
        %2803 = vmatpush.msra.mxu0 0.0
        %2804 = vmatpush.msra.mxu0 0.0
        %2805 = vmatpush.msra.mxu0 %v2762
        %2806 = vmatmul.f32.gmra.mxu0 %v2758
        %v2807 = vpop.f32.mrf.mxu0
        %v2808 = vadd.f32 0.0, %v2807
        %2809 = vdwg.mxu0
        %2810 = vmatpush.msra.mxu0 0.0
        %2811 = vmatpush.msra.mxu0 0.0
        %2812 = vmatpush.msra.mxu0 0.0
        %2813 = vmatpush.msra.mxu0 0.0
        %2814 = vmatpush.msra.mxu0 0.0
        %2815 = vmatpush.msra.mxu0 0.0
        %2816 = vmatpush.msra.mxu0 0.0
        %2817 = vmatpush.msra.mxu0 0.0
        %2818 = vmatpush.msra.mxu0 0.0
        %2819 = vmatpush.msra.mxu0 0.0
        %2820 = vmatpush.msra.mxu0 0.0
        %2821 = vmatpush.msra.mxu0 0.0
        %2822 = vmatpush.msra.mxu0 0.0
        %2823 = vmatpush.msra.mxu0 0.0
        %2824 = vmatpush.msra.mxu0 0.0
        %2825 = vmatpush.msra.mxu0 %v2764
        %2826 = vmatmul.f32.gmra.mxu0 %v2758
        %v2827 = vpop.f32.mrf.mxu0
        %v2828 = vadd.f32 0.0, %v2827
        %2829 = vdwg.mxu0
        %2830 = vmatpush.msra.mxu0 0.0
        %2831 = vmatpush.msra.mxu0 0.0
        %2832 = vmatpush.msra.mxu0 0.0
        %2833 = vmatpush.msra.mxu0 0.0
        %2834 = vmatpush.msra.mxu0 0.0
        %2835 = vmatpush.msra.mxu0 0.0
        %2836 = vmatpush.msra.mxu0 0.0
        %2837 = vmatpush.msra.mxu0 0.0
        %2838 = vmatpush.msra.mxu0 0.0
        %2839 = vmatpush.msra.mxu0 0.0
        %2840 = vmatpush.msra.mxu0 0.0
        %2841 = vmatpush.msra.mxu0 0.0
        %2842 = vmatpush.msra.mxu0 0.0
        %2843 = vmatpush.msra.mxu0 0.0
        %2844 = vmatpush.msra.mxu0 0.0
        %2845 = vmatpush.msra.mxu0 %v2766
        %2846 = vmatmul.f32.gmra.mxu0 %v2758
        %v2847 = vpop.f32.mrf.mxu0
        %v2848 = vadd.f32 0.0, %v2847
        %2849 = vdwg.mxu0
        %2850 = vmatpush.msra.mxu0 0.0
        %2851 = vmatpush.msra.mxu0 0.0
        %2852 = vmatpush.msra.mxu0 0.0
        %2853 = vmatpush.msra.mxu0 0.0
        %2854 = vmatpush.msra.mxu0 0.0
        %2855 = vmatpush.msra.mxu0 0.0
        %2856 = vmatpush.msra.mxu0 0.0
        %2857 = vmatpush.msra.mxu0 0.0
        %2858 = vmatpush.msra.mxu0 0.0
        %2859 = vmatpush.msra.mxu0 0.0
        %2860 = vmatpush.msra.mxu0 0.0
        %2861 = vmatpush.msra.mxu0 0.0
        %2862 = vmatpush.msra.mxu0 0.0
        %2863 = vmatpush.msra.mxu0 0.0
        %2864 = vmatpush.msra.mxu0 0.0
        %2865 = vmatpush.msra.mxu0 %v2768
        %2866 = vmatmul.f32.gmra.mxu0 %v2758
        %v2867 = vpop.f32.mrf.mxu0
        %v2868 = vadd.f32 0.0, %v2867
        %2869 = vdwg.mxu0
        %v2870 = vadd.f32 %v2643, %v2788
        %v2871 = vadd.f32 %v2663, %v2808
        %v2872 = vadd.f32 %v2683, %v2828
        %v2873 = vadd.f32 %v2703, %v2848
        %v2874 = vadd.f32 %v2723, %v2868
        %v2875 = vld [vmem:[#allocation2] sm:$0xff]
        %v2876 = vld [vmem:[#allocation2 + $0x8] sm:$0xff]
        %v2877 = vld [vmem:[#allocation2 + $0x10] sm:$0xf]
        %s2878 = scalar_lea.vmem %s2, 72
        %v2879 = vld [vmem:[%s2878] sm:$0xff]
        %2883 = vst [vmem:[#allocation1] ss:$2 sm:$0xff] %v2875
        %s2884 = scalar_lea.vmem [#allocation1], 16
        %2885 = vst [vmem:[%s2884] ss:$2 sm:$0xff] %v2876
        %s2886 = scalar_lea.vmem [#allocation1], 32
        %2887 = vst [vmem:[%s2886] ss:$2 sm:$0xff] %v2877
        %v2888 = vld.sshfl [vmem:[#allocation1] sm:$0xff pattern:$0x75316420]
        %v2889 = vld.sshfl [vmem:[#allocation1 + $0x8] sm:$0xff pattern:$0x75316420]
        %v2890 = vld.sshfl [vmem:[#allocation1 + $0x10] sm:$0xff pattern:$0x75316420]
        %v2891 = vld.sshfl [vmem:[#allocation1 + $0x18] sm:$0xff pattern:$0x75316420]
        %v2892 = vld.sshfl [vmem:[#allocation1 + $0x20] sm:$0xff pattern:$0x75316420]
        %2893 = vrot.lane.b32.xlu0 %v2888, 60
        %v2894 = vpop.permute.xlu0 %2893
        %2895 = vrot.lane.b32.xlu0 %v2889, 60
        %v2896 = vpop.permute.xlu0 %2895
        %2897 = vrot.lane.b32.xlu0 %v2890, 60
        %v2898 = vpop.permute.xlu0 %2897
        %2899 = vrot.lane.b32.xlu0 %v2891, 60
        %v2900 = vpop.permute.xlu0 %2899
        %2901 = vrot.lane.b32.xlu0 %v2892, 60
        %v2902 = vpop.permute.xlu0 %2901
        %vm2903 = vcmask 490496
        %v2904 = vsel %vm2903, %v2894, %v2896
        %v2905 = vsel %vm2903, %v2896, %v2898
        %v2906 = vsel %vm2903, %v2898, %v2900
        %v2907 = vsel %vm2903, %v2900, %v2902
        %v2909 = vsel %vm796, %v2879, 0
        %v2911 = vsel %vm800, %v2904, 0
        %v2913 = vsel %vm800, %v2905, 0
        %v2915 = vsel %vm800, %v2906, 0
        %v2917 = vsel %vm800, %v2907, 0
        %v2919 = vsel %vm800, %v2902, 0
        %2921 = vmatpush.msra.mxu0 0.0
        %2922 = vmatpush.msra.mxu0 0.0
        %2923 = vmatpush.msra.mxu0 0.0
        %2924 = vmatpush.msra.mxu0 0.0
        %2925 = vmatpush.msra.mxu0 0.0
        %2926 = vmatpush.msra.mxu0 0.0
        %2927 = vmatpush.msra.mxu0 0.0
        %2928 = vmatpush.msra.mxu0 0.0
        %2929 = vmatpush.msra.mxu0 0.0
        %2930 = vmatpush.msra.mxu0 0.0
        %2931 = vmatpush.msra.mxu0 0.0
        %2932 = vmatpush.msra.mxu0 0.0
        %2933 = vmatpush.msra.mxu0 0.0
        %2934 = vmatpush.msra.mxu0 0.0
        %2935 = vmatpush.msra.mxu0 0.0
        %2936 = vmatpush.msra.mxu0 %v2911
        %2937 = vmatmul.f32.gmra.mxu0 %v2909
        %v2938 = vpop.f32.mrf.mxu0
        %v2939 = vadd.f32 0.0, %v2938
        %2940 = vdwg.mxu0
        %2941 = vmatpush.msra.mxu0 0.0
        %2942 = vmatpush.msra.mxu0 0.0
        %2943 = vmatpush.msra.mxu0 0.0
        %2944 = vmatpush.msra.mxu0 0.0
        %2945 = vmatpush.msra.mxu0 0.0
        %2946 = vmatpush.msra.mxu0 0.0
        %2947 = vmatpush.msra.mxu0 0.0
        %2948 = vmatpush.msra.mxu0 0.0
        %2949 = vmatpush.msra.mxu0 0.0
        %2950 = vmatpush.msra.mxu0 0.0
        %2951 = vmatpush.msra.mxu0 0.0
        %2952 = vmatpush.msra.mxu0 0.0
        %2953 = vmatpush.msra.mxu0 0.0
        %2954 = vmatpush.msra.mxu0 0.0
        %2955 = vmatpush.msra.mxu0 0.0
        %2956 = vmatpush.msra.mxu0 %v2913
        %2957 = vmatmul.f32.gmra.mxu0 %v2909
        %v2958 = vpop.f32.mrf.mxu0
        %v2959 = vadd.f32 0.0, %v2958
        %2960 = vdwg.mxu0
        %2961 = vmatpush.msra.mxu0 0.0
        %2962 = vmatpush.msra.mxu0 0.0
        %2963 = vmatpush.msra.mxu0 0.0
        %2964 = vmatpush.msra.mxu0 0.0
        %2965 = vmatpush.msra.mxu0 0.0
        %2966 = vmatpush.msra.mxu0 0.0
        %2967 = vmatpush.msra.mxu0 0.0
        %2968 = vmatpush.msra.mxu0 0.0
        %2969 = vmatpush.msra.mxu0 0.0
        %2970 = vmatpush.msra.mxu0 0.0
        %2971 = vmatpush.msra.mxu0 0.0
        %2972 = vmatpush.msra.mxu0 0.0
        %2973 = vmatpush.msra.mxu0 0.0
        %2974 = vmatpush.msra.mxu0 0.0
        %2975 = vmatpush.msra.mxu0 0.0
        %2976 = vmatpush.msra.mxu0 %v2915
        %2977 = vmatmul.f32.gmra.mxu0 %v2909
        %v2978 = vpop.f32.mrf.mxu0
        %v2979 = vadd.f32 0.0, %v2978
        %2980 = vdwg.mxu0
        %2981 = vmatpush.msra.mxu0 0.0
        %2982 = vmatpush.msra.mxu0 0.0
        %2983 = vmatpush.msra.mxu0 0.0
        %2984 = vmatpush.msra.mxu0 0.0
        %2985 = vmatpush.msra.mxu0 0.0
        %2986 = vmatpush.msra.mxu0 0.0
        %2987 = vmatpush.msra.mxu0 0.0
        %2988 = vmatpush.msra.mxu0 0.0
        %2989 = vmatpush.msra.mxu0 0.0
        %2990 = vmatpush.msra.mxu0 0.0
        %2991 = vmatpush.msra.mxu0 0.0
        %2992 = vmatpush.msra.mxu0 0.0
        %2993 = vmatpush.msra.mxu0 0.0
        %2994 = vmatpush.msra.mxu0 0.0
        %2995 = vmatpush.msra.mxu0 0.0
        %2996 = vmatpush.msra.mxu0 %v2917
        %2997 = vmatmul.f32.gmra.mxu0 %v2909
        %v2998 = vpop.f32.mrf.mxu0
        %v2999 = vadd.f32 0.0, %v2998
        %3000 = vdwg.mxu0
        %3001 = vmatpush.msra.mxu0 0.0
        %3002 = vmatpush.msra.mxu0 0.0
        %3003 = vmatpush.msra.mxu0 0.0
        %3004 = vmatpush.msra.mxu0 0.0
        %3005 = vmatpush.msra.mxu0 0.0
        %3006 = vmatpush.msra.mxu0 0.0
        %3007 = vmatpush.msra.mxu0 0.0
        %3008 = vmatpush.msra.mxu0 0.0
        %3009 = vmatpush.msra.mxu0 0.0
        %3010 = vmatpush.msra.mxu0 0.0
        %3011 = vmatpush.msra.mxu0 0.0
        %3012 = vmatpush.msra.mxu0 0.0
        %3013 = vmatpush.msra.mxu0 0.0
        %3014 = vmatpush.msra.mxu0 0.0
        %3015 = vmatpush.msra.mxu0 0.0
        %3016 = vmatpush.msra.mxu0 %v2919
        %3017 = vmatmul.f32.gmra.mxu0 %v2909
        %v3018 = vpop.f32.mrf.mxu0
        %v3019 = vadd.f32 0.0, %v3018
        %3020 = vdwg.mxu0
        %v3021 = vadd.f32 %v2870, %v2939
        %v3022 = vadd.f32 %v2871, %v2959
        %v3023 = vadd.f32 %v2872, %v2979
        %v3024 = vadd.f32 %v2873, %v2999
        %v3025 = vadd.f32 %v2874, %v3019
        %v3026 = vld [vmem:[#allocation2] sm:$0xff]
        %v3027 = vld [vmem:[#allocation2 + $0x8] sm:$0xff]
        %v3028 = vld [vmem:[#allocation2 + $0x10] sm:$0xf]
        %s3029 = scalar_lea.vmem %s2, 80
        %v3030 = vld [vmem:[%s3029] sm:$0xff]
        %3034 = vst [vmem:[#allocation1] ss:$2 sm:$0xff] %v3026
        %s3035 = scalar_lea.vmem [#allocation1], 16
        %3036 = vst [vmem:[%s3035] ss:$2 sm:$0xff] %v3027
        %s3037 = scalar_lea.vmem [#allocation1], 32
        %3038 = vst [vmem:[%s3037] ss:$2 sm:$0xff] %v3028
        %v3039 = vld.sshfl [vmem:[#allocation1] sm:$0xff pattern:$0x75316420]
        %v3040 = vld.sshfl [vmem:[#allocation1 + $0x8] sm:$0xff pattern:$0x75316420]
        %v3041 = vld.sshfl [vmem:[#allocation1 + $0x10] sm:$0xff pattern:$0x75316420]
        %v3042 = vld.sshfl [vmem:[#allocation1 + $0x18] sm:$0xff pattern:$0x75316420]
        %v3043 = vld.sshfl [vmem:[#allocation1 + $0x20] sm:$0xff pattern:$0x75316420]
        %3044 = vrot.lane.b32.xlu0 %v3039, 59
        %v3045 = vpop.permute.xlu0 %3044
        %3046 = vrot.lane.b32.xlu0 %v3040, 59
        %v3047 = vpop.permute.xlu0 %3046
        %3048 = vrot.lane.b32.xlu0 %v3041, 59
        %v3049 = vpop.permute.xlu0 %3048
        %3050 = vrot.lane.b32.xlu0 %v3042, 59
        %v3051 = vpop.permute.xlu0 %3050
        %3052 = vrot.lane.b32.xlu0 %v3043, 59
        %v3053 = vpop.permute.xlu0 %3052
        %vm3054 = vcmask 482304
        %v3055 = vsel %vm3054, %v3045, %v3047
        %v3056 = vsel %vm3054, %v3047, %v3049
        %v3057 = vsel %vm3054, %v3049, %v3051
        %v3058 = vsel %vm3054, %v3051, %v3053
        %v3060 = vsel %vm796, %v3030, 0
        %v3062 = vsel %vm800, %v3055, 0
        %v3064 = vsel %vm800, %v3056, 0
        %v3066 = vsel %vm800, %v3057, 0
        %v3068 = vsel %vm800, %v3058, 0
        %v3070 = vsel %vm800, %v3053, 0
        %3072 = vmatpush.msra.mxu0 0.0
        %3073 = vmatpush.msra.mxu0 0.0
        %3074 = vmatpush.msra.mxu0 0.0
        %3075 = vmatpush.msra.mxu0 0.0
        %3076 = vmatpush.msra.mxu0 0.0
        %3077 = vmatpush.msra.mxu0 0.0
        %3078 = vmatpush.msra.mxu0 0.0
        %3079 = vmatpush.msra.mxu0 0.0
        %3080 = vmatpush.msra.mxu0 0.0
        %3081 = vmatpush.msra.mxu0 0.0
        %3082 = vmatpush.msra.mxu0 0.0
        %3083 = vmatpush.msra.mxu0 0.0
        %3084 = vmatpush.msra.mxu0 0.0
        %3085 = vmatpush.msra.mxu0 0.0
        %3086 = vmatpush.msra.mxu0 0.0
        %3087 = vmatpush.msra.mxu0 %v3062
        %3088 = vmatmul.f32.gmra.mxu0 %v3060
        %v3089 = vpop.f32.mrf.mxu0
        %v3090 = vadd.f32 0.0, %v3089
        %3091 = vdwg.mxu0
        %3092 = vmatpush.msra.mxu0 0.0
        %3093 = vmatpush.msra.mxu0 0.0
        %3094 = vmatpush.msra.mxu0 0.0
        %3095 = vmatpush.msra.mxu0 0.0
        %3096 = vmatpush.msra.mxu0 0.0
        %3097 = vmatpush.msra.mxu0 0.0
        %3098 = vmatpush.msra.mxu0 0.0
        %3099 = vmatpush.msra.mxu0 0.0
        %3100 = vmatpush.msra.mxu0 0.0
        %3101 = vmatpush.msra.mxu0 0.0
        %3102 = vmatpush.msra.mxu0 0.0
        %3103 = vmatpush.msra.mxu0 0.0
        %3104 = vmatpush.msra.mxu0 0.0
        %3105 = vmatpush.msra.mxu0 0.0
        %3106 = vmatpush.msra.mxu0 0.0
        %3107 = vmatpush.msra.mxu0 %v3064
        %3108 = vmatmul.f32.gmra.mxu0 %v3060
        %v3109 = vpop.f32.mrf.mxu0
        %v3110 = vadd.f32 0.0, %v3109
        %3111 = vdwg.mxu0
        %3112 = vmatpush.msra.mxu0 0.0
        %3113 = vmatpush.msra.mxu0 0.0
        %3114 = vmatpush.msra.mxu0 0.0
        %3115 = vmatpush.msra.mxu0 0.0
        %3116 = vmatpush.msra.mxu0 0.0
        %3117 = vmatpush.msra.mxu0 0.0
        %3118 = vmatpush.msra.mxu0 0.0
        %3119 = vmatpush.msra.mxu0 0.0
        %3120 = vmatpush.msra.mxu0 0.0
        %3121 = vmatpush.msra.mxu0 0.0
        %3122 = vmatpush.msra.mxu0 0.0
        %3123 = vmatpush.msra.mxu0 0.0
        %3124 = vmatpush.msra.mxu0 0.0
        %3125 = vmatpush.msra.mxu0 0.0
        %3126 = vmatpush.msra.mxu0 0.0
        %3127 = vmatpush.msra.mxu0 %v3066
        %3128 = vmatmul.f32.gmra.mxu0 %v3060
        %v3129 = vpop.f32.mrf.mxu0
        %v3130 = vadd.f32 0.0, %v3129
        %3131 = vdwg.mxu0
        %3132 = vmatpush.msra.mxu0 0.0
        %3133 = vmatpush.msra.mxu0 0.0
        %3134 = vmatpush.msra.mxu0 0.0
        %3135 = vmatpush.msra.mxu0 0.0
        %3136 = vmatpush.msra.mxu0 0.0
        %3137 = vmatpush.msra.mxu0 0.0
        %3138 = vmatpush.msra.mxu0 0.0
        %3139 = vmatpush.msra.mxu0 0.0
        %3140 = vmatpush.msra.mxu0 0.0
        %3141 = vmatpush.msra.mxu0 0.0
        %3142 = vmatpush.msra.mxu0 0.0
        %3143 = vmatpush.msra.mxu0 0.0
        %3144 = vmatpush.msra.mxu0 0.0
        %3145 = vmatpush.msra.mxu0 0.0
        %3146 = vmatpush.msra.mxu0 0.0
        %3147 = vmatpush.msra.mxu0 %v3068
        %3148 = vmatmul.f32.gmra.mxu0 %v3060
        %v3149 = vpop.f32.mrf.mxu0
        %v3150 = vadd.f32 0.0, %v3149
        %3151 = vdwg.mxu0
        %3152 = vmatpush.msra.mxu0 0.0
        %3153 = vmatpush.msra.mxu0 0.0
        %3154 = vmatpush.msra.mxu0 0.0
        %3155 = vmatpush.msra.mxu0 0.0
        %3156 = vmatpush.msra.mxu0 0.0
        %3157 = vmatpush.msra.mxu0 0.0
        %3158 = vmatpush.msra.mxu0 0.0
        %3159 = vmatpush.msra.mxu0 0.0
        %3160 = vmatpush.msra.mxu0 0.0
        %3161 = vmatpush.msra.mxu0 0.0
        %3162 = vmatpush.msra.mxu0 0.0
        %3163 = vmatpush.msra.mxu0 0.0
        %3164 = vmatpush.msra.mxu0 0.0
        %3165 = vmatpush.msra.mxu0 0.0
        %3166 = vmatpush.msra.mxu0 0.0
        %3167 = vmatpush.msra.mxu0 %v3070
        %3168 = vmatmul.f32.gmra.mxu0 %v3060
        %v3169 = vpop.f32.mrf.mxu0
        %v3170 = vadd.f32 0.0, %v3169
        %3171 = vdwg.mxu0
        %v3172 = vadd.f32 %v3021, %v3090
        %v3173 = vadd.f32 %v3022, %v3110
        %v3174 = vadd.f32 %v3023, %v3130
        %v3175 = vadd.f32 %v3024, %v3150
        %v3176 = vadd.f32 %v3025, %v3170
        %v3177 = vld [vmem:[#allocation2] sm:$0xff]
        %v3178 = vld [vmem:[#allocation2 + $0x8] sm:$0xff]
        %v3179 = vld [vmem:[#allocation2 + $0x10] sm:$0xf]
        %s3180 = scalar_lea.vmem %s2, 88
        %v3181 = vld [vmem:[%s3180] sm:$0xff]
        %3185 = vst [vmem:[#allocation1] ss:$2 sm:$0xff] %v3177
        %s3186 = scalar_lea.vmem [#allocation1], 16
        %3187 = vst [vmem:[%s3186] ss:$2 sm:$0xff] %v3178
        %s3188 = scalar_lea.vmem [#allocation1], 32
        %3189 = vst [vmem:[%s3188] ss:$2 sm:$0xff] %v3179
        %v3190 = vld.sshfl [vmem:[#allocation1] sm:$0xff pattern:$0x75316420]
        %v3191 = vld.sshfl [vmem:[#allocation1 + $0x8] sm:$0xff pattern:$0x75316420]
        %v3192 = vld.sshfl [vmem:[#allocation1 + $0x10] sm:$0xff pattern:$0x75316420]
        %v3193 = vld.sshfl [vmem:[#allocation1 + $0x18] sm:$0xff pattern:$0x75316420]
        %v3194 = vld.sshfl [vmem:[#allocation1 + $0x20] sm:$0xff pattern:$0x75316420]
        %3195 = vrot.lane.b32.xlu0 %v3190, 58
        %v3196 = vpop.permute.xlu0 %3195
        %3197 = vrot.lane.b32.xlu0 %v3191, 58
        %v3198 = vpop.permute.xlu0 %3197
        %3199 = vrot.lane.b32.xlu0 %v3192, 58
        %v3200 = vpop.permute.xlu0 %3199
        %3201 = vrot.lane.b32.xlu0 %v3193, 58
        %v3202 = vpop.permute.xlu0 %3201
        %3203 = vrot.lane.b32.xlu0 %v3194, 58
        %v3204 = vpop.permute.xlu0 %3203
        %vm3205 = vcmask 474112
        %v3206 = vsel %vm3205, %v3196, %v3198
        %v3207 = vsel %vm3205, %v3198, %v3200
        %v3208 = vsel %vm3205, %v3200, %v3202
        %v3209 = vsel %vm3205, %v3202, %v3204
        %v3211 = vsel %vm796, %v3181, 0
        %v3213 = vsel %vm800, %v3206, 0
        %v3215 = vsel %vm800, %v3207, 0
        %v3217 = vsel %vm800, %v3208, 0
        %v3219 = vsel %vm800, %v3209, 0
        %v3221 = vsel %vm800, %v3204, 0
        %3223 = vmatpush.msra.mxu0 0.0
        %3224 = vmatpush.msra.mxu0 0.0
        %3225 = vmatpush.msra.mxu0 0.0
        %3226 = vmatpush.msra.mxu0 0.0
        %3227 = vmatpush.msra.mxu0 0.0
        %3228 = vmatpush.msra.mxu0 0.0
        %3229 = vmatpush.msra.mxu0 0.0
        %3230 = vmatpush.msra.mxu0 0.0
        %3231 = vmatpush.msra.mxu0 0.0
        %3232 = vmatpush.msra.mxu0 0.0
        %3233 = vmatpush.msra.mxu0 0.0
        %3234 = vmatpush.msra.mxu0 0.0
        %3235 = vmatpush.msra.mxu0 0.0
        %3236 = vmatpush.msra.mxu0 0.0
        %3237 = vmatpush.msra.mxu0 0.0
        %3238 = vmatpush.msra.mxu0 %v3213
        %3239 = vmatmul.f32.gmra.mxu0 %v3211
        %v3240 = vpop.f32.mrf.mxu0
        %v3241 = vadd.f32 0.0, %v3240
        %3242 = vdwg.mxu0
        %3243 = vmatpush.msra.mxu0 0.0
        %3244 = vmatpush.msra.mxu0 0.0
        %3245 = vmatpush.msra.mxu0 0.0
        %3246 = vmatpush.msra.mxu0 0.0
        %3247 = vmatpush.msra.mxu0 0.0
        %3248 = vmatpush.msra.mxu0 0.0
        %3249 = vmatpush.msra.mxu0 0.0
        %3250 = vmatpush.msra.mxu0 0.0
        %3251 = vmatpush.msra.mxu0 0.0
        %3252 = vmatpush.msra.mxu0 0.0
        %3253 = vmatpush.msra.mxu0 0.0
        %3254 = vmatpush.msra.mxu0 0.0
        %3255 = vmatpush.msra.mxu0 0.0
        %3256 = vmatpush.msra.mxu0 0.0
        %3257 = vmatpush.msra.mxu0 0.0
        %3258 = vmatpush.msra.mxu0 %v3215
        %3259 = vmatmul.f32.gmra.mxu0 %v3211
        %v3260 = vpop.f32.mrf.mxu0
        %v3261 = vadd.f32 0.0, %v3260
        %3262 = vdwg.mxu0
        %3263 = vmatpush.msra.mxu0 0.0
        %3264 = vmatpush.msra.mxu0 0.0
        %3265 = vmatpush.msra.mxu0 0.0
        %3266 = vmatpush.msra.mxu0 0.0
        %3267 = vmatpush.msra.mxu0 0.0
        %3268 = vmatpush.msra.mxu0 0.0
        %3269 = vmatpush.msra.mxu0 0.0
        %3270 = vmatpush.msra.mxu0 0.0
        %3271 = vmatpush.msra.mxu0 0.0
        %3272 = vmatpush.msra.mxu0 0.0
        %3273 = vmatpush.msra.mxu0 0.0
        %3274 = vmatpush.msra.mxu0 0.0
        %3275 = vmatpush.msra.mxu0 0.0
        %3276 = vmatpush.msra.mxu0 0.0
        %3277 = vmatpush.msra.mxu0 0.0
        %3278 = vmatpush.msra.mxu0 %v3217
        %3279 = vmatmul.f32.gmra.mxu0 %v3211
        %v3280 = vpop.f32.mrf.mxu0
        %v3281 = vadd.f32 0.0, %v3280
        %3282 = vdwg.mxu0
        %3283 = vmatpush.msra.mxu0 0.0
        %3284 = vmatpush.msra.mxu0 0.0
        %3285 = vmatpush.msra.mxu0 0.0
        %3286 = vmatpush.msra.mxu0 0.0
        %3287 = vmatpush.msra.mxu0 0.0
        %3288 = vmatpush.msra.mxu0 0.0
        %3289 = vmatpush.msra.mxu0 0.0
        %3290 = vmatpush.msra.mxu0 0.0
        %3291 = vmatpush.msra.mxu0 0.0
        %3292 = vmatpush.msra.mxu0 0.0
        %3293 = vmatpush.msra.mxu0 0.0
        %3294 = vmatpush.msra.mxu0 0.0
        %3295 = vmatpush.msra.mxu0 0.0
        %3296 = vmatpush.msra.mxu0 0.0
        %3297 = vmatpush.msra.mxu0 0.0
        %3298 = vmatpush.msra.mxu0 %v3219
        %3299 = vmatmul.f32.gmra.mxu0 %v3211
        %v3300 = vpop.f32.mrf.mxu0
        %v3301 = vadd.f32 0.0, %v3300
        %3302 = vdwg.mxu0
        %3303 = vmatpush.msra.mxu0 0.0
        %3304 = vmatpush.msra.mxu0 0.0
        %3305 = vmatpush.msra.mxu0 0.0
        %3306 = vmatpush.msra.mxu0 0.0
        %3307 = vmatpush.msra.mxu0 0.0
        %3308 = vmatpush.msra.mxu0 0.0
        %3309 = vmatpush.msra.mxu0 0.0
        %3310 = vmatpush.msra.mxu0 0.0
        %3311 = vmatpush.msra.mxu0 0.0
        %3312 = vmatpush.msra.mxu0 0.0
        %3313 = vmatpush.msra.mxu0 0.0
        %3314 = vmatpush.msra.mxu0 0.0
        %3315 = vmatpush.msra.mxu0 0.0
        %3316 = vmatpush.msra.mxu0 0.0
        %3317 = vmatpush.msra.mxu0 0.0
        %3318 = vmatpush.msra.mxu0 %v3221
        %3319 = vmatmul.f32.gmra.mxu0 %v3211
        %v3320 = vpop.f32.mrf.mxu0
        %v3321 = vadd.f32 0.0, %v3320
        %3322 = vdwg.mxu0
        %v3323 = vadd.f32 %v3172, %v3241
        %v3324 = vadd.f32 %v3173, %v3261
        %v3325 = vadd.f32 %v3174, %v3281
        %v3326 = vadd.f32 %v3175, %v3301
        %v3327 = vadd.f32 %v3176, %v3321
        %v3328 = vadd.f32 %v3323, %v1640
        %v3329 = vadd.f32 %v3324, %v1640
        %v3330 = vadd.f32 %v3325, %v1640
        %v3331 = vadd.f32 %v3326, %v1640
        %v3332 = vadd.f32 %v3327, %v1640
        %v3334 = vrot.slane %v3328, 1
        %v3335 = vrot.slane %v3328, 2
        %v3336 = vrot.slane %v3328, 3
        %v3337 = vrot.slane %v3328, 4
        %v3338 = vrot.slane %v3328, 5
        %v3339 = vrot.slane %v3328, 6
        %v3340 = vrot.slane %v3328, 7
        %3348 = vst.msk [vmem:[%s190 + $0x1] sm:$0x1] %vm1662, %v3328
        %3349 = vst.msk [vmem:[%s190 + $0x21] sm:$0x1] %vm1662, %v3334
        %3350 = vst.msk [vmem:[%s190 + $0x41] sm:$0x1] %vm1662, %v3335
        %3351 = vst.msk [vmem:[%s190 + $0x61] sm:$0x1] %vm1662, %v3336
        %3352 = vst.msk [vmem:[%s190 + $0x81] sm:$0x1] %vm1662, %v3337
        %3353 = vst.msk [vmem:[%s190 + $0xa1] sm:$0x1] %vm1662, %v3338
        %3354 = vst.msk [vmem:[%s190 + $0xc1] sm:$0x1] %vm1662, %v3339
        %3355 = vst.msk [vmem:[%s190 + $0xe1] sm:$0x1] %vm1662, %v3340
        %v3356 = vperm.slane %v3328, 0
        %v3357 = vperm.slane %v3334, 0
        %v3358 = vperm.slane %v3335, 0
        %v3359 = vperm.slane %v3336, 0
        %v3360 = vperm.slane %v3337, 0
        %v3361 = vperm.slane %v3338, 0
        %v3362 = vperm.slane %v3339, 0
        %v3363 = vperm.slane %v3340, 0
        %3364 = vrot.lane.b32.xlu0 %v3356, 94
        %v3365 = vpop.permute.xlu0 %3364
        %3366 = vrot.lane.b32.xlu0 %v3357, 94
        %v3367 = vpop.permute.xlu0 %3366
        %3368 = vrot.lane.b32.xlu0 %v3358, 94
        %v3369 = vpop.permute.xlu0 %3368
        %3370 = vrot.lane.b32.xlu0 %v3359, 94
        %v3371 = vpop.permute.xlu0 %3370
        %3372 = vrot.lane.b32.xlu0 %v3360, 94
        %v3373 = vpop.permute.xlu0 %3372
        %3374 = vrot.lane.b32.xlu0 %v3361, 94
        %v3375 = vpop.permute.xlu0 %3374
        %3376 = vrot.lane.b32.xlu0 %v3362, 94
        %v3377 = vpop.permute.xlu0 %3376
        %3378 = vrot.lane.b32.xlu0 %v3363, 94
        %v3379 = vpop.permute.xlu0 %3378
        %3388 = vst.msk [vmem:[%s190 + $0x3] sm:$0x1] %vm1662, %v3365
        %3389 = vst.msk [vmem:[%s190 + $0x23] sm:$0x1] %vm1662, %v3367
        %3390 = vst.msk [vmem:[%s190 + $0x43] sm:$0x1] %vm1662, %v3369
        %3391 = vst.msk [vmem:[%s190 + $0x63] sm:$0x1] %vm1662, %v3371
        %3392 = vst.msk [vmem:[%s190 + $0x83] sm:$0x1] %vm1662, %v3373
        %3393 = vst.msk [vmem:[%s190 + $0xa3] sm:$0x1] %vm1662, %v3375
        %3394 = vst.msk [vmem:[%s190 + $0xc3] sm:$0x1] %vm1662, %v3377
        %3395 = vst.msk [vmem:[%s190 + $0xe3] sm:$0x1] %vm1662, %v3379
        %3396 = vrot.lane.b32.xlu0 %v3356, 60
        %v3397 = vpop.permute.xlu0 %3396
        %3398 = vrot.lane.b32.xlu0 %v3357, 60
        %v3399 = vpop.permute.xlu0 %3398
        %3400 = vrot.lane.b32.xlu0 %v3358, 60
        %v3401 = vpop.permute.xlu0 %3400
        %3402 = vrot.lane.b32.xlu0 %v3359, 60
        %v3403 = vpop.permute.xlu0 %3402
        %3404 = vrot.lane.b32.xlu0 %v3360, 60
        %v3405 = vpop.permute.xlu0 %3404
        %3406 = vrot.lane.b32.xlu0 %v3361, 60
        %v3407 = vpop.permute.xlu0 %3406
        %3408 = vrot.lane.b32.xlu0 %v3362, 60
        %v3409 = vpop.permute.xlu0 %3408
        %3410 = vrot.lane.b32.xlu0 %v3363, 60
        %v3411 = vpop.permute.xlu0 %3410
        %3420 = vst.msk [vmem:[%s190 + $0x5] sm:$0x1] %vm1662, %v3397
        %3421 = vst.msk [vmem:[%s190 + $0x25] sm:$0x1] %vm1662, %v3399
        %3422 = vst.msk [vmem:[%s190 + $0x45] sm:$0x1] %vm1662, %v3401
        %3423 = vst.msk [vmem:[%s190 + $0x65] sm:$0x1] %vm1662, %v3403
        %3424 = vst.msk [vmem:[%s190 + $0x85] sm:$0x1] %vm1662, %v3405
        %3425 = vst.msk [vmem:[%s190 + $0xa5] sm:$0x1] %vm1662, %v3407
        %3426 = vst.msk [vmem:[%s190 + $0xc5] sm:$0x1] %vm1662, %v3409
        %3427 = vst.msk [vmem:[%s190 + $0xe5] sm:$0x1] %vm1662, %v3411
        %v3429 = vrot.slane %v3329, 7
        %v3430 = vsel %vm1745, %v3328, %v3429
        %v3431 = vsel %vm1747, %v3328, %v3429
        %v3432 = vrot.slane %v3431, 1
        %v3433 = vsel %vm1750, %v3328, %v3429
        %v3434 = vrot.slane %v3433, 2
        %v3435 = vsel %vm1753, %v3328, %v3429
        %v3436 = vrot.slane %v3435, 3
        %v3437 = vsel %vm1756, %v3328, %v3429
        %v3438 = vrot.slane %v3437, 4
        %v3439 = vsel %vm1759, %v3328, %v3429
        %v3440 = vrot.slane %v3439, 5
        %v3441 = vsel %vm1762, %v3328, %v3429
        %v3442 = vrot.slane %v3441, 6
        %v3443 = vsel %vm1765, %v3429, %v3328
        %v3444 = vrot.slane %v3443, 7
        %v3445 = vperm.slane %v3430, 0
        %v3446 = vperm.slane %v3430, 1
        %v3447 = vperm.slane %v3432, 0
        %v3448 = vperm.slane %v3432, 1
        %v3449 = vperm.slane %v3434, 0
        %v3450 = vperm.slane %v3434, 1
        %v3451 = vperm.slane %v3436, 0
        %v3452 = vperm.slane %v3436, 1
        %v3453 = vperm.slane %v3438, 0
        %v3454 = vperm.slane %v3438, 1
        %v3455 = vperm.slane %v3440, 0
        %v3456 = vperm.slane %v3440, 1
        %v3457 = vperm.slane %v3442, 0
        %v3458 = vperm.slane %v3442, 1
        %v3459 = vperm.slane %v3444, 0
        %v3460 = vperm.slane %v3444, 1
        %3461 = vrot.lane.b32.xlu0 %v3445, 26
        %v3462 = vpop.permute.xlu0 %3461
        %3463 = vrot.lane.b32.xlu0 %v3446, 26
        %v3464 = vpop.permute.xlu0 %3463
        %3465 = vrot.lane.b32.xlu0 %v3447, 26
        %v3466 = vpop.permute.xlu0 %3465
        %3467 = vrot.lane.b32.xlu0 %v3448, 26
        %v3468 = vpop.permute.xlu0 %3467
        %3469 = vrot.lane.b32.xlu0 %v3449, 26
        %v3470 = vpop.permute.xlu0 %3469
        %3471 = vrot.lane.b32.xlu0 %v3450, 26
        %v3472 = vpop.permute.xlu0 %3471
        %3473 = vrot.lane.b32.xlu0 %v3451, 26
        %v3474 = vpop.permute.xlu0 %3473
        %3475 = vrot.lane.b32.xlu0 %v3452, 26
        %v3476 = vpop.permute.xlu0 %3475
        %3477 = vrot.lane.b32.xlu0 %v3453, 26
        %v3478 = vpop.permute.xlu0 %3477
        %3479 = vrot.lane.b32.xlu0 %v3454, 26
        %v3480 = vpop.permute.xlu0 %3479
        %3481 = vrot.lane.b32.xlu0 %v3455, 26
        %v3482 = vpop.permute.xlu0 %3481
        %3483 = vrot.lane.b32.xlu0 %v3456, 26
        %v3484 = vpop.permute.xlu0 %3483
        %3485 = vrot.lane.b32.xlu0 %v3457, 26
        %v3486 = vpop.permute.xlu0 %3485
        %3487 = vrot.lane.b32.xlu0 %v3458, 26
        %v3488 = vpop.permute.xlu0 %3487
        %3489 = vrot.lane.b32.xlu0 %v3459, 26
        %v3490 = vpop.permute.xlu0 %3489
        %3491 = vrot.lane.b32.xlu0 %v3460, 26
        %v3492 = vpop.permute.xlu0 %3491
        %v3493 = vsel %vm1816, %v3462, %v3464
        %v3494 = vsel %vm1816, %v3466, %v3468
        %v3495 = vsel %vm1816, %v3470, %v3472
        %v3496 = vsel %vm1816, %v3474, %v3476
        %v3497 = vsel %vm1816, %v3478, %v3480
        %v3498 = vsel %vm1816, %v3482, %v3484
        %v3499 = vsel %vm1816, %v3486, %v3488
        %v3500 = vsel %vm1816, %v3490, %v3492
        %3509 = vst.msk [vmem:[%s190 + $0x7] sm:$0x1] %vm1662, %v3493
        %3510 = vst.msk [vmem:[%s190 + $0x27] sm:$0x1] %vm1662, %v3494
        %3511 = vst.msk [vmem:[%s190 + $0x47] sm:$0x1] %vm1662, %v3495
        %3512 = vst.msk [vmem:[%s190 + $0x67] sm:$0x1] %vm1662, %v3496
        %3513 = vst.msk [vmem:[%s190 + $0x87] sm:$0x1] %vm1662, %v3497
        %3514 = vst.msk [vmem:[%s190 + $0xa7] sm:$0x1] %vm1662, %v3498
        %3515 = vst.msk [vmem:[%s190 + $0xc7] sm:$0x1] %vm1662, %v3499
        %3516 = vst.msk [vmem:[%s190 + $0xe7] sm:$0x1] %vm1662, %v3500
        %v3517 = vrot.slane %v3329, 1
        %v3518 = vrot.slane %v3329, 2
        %v3519 = vrot.slane %v3329, 3
        %v3520 = vrot.slane %v3329, 4
        %v3521 = vrot.slane %v3329, 5
        %v3522 = vrot.slane %v3329, 6
        %v3523 = vperm.slane %v3329, 0
        %v3524 = vperm.slane %v3517, 0
        %v3525 = vperm.slane %v3518, 0
        %v3526 = vperm.slane %v3519, 0
        %v3527 = vperm.slane %v3520, 0
        %v3528 = vperm.slane %v3521, 0
        %v3529 = vperm.slane %v3522, 0
        %v3530 = vperm.slane %v3429, 0
        %3531 = vrot.lane.b32.xlu0 %v3523, 120
        %v3532 = vpop.permute.xlu0 %3531
        %3533 = vrot.lane.b32.xlu0 %v3524, 120
        %v3534 = vpop.permute.xlu0 %3533
        %3535 = vrot.lane.b32.xlu0 %v3525, 120
        %v3536 = vpop.permute.xlu0 %3535
        %3537 = vrot.lane.b32.xlu0 %v3526, 120
        %v3538 = vpop.permute.xlu0 %3537
        %3539 = vrot.lane.b32.xlu0 %v3527, 120
        %v3540 = vpop.permute.xlu0 %3539
        %3541 = vrot.lane.b32.xlu0 %v3528, 120
        %v3542 = vpop.permute.xlu0 %3541
        %3543 = vrot.lane.b32.xlu0 %v3529, 120
        %v3544 = vpop.permute.xlu0 %3543
        %3545 = vrot.lane.b32.xlu0 %v3530, 120
        %v3546 = vpop.permute.xlu0 %3545
        %3555 = vst.msk [vmem:[%s190 + $0x9] sm:$0x1] %vm1662, %v3532
        %3556 = vst.msk [vmem:[%s190 + $0x29] sm:$0x1] %vm1662, %v3534
        %3557 = vst.msk [vmem:[%s190 + $0x49] sm:$0x1] %vm1662, %v3536
        %3558 = vst.msk [vmem:[%s190 + $0x69] sm:$0x1] %vm1662, %v3538
        %3559 = vst.msk [vmem:[%s190 + $0x89] sm:$0x1] %vm1662, %v3540
        %3560 = vst.msk [vmem:[%s190 + $0xa9] sm:$0x1] %vm1662, %v3542
        %3561 = vst.msk [vmem:[%s190 + $0xc9] sm:$0x1] %vm1662, %v3544
        %3562 = vst.msk [vmem:[%s190 + $0xe9] sm:$0x1] %vm1662, %v3546
        %3563 = vrot.lane.b32.xlu0 %v3523, 86
        %v3564 = vpop.permute.xlu0 %3563
        %3565 = vrot.lane.b32.xlu0 %v3524, 86
        %v3566 = vpop.permute.xlu0 %3565
        %3567 = vrot.lane.b32.xlu0 %v3525, 86
        %v3568 = vpop.permute.xlu0 %3567
        %3569 = vrot.lane.b32.xlu0 %v3526, 86
        %v3570 = vpop.permute.xlu0 %3569
        %3571 = vrot.lane.b32.xlu0 %v3527, 86
        %v3572 = vpop.permute.xlu0 %3571
        %3573 = vrot.lane.b32.xlu0 %v3528, 86
        %v3574 = vpop.permute.xlu0 %3573
        %3575 = vrot.lane.b32.xlu0 %v3529, 86
        %v3576 = vpop.permute.xlu0 %3575
        %3577 = vrot.lane.b32.xlu0 %v3530, 86
        %v3578 = vpop.permute.xlu0 %3577
        %3587 = vst.msk [vmem:[%s190 + $0xb] sm:$0x1] %vm1662, %v3564
        %3588 = vst.msk [vmem:[%s190 + $0x2b] sm:$0x1] %vm1662, %v3566
        %3589 = vst.msk [vmem:[%s190 + $0x4b] sm:$0x1] %vm1662, %v3568
        %3590 = vst.msk [vmem:[%s190 + $0x6b] sm:$0x1] %vm1662, %v3570
        %3591 = vst.msk [vmem:[%s190 + $0x8b] sm:$0x1] %vm1662, %v3572
        %3592 = vst.msk [vmem:[%s190 + $0xab] sm:$0x1] %vm1662, %v3574
        %3593 = vst.msk [vmem:[%s190 + $0xcb] sm:$0x1] %vm1662, %v3576
        %3594 = vst.msk [vmem:[%s190 + $0xeb] sm:$0x1] %vm1662, %v3578
        %3595 = vrot.lane.b32.xlu0 %v3523, 52
        %v3596 = vpop.permute.xlu0 %3595
        %3597 = vrot.lane.b32.xlu0 %v3524, 52
        %v3598 = vpop.permute.xlu0 %3597
        %3599 = vrot.lane.b32.xlu0 %v3525, 52
        %v3600 = vpop.permute.xlu0 %3599
        %3601 = vrot.lane.b32.xlu0 %v3526, 52
        %v3602 = vpop.permute.xlu0 %3601
        %3603 = vrot.lane.b32.xlu0 %v3527, 52
        %v3604 = vpop.permute.xlu0 %3603
        %3605 = vrot.lane.b32.xlu0 %v3528, 52
        %v3606 = vpop.permute.xlu0 %3605
        %3607 = vrot.lane.b32.xlu0 %v3529, 52
        %v3608 = vpop.permute.xlu0 %3607
        %3609 = vrot.lane.b32.xlu0 %v3530, 52
        %v3610 = vpop.permute.xlu0 %3609
        %3619 = vst.msk [vmem:[%s190 + $0xd] sm:$0x1] %vm1662, %v3596
        %3620 = vst.msk [vmem:[%s190 + $0x2d] sm:$0x1] %vm1662, %v3598
        %3621 = vst.msk [vmem:[%s190 + $0x4d] sm:$0x1] %vm1662, %v3600
        %3622 = vst.msk [vmem:[%s190 + $0x6d] sm:$0x1] %vm1662, %v3602
        %3623 = vst.msk [vmem:[%s190 + $0x8d] sm:$0x1] %vm1662, %v3604
        %3624 = vst.msk [vmem:[%s190 + $0xad] sm:$0x1] %vm1662, %v3606
        %3625 = vst.msk [vmem:[%s190 + $0xcd] sm:$0x1] %vm1662, %v3608
        %3626 = vst.msk [vmem:[%s190 + $0xed] sm:$0x1] %vm1662, %v3610
        %v3628 = vrot.slane %v3330, 7
        %v3629 = vsel %vm1745, %v3329, %v3628
        %v3630 = vsel %vm1747, %v3329, %v3628
        %v3631 = vrot.slane %v3630, 1
        %v3632 = vsel %vm1750, %v3329, %v3628
        %v3633 = vrot.slane %v3632, 2
        %v3634 = vsel %vm1753, %v3329, %v3628
        %v3635 = vrot.slane %v3634, 3
        %v3636 = vsel %vm1756, %v3329, %v3628
        %v3637 = vrot.slane %v3636, 4
        %v3638 = vsel %vm1759, %v3329, %v3628
        %v3639 = vrot.slane %v3638, 5
        %v3640 = vsel %vm1762, %v3329, %v3628
        %v3641 = vrot.slane %v3640, 6
        %v3642 = vsel %vm1765, %v3628, %v3329
        %v3643 = vrot.slane %v3642, 7
        %v3644 = vperm.slane %v3629, 0
        %v3645 = vperm.slane %v3629, 1
        %v3646 = vperm.slane %v3631, 0
        %v3647 = vperm.slane %v3631, 1
        %v3648 = vperm.slane %v3633, 0
        %v3649 = vperm.slane %v3633, 1
        %v3650 = vperm.slane %v3635, 0
        %v3651 = vperm.slane %v3635, 1
        %v3652 = vperm.slane %v3637, 0
        %v3653 = vperm.slane %v3637, 1
        %v3654 = vperm.slane %v3639, 0
        %v3655 = vperm.slane %v3639, 1
        %v3656 = vperm.slane %v3641, 0
        %v3657 = vperm.slane %v3641, 1
        %v3658 = vperm.slane %v3643, 0
        %v3659 = vperm.slane %v3643, 1
        %3660 = vrot.lane.b32.xlu0 %v3644, 18
        %v3661 = vpop.permute.xlu0 %3660
        %3662 = vrot.lane.b32.xlu0 %v3645, 18
        %v3663 = vpop.permute.xlu0 %3662
        %3664 = vrot.lane.b32.xlu0 %v3646, 18
        %v3665 = vpop.permute.xlu0 %3664
        %3666 = vrot.lane.b32.xlu0 %v3647, 18
        %v3667 = vpop.permute.xlu0 %3666
        %3668 = vrot.lane.b32.xlu0 %v3648, 18
        %v3669 = vpop.permute.xlu0 %3668
        %3670 = vrot.lane.b32.xlu0 %v3649, 18
        %v3671 = vpop.permute.xlu0 %3670
        %3672 = vrot.lane.b32.xlu0 %v3650, 18
        %v3673 = vpop.permute.xlu0 %3672
        %3674 = vrot.lane.b32.xlu0 %v3651, 18
        %v3675 = vpop.permute.xlu0 %3674
        %3676 = vrot.lane.b32.xlu0 %v3652, 18
        %v3677 = vpop.permute.xlu0 %3676
        %3678 = vrot.lane.b32.xlu0 %v3653, 18
        %v3679 = vpop.permute.xlu0 %3678
        %3680 = vrot.lane.b32.xlu0 %v3654, 18
        %v3681 = vpop.permute.xlu0 %3680
        %3682 = vrot.lane.b32.xlu0 %v3655, 18
        %v3683 = vpop.permute.xlu0 %3682
        %3684 = vrot.lane.b32.xlu0 %v3656, 18
        %v3685 = vpop.permute.xlu0 %3684
        %3686 = vrot.lane.b32.xlu0 %v3657, 18
        %v3687 = vpop.permute.xlu0 %3686
        %3688 = vrot.lane.b32.xlu0 %v3658, 18
        %v3689 = vpop.permute.xlu0 %3688
        %3690 = vrot.lane.b32.xlu0 %v3659, 18
        %v3691 = vpop.permute.xlu0 %3690
        %v3692 = vsel %vm2016, %v3661, %v3663
        %v3693 = vsel %vm2016, %v3665, %v3667
        %v3694 = vsel %vm2016, %v3669, %v3671
        %v3695 = vsel %vm2016, %v3673, %v3675
        %v3696 = vsel %vm2016, %v3677, %v3679
        %v3697 = vsel %vm2016, %v3681, %v3683
        %v3698 = vsel %vm2016, %v3685, %v3687
        %v3699 = vsel %vm2016, %v3689, %v3691
        %3708 = vst.msk [vmem:[%s190 + $0xf] sm:$0x1] %vm1662, %v3692
        %3709 = vst.msk [vmem:[%s190 + $0x2f] sm:$0x1] %vm1662, %v3693
        %3710 = vst.msk [vmem:[%s190 + $0x4f] sm:$0x1] %vm1662, %v3694
        %3711 = vst.msk [vmem:[%s190 + $0x6f] sm:$0x1] %vm1662, %v3695
        %3712 = vst.msk [vmem:[%s190 + $0x8f] sm:$0x1] %vm1662, %v3696
        %3713 = vst.msk [vmem:[%s190 + $0xaf] sm:$0x1] %vm1662, %v3697
        %3714 = vst.msk [vmem:[%s190 + $0xcf] sm:$0x1] %vm1662, %v3698
        %3715 = vst.msk [vmem:[%s190 + $0xef] sm:$0x1] %vm1662, %v3699
        %v3716 = vrot.slane %v3330, 1
        %v3717 = vrot.slane %v3330, 2
        %v3718 = vrot.slane %v3330, 3
        %v3719 = vrot.slane %v3330, 4
        %v3720 = vrot.slane %v3330, 5
        %v3721 = vrot.slane %v3330, 6
        %v3722 = vperm.slane %v3330, 0
        %v3723 = vperm.slane %v3716, 0
        %v3724 = vperm.slane %v3717, 0
        %v3725 = vperm.slane %v3718, 0
        %v3726 = vperm.slane %v3719, 0
        %v3727 = vperm.slane %v3720, 0
        %v3728 = vperm.slane %v3721, 0
        %v3729 = vperm.slane %v3628, 0
        %3730 = vrot.lane.b32.xlu0 %v3722, 112
        %v3731 = vpop.permute.xlu0 %3730
        %3732 = vrot.lane.b32.xlu0 %v3723, 112
        %v3733 = vpop.permute.xlu0 %3732
        %3734 = vrot.lane.b32.xlu0 %v3724, 112
        %v3735 = vpop.permute.xlu0 %3734
        %3736 = vrot.lane.b32.xlu0 %v3725, 112
        %v3737 = vpop.permute.xlu0 %3736
        %3738 = vrot.lane.b32.xlu0 %v3726, 112
        %v3739 = vpop.permute.xlu0 %3738
        %3740 = vrot.lane.b32.xlu0 %v3727, 112
        %v3741 = vpop.permute.xlu0 %3740
        %3742 = vrot.lane.b32.xlu0 %v3728, 112
        %v3743 = vpop.permute.xlu0 %3742
        %3744 = vrot.lane.b32.xlu0 %v3729, 112
        %v3745 = vpop.permute.xlu0 %3744
        %3754 = vst.msk [vmem:[%s190 + $0x11] sm:$0x1] %vm1662, %v3731
        %3755 = vst.msk [vmem:[%s190 + $0x31] sm:$0x1] %vm1662, %v3733
        %3756 = vst.msk [vmem:[%s190 + $0x51] sm:$0x1] %vm1662, %v3735
        %3757 = vst.msk [vmem:[%s190 + $0x71] sm:$0x1] %vm1662, %v3737
        %3758 = vst.msk [vmem:[%s190 + $0x91] sm:$0x1] %vm1662, %v3739
        %3759 = vst.msk [vmem:[%s190 + $0xb1] sm:$0x1] %vm1662, %v3741
        %3760 = vst.msk [vmem:[%s190 + $0xd1] sm:$0x1] %vm1662, %v3743
        %3761 = vst.msk [vmem:[%s190 + $0xf1] sm:$0x1] %vm1662, %v3745
        %3762 = vrot.lane.b32.xlu0 %v3722, 78
        %v3763 = vpop.permute.xlu0 %3762
        %3764 = vrot.lane.b32.xlu0 %v3723, 78
        %v3765 = vpop.permute.xlu0 %3764
        %3766 = vrot.lane.b32.xlu0 %v3724, 78
        %v3767 = vpop.permute.xlu0 %3766
        %3768 = vrot.lane.b32.xlu0 %v3725, 78
        %v3769 = vpop.permute.xlu0 %3768
        %3770 = vrot.lane.b32.xlu0 %v3726, 78
        %v3771 = vpop.permute.xlu0 %3770
        %3772 = vrot.lane.b32.xlu0 %v3727, 78
        %v3773 = vpop.permute.xlu0 %3772
        %3774 = vrot.lane.b32.xlu0 %v3728, 78
        %v3775 = vpop.permute.xlu0 %3774
        %3776 = vrot.lane.b32.xlu0 %v3729, 78
        %v3777 = vpop.permute.xlu0 %3776
        %3786 = vst.msk [vmem:[%s190 + $0x13] sm:$0x1] %vm1662, %v3763
        %3787 = vst.msk [vmem:[%s190 + $0x33] sm:$0x1] %vm1662, %v3765
        %3788 = vst.msk [vmem:[%s190 + $0x53] sm:$0x1] %vm1662, %v3767
        %3789 = vst.msk [vmem:[%s190 + $0x73] sm:$0x1] %vm1662, %v3769
        %3790 = vst.msk [vmem:[%s190 + $0x93] sm:$0x1] %vm1662, %v3771
        %3791 = vst.msk [vmem:[%s190 + $0xb3] sm:$0x1] %vm1662, %v3773
        %3792 = vst.msk [vmem:[%s190 + $0xd3] sm:$0x1] %vm1662, %v3775
        %3793 = vst.msk [vmem:[%s190 + $0xf3] sm:$0x1] %vm1662, %v3777
        %3794 = vrot.lane.b32.xlu0 %v3722, 44
        %v3795 = vpop.permute.xlu0 %3794
        %3796 = vrot.lane.b32.xlu0 %v3723, 44
        %v3797 = vpop.permute.xlu0 %3796
        %3798 = vrot.lane.b32.xlu0 %v3724, 44
        %v3799 = vpop.permute.xlu0 %3798
        %3800 = vrot.lane.b32.xlu0 %v3725, 44
        %v3801 = vpop.permute.xlu0 %3800
        %3802 = vrot.lane.b32.xlu0 %v3726, 44
        %v3803 = vpop.permute.xlu0 %3802
        %3804 = vrot.lane.b32.xlu0 %v3727, 44
        %v3805 = vpop.permute.xlu0 %3804
        %3806 = vrot.lane.b32.xlu0 %v3728, 44
        %v3807 = vpop.permute.xlu0 %3806
        %3808 = vrot.lane.b32.xlu0 %v3729, 44
        %v3809 = vpop.permute.xlu0 %3808
        %3818 = vst.msk [vmem:[%s190 + $0x15] sm:$0x1] %vm1662, %v3795
        %3819 = vst.msk [vmem:[%s190 + $0x35] sm:$0x1] %vm1662, %v3797
        %3820 = vst.msk [vmem:[%s190 + $0x55] sm:$0x1] %vm1662, %v3799
        %3821 = vst.msk [vmem:[%s190 + $0x75] sm:$0x1] %vm1662, %v3801
        %3822 = vst.msk [vmem:[%s190 + $0x95] sm:$0x1] %vm1662, %v3803
        %3823 = vst.msk [vmem:[%s190 + $0xb5] sm:$0x1] %vm1662, %v3805
        %3824 = vst.msk [vmem:[%s190 + $0xd5] sm:$0x1] %vm1662, %v3807
        %3825 = vst.msk [vmem:[%s190 + $0xf5] sm:$0x1] %vm1662, %v3809
        %v3827 = vrot.slane %v3331, 7
        %v3828 = vsel %vm1745, %v3330, %v3827
        %v3829 = vsel %vm1747, %v3330, %v3827
        %v3830 = vrot.slane %v3829, 1
        %v3831 = vsel %vm1750, %v3330, %v3827
        %v3832 = vrot.slane %v3831, 2
        %v3833 = vsel %vm1753, %v3330, %v3827
        %v3834 = vrot.slane %v3833, 3
        %v3835 = vsel %vm1756, %v3330, %v3827
        %v3836 = vrot.slane %v3835, 4
        %v3837 = vsel %vm1759, %v3330, %v3827
        %v3838 = vrot.slane %v3837, 5
        %v3839 = vsel %vm1762, %v3330, %v3827
        %v3840 = vrot.slane %v3839, 6
        %v3841 = vsel %vm1765, %v3827, %v3330
        %v3842 = vrot.slane %v3841, 7
        %v3843 = vperm.slane %v3828, 0
        %v3844 = vperm.slane %v3828, 1
        %v3845 = vperm.slane %v3830, 0
        %v3846 = vperm.slane %v3830, 1
        %v3847 = vperm.slane %v3832, 0
        %v3848 = vperm.slane %v3832, 1
        %v3849 = vperm.slane %v3834, 0
        %v3850 = vperm.slane %v3834, 1
        %v3851 = vperm.slane %v3836, 0
        %v3852 = vperm.slane %v3836, 1
        %v3853 = vperm.slane %v3838, 0
        %v3854 = vperm.slane %v3838, 1
        %v3855 = vperm.slane %v3840, 0
        %v3856 = vperm.slane %v3840, 1
        %v3857 = vperm.slane %v3842, 0
        %v3858 = vperm.slane %v3842, 1
        %3859 = vrot.lane.b32.xlu0 %v3843, 10
        %v3860 = vpop.permute.xlu0 %3859
        %3861 = vrot.lane.b32.xlu0 %v3844, 10
        %v3862 = vpop.permute.xlu0 %3861
        %3863 = vrot.lane.b32.xlu0 %v3845, 10
        %v3864 = vpop.permute.xlu0 %3863
        %3865 = vrot.lane.b32.xlu0 %v3846, 10
        %v3866 = vpop.permute.xlu0 %3865
        %3867 = vrot.lane.b32.xlu0 %v3847, 10
        %v3868 = vpop.permute.xlu0 %3867
        %3869 = vrot.lane.b32.xlu0 %v3848, 10
        %v3870 = vpop.permute.xlu0 %3869
        %3871 = vrot.lane.b32.xlu0 %v3849, 10
        %v3872 = vpop.permute.xlu0 %3871
        %3873 = vrot.lane.b32.xlu0 %v3850, 10
        %v3874 = vpop.permute.xlu0 %3873
        %3875 = vrot.lane.b32.xlu0 %v3851, 10
        %v3876 = vpop.permute.xlu0 %3875
        %3877 = vrot.lane.b32.xlu0 %v3852, 10
        %v3878 = vpop.permute.xlu0 %3877
        %3879 = vrot.lane.b32.xlu0 %v3853, 10
        %v3880 = vpop.permute.xlu0 %3879
        %3881 = vrot.lane.b32.xlu0 %v3854, 10
        %v3882 = vpop.permute.xlu0 %3881
        %3883 = vrot.lane.b32.xlu0 %v3855, 10
        %v3884 = vpop.permute.xlu0 %3883
        %3885 = vrot.lane.b32.xlu0 %v3856, 10
        %v3886 = vpop.permute.xlu0 %3885
        %3887 = vrot.lane.b32.xlu0 %v3857, 10
        %v3888 = vpop.permute.xlu0 %3887
        %3889 = vrot.lane.b32.xlu0 %v3858, 10
        %v3890 = vpop.permute.xlu0 %3889
        %v3891 = vsel %vm2216, %v3860, %v3862
        %v3892 = vsel %vm2216, %v3864, %v3866
        %v3893 = vsel %vm2216, %v3868, %v3870
        %v3894 = vsel %vm2216, %v3872, %v3874
        %v3895 = vsel %vm2216, %v3876, %v3878
        %v3896 = vsel %vm2216, %v3880, %v3882
        %v3897 = vsel %vm2216, %v3884, %v3886
        %v3898 = vsel %vm2216, %v3888, %v3890
        %3907 = vst.msk [vmem:[%s190 + $0x17] sm:$0x1] %vm1662, %v3891
        %3908 = vst.msk [vmem:[%s190 + $0x37] sm:$0x1] %vm1662, %v3892
        %3909 = vst.msk [vmem:[%s190 + $0x57] sm:$0x1] %vm1662, %v3893
        %3910 = vst.msk [vmem:[%s190 + $0x77] sm:$0x1] %vm1662, %v3894
        %3911 = vst.msk [vmem:[%s190 + $0x97] sm:$0x1] %vm1662, %v3895
        %3912 = vst.msk [vmem:[%s190 + $0xb7] sm:$0x1] %vm1662, %v3896
        %3913 = vst.msk [vmem:[%s190 + $0xd7] sm:$0x1] %vm1662, %v3897
        %3914 = vst.msk [vmem:[%s190 + $0xf7] sm:$0x1] %vm1662, %v3898
        %v3915 = vrot.slane %v3331, 1
        %v3916 = vrot.slane %v3331, 2
        %v3917 = vrot.slane %v3331, 3
        %v3918 = vrot.slane %v3331, 4
        %v3919 = vrot.slane %v3331, 5
        %v3920 = vrot.slane %v3331, 6
        %v3921 = vperm.slane %v3331, 0
        %v3922 = vperm.slane %v3915, 0
        %v3923 = vperm.slane %v3916, 0
        %v3924 = vperm.slane %v3917, 0
        %v3925 = vperm.slane %v3918, 0
        %v3926 = vperm.slane %v3919, 0
        %v3927 = vperm.slane %v3920, 0
        %v3928 = vperm.slane %v3827, 0
        %3929 = vrot.lane.b32.xlu0 %v3921, 104
        %v3930 = vpop.permute.xlu0 %3929
        %3931 = vrot.lane.b32.xlu0 %v3922, 104
        %v3932 = vpop.permute.xlu0 %3931
        %3933 = vrot.lane.b32.xlu0 %v3923, 104
        %v3934 = vpop.permute.xlu0 %3933
        %3935 = vrot.lane.b32.xlu0 %v3924, 104
        %v3936 = vpop.permute.xlu0 %3935
        %3937 = vrot.lane.b32.xlu0 %v3925, 104
        %v3938 = vpop.permute.xlu0 %3937
        %3939 = vrot.lane.b32.xlu0 %v3926, 104
        %v3940 = vpop.permute.xlu0 %3939
        %3941 = vrot.lane.b32.xlu0 %v3927, 104
        %v3942 = vpop.permute.xlu0 %3941
        %3943 = vrot.lane.b32.xlu0 %v3928, 104
        %v3944 = vpop.permute.xlu0 %3943
        %3953 = vst.msk [vmem:[%s190 + $0x19] sm:$0x1] %vm1662, %v3930
        %3954 = vst.msk [vmem:[%s190 + $0x39] sm:$0x1] %vm1662, %v3932
        %3955 = vst.msk [vmem:[%s190 + $0x59] sm:$0x1] %vm1662, %v3934
        %3956 = vst.msk [vmem:[%s190 + $0x79] sm:$0x1] %vm1662, %v3936
        %3957 = vst.msk [vmem:[%s190 + $0x99] sm:$0x1] %vm1662, %v3938
        %3958 = vst.msk [vmem:[%s190 + $0xb9] sm:$0x1] %vm1662, %v3940
        %3959 = vst.msk [vmem:[%s190 + $0xd9] sm:$0x1] %vm1662, %v3942
        %3960 = vst.msk [vmem:[%s190 + $0xf9] sm:$0x1] %vm1662, %v3944
        %3961 = vrot.lane.b32.xlu0 %v3921, 70
        %v3962 = vpop.permute.xlu0 %3961
        %3963 = vrot.lane.b32.xlu0 %v3922, 70
        %v3964 = vpop.permute.xlu0 %3963
        %3965 = vrot.lane.b32.xlu0 %v3923, 70
        %v3966 = vpop.permute.xlu0 %3965
        %3967 = vrot.lane.b32.xlu0 %v3924, 70
        %v3968 = vpop.permute.xlu0 %3967
        %3969 = vrot.lane.b32.xlu0 %v3925, 70
        %v3970 = vpop.permute.xlu0 %3969
        %3971 = vrot.lane.b32.xlu0 %v3926, 70
        %v3972 = vpop.permute.xlu0 %3971
        %3973 = vrot.lane.b32.xlu0 %v3927, 70
        %v3974 = vpop.permute.xlu0 %3973
        %3975 = vrot.lane.b32.xlu0 %v3928, 70
        %v3976 = vpop.permute.xlu0 %3975
        %3985 = vst.msk [vmem:[%s190 + $0x1b] sm:$0x1] %vm1662, %v3962
        %3986 = vst.msk [vmem:[%s190 + $0x3b] sm:$0x1] %vm1662, %v3964
        %3987 = vst.msk [vmem:[%s190 + $0x5b] sm:$0x1] %vm1662, %v3966
        %3988 = vst.msk [vmem:[%s190 + $0x7b] sm:$0x1] %vm1662, %v3968
        %3989 = vst.msk [vmem:[%s190 + $0x9b] sm:$0x1] %vm1662, %v3970
        %3990 = vst.msk [vmem:[%s190 + $0xbb] sm:$0x1] %vm1662, %v3972
        %3991 = vst.msk [vmem:[%s190 + $0xdb] sm:$0x1] %vm1662, %v3974
        %3992 = vst.msk [vmem:[%s190 + $0xfb] sm:$0x1] %vm1662, %v3976
        %3993 = vrot.lane.b32.xlu0 %v3921, 36
        %v3994 = vpop.permute.xlu0 %3993
        %3995 = vrot.lane.b32.xlu0 %v3922, 36
        %v3996 = vpop.permute.xlu0 %3995
        %3997 = vrot.lane.b32.xlu0 %v3923, 36
        %v3998 = vpop.permute.xlu0 %3997
        %3999 = vrot.lane.b32.xlu0 %v3924, 36
        %v4000 = vpop.permute.xlu0 %3999
        %4001 = vrot.lane.b32.xlu0 %v3925, 36
        %v4002 = vpop.permute.xlu0 %4001
        %4003 = vrot.lane.b32.xlu0 %v3926, 36
        %v4004 = vpop.permute.xlu0 %4003
        %4005 = vrot.lane.b32.xlu0 %v3927, 36
        %v4006 = vpop.permute.xlu0 %4005
        %4007 = vrot.lane.b32.xlu0 %v3928, 36
        %v4008 = vpop.permute.xlu0 %4007
        %4017 = vst.msk [vmem:[%s190 + $0x1d] sm:$0x1] %vm1662, %v3994
        %4018 = vst.msk [vmem:[%s190 + $0x3d] sm:$0x1] %vm1662, %v3996
        %4019 = vst.msk [vmem:[%s190 + $0x5d] sm:$0x1] %vm1662, %v3998
        %4020 = vst.msk [vmem:[%s190 + $0x7d] sm:$0x1] %vm1662, %v4000
        %4021 = vst.msk [vmem:[%s190 + $0x9d] sm:$0x1] %vm1662, %v4002
        %4022 = vst.msk [vmem:[%s190 + $0xbd] sm:$0x1] %vm1662, %v4004
        %4023 = vst.msk [vmem:[%s190 + $0xdd] sm:$0x1] %vm1662, %v4006
        %4024 = vst.msk [vmem:[%s190 + $0xfd] sm:$0x1] %vm1662, %v4008
        %v4026 = vrot.slane %v3332, 7
        %v4027 = vsel %vm1745, %v3331, %v4026
        %v4028 = vsel %vm1747, %v3331, %v4026
        %v4029 = vrot.slane %v4028, 1
        %v4030 = vsel %vm1750, %v3331, %v4026
        %v4031 = vrot.slane %v4030, 2
        %v4032 = vsel %vm1753, %v3331, %v4026
        %v4033 = vrot.slane %v4032, 3
        %v4034 = vsel %vm1756, %v3331, %v4026
        %v4035 = vrot.slane %v4034, 4
        %v4036 = vsel %vm1759, %v3331, %v4026
        %v4037 = vrot.slane %v4036, 5
        %v4038 = vsel %vm1762, %v3331, %v4026
        %v4039 = vrot.slane %v4038, 6
        %v4040 = vsel %vm1765, %v4026, %v3331
        %v4041 = vrot.slane %v4040, 7
        %v4042 = vperm.slane %v4027, 0
        %v4043 = vperm.slane %v4027, 1
        %v4044 = vperm.slane %v4029, 0
        %v4045 = vperm.slane %v4029, 1
        %v4046 = vperm.slane %v4031, 0
        %v4047 = vperm.slane %v4031, 1
        %v4048 = vperm.slane %v4033, 0
        %v4049 = vperm.slane %v4033, 1
        %v4050 = vperm.slane %v4035, 0
        %v4051 = vperm.slane %v4035, 1
        %v4052 = vperm.slane %v4037, 0
        %v4053 = vperm.slane %v4037, 1
        %v4054 = vperm.slane %v4039, 0
        %v4055 = vperm.slane %v4039, 1
        %v4056 = vperm.slane %v4041, 0
        %v4057 = vperm.slane %v4041, 1
        %4058 = vrot.lane.b32.xlu0 %v4042, 2
        %v4059 = vpop.permute.xlu0 %4058
        %4060 = vrot.lane.b32.xlu0 %v4043, 2
        %v4061 = vpop.permute.xlu0 %4060
        %4062 = vrot.lane.b32.xlu0 %v4044, 2
        %v4063 = vpop.permute.xlu0 %4062
        %4064 = vrot.lane.b32.xlu0 %v4045, 2
        %v4065 = vpop.permute.xlu0 %4064
        %4066 = vrot.lane.b32.xlu0 %v4046, 2
        %v4067 = vpop.permute.xlu0 %4066
        %4068 = vrot.lane.b32.xlu0 %v4047, 2
        %v4069 = vpop.permute.xlu0 %4068
        %4070 = vrot.lane.b32.xlu0 %v4048, 2
        %v4071 = vpop.permute.xlu0 %4070
        %4072 = vrot.lane.b32.xlu0 %v4049, 2
        %v4073 = vpop.permute.xlu0 %4072
        %4074 = vrot.lane.b32.xlu0 %v4050, 2
        %v4075 = vpop.permute.xlu0 %4074
        %4076 = vrot.lane.b32.xlu0 %v4051, 2
        %v4077 = vpop.permute.xlu0 %4076
        %4078 = vrot.lane.b32.xlu0 %v4052, 2
        %v4079 = vpop.permute.xlu0 %4078
        %4080 = vrot.lane.b32.xlu0 %v4053, 2
        %v4081 = vpop.permute.xlu0 %4080
        %4082 = vrot.lane.b32.xlu0 %v4054, 2
        %v4083 = vpop.permute.xlu0 %4082
        %4084 = vrot.lane.b32.xlu0 %v4055, 2
        %v4085 = vpop.permute.xlu0 %4084
        %4086 = vrot.lane.b32.xlu0 %v4056, 2
        %v4087 = vpop.permute.xlu0 %4086
        %4088 = vrot.lane.b32.xlu0 %v4057, 2
        %v4089 = vpop.permute.xlu0 %4088
        %v4090 = vsel %vm2416, %v4059, %v4061
        %v4091 = vsel %vm2416, %v4063, %v4065
        %v4092 = vsel %vm2416, %v4067, %v4069
        %v4093 = vsel %vm2416, %v4071, %v4073
        %v4094 = vsel %vm2416, %v4075, %v4077
        %v4095 = vsel %vm2416, %v4079, %v4081
        %v4096 = vsel %vm2416, %v4083, %v4085
        %v4097 = vsel %vm2416, %v4087, %v4089
        %4106 = vst.msk [vmem:[%s190 + $0x1f] sm:$0x1] %vm1662, %v4090
        %4107 = vst.msk [vmem:[%s190 + $0x3f] sm:$0x1] %vm1662, %v4091
        %4108 = vst.msk [vmem:[%s190 + $0x5f] sm:$0x1] %vm1662, %v4092
        %4109 = vst.msk [vmem:[%s190 + $0x7f] sm:$0x1] %vm1662, %v4093
        %4110 = vst.msk [vmem:[%s190 + $0x9f] sm:$0x1] %vm1662, %v4094
        %4111 = vst.msk [vmem:[%s190 + $0xbf] sm:$0x1] %vm1662, %v4095
        %4112 = vst.msk [vmem:[%s190 + $0xdf] sm:$0x1] %vm1662, %v4096
        %4113 = vst.msk [vmem:[%s190 + $0xff] sm:$0x1] %vm1662, %v4097
        %s4114 = sand.u32 %s115, 1
        %s4115 = scalar_lea.sflag [#allocation4], %s4114
        %s4116 = sand.u32 %s115, 1
        %s4117 = smul.addr %s4116, 256
        %s4118 = scalar_lea.vmem [#allocation3], %s4117
        // Predicated region
        $region37: #{tpu_custom_call.1} parent=35 // pred_check
          %p4119 = pneg %p125
        $region38: #{tpu_custom_call.1} parent=35 // pred_check_branch
          %4121 = sbr.rel (%p4119) target = $region40
        $region39: #{tpu_custom_call.1} parent=35 // pred_region
          %4123 = vsyncadd %s4115, 0
          %s4124 = smul.addr %s18, 32
          %s4125 = smul.addr %s4124, 8
          %s4126 = scalar_lea.hbm %s4, %s4125
          %s4127 = sshll.u32 %s4118, 4
          %s4128 = int_to_ptr.vmem [resolvable:$true] %s4127
          %s4129 = sshll.u32 %s4126, 4
          %s4130 = int_to_ptr.hbm [resolvable:$true] %s4129
          %4135 = dma.vmem_to_hbm [thread:$0]  %s4128, 4096, %s4130, %s4115, 128, 128, 8
        $region40: #{tpu_custom_call.1} parent=35 // pred_fallthru
          _
      $region36: #{tpu_custom_call.1} parent=5 // pred_fallthru
        _
      %p4136 = scmp.le.s32.totalorder 2, %s13
      // Predicated region
      $region41: #{tpu_custom_call.1} parent=5 // pred_check
        %p4137 = pneg %p4136
      $region42: #{tpu_custom_call.1} parent=5 // pred_check_branch
        %4139 = sbr.rel (%p4137) target = $region44
      $region43: #{tpu_custom_call.1} parent=5 // pred_region
        %s4140 = ssub.s32 %s13, 2
        // Predicated region
        $region45: #{tpu_custom_call.1} parent=43 // pred_check
          %p4141 = pneg %p131
        $region46: #{tpu_custom_call.1} parent=43 // pred_check_branch
          %4143 = sbr.rel (%p4141) target = $region48
        $region47: #{tpu_custom_call.1} parent=43 // pred_region
          %s4144 = sand.u32 %s116, 1
          %s4145 = scalar_lea.sflag [#allocation4], %s4144
          %s4146 = sand.u32 %s116, 1
          %s4147 = smul.addr %s4146, 256
          %s4148 = scalar_lea.vmem [#allocation3], %s4147
          %4150 = dma.done %s4145, 4096
        $region48: #{tpu_custom_call.1} parent=43 // pred_fallthru
          _
      $region44: #{tpu_custom_call.1} parent=5 // pred_fallthru
        _
    $region6: #{tpu_custom_call.1} parent=1 // loop_footer
      %s17 = sadd.s32 1, %s13
    $region7: #{tpu_custom_call.1} parent=1 // loop_footer_branch
      %12 = sbr.rel target = $region3
    $region8: #{tpu_custom_call.1} parent=1 // loop_exit
      _
    %4151 = vsyncpa [#allocation4], 1
    %s4152 = scalar_lea.sflag [#allocation4], 1
    %4153 = vsyncpa %s4152, 1

</llo_original>
